<compile_context>
chip_gen: v7x
topology: tpu7x:2x2x1
jax: 0.10.0
libtpu: 0.0.40
codegen_flags: <defaults>
</compile_context>

<pallas_src>
import functools
import math

import jax
import jax.numpy as jnp
import numpy as np
from jax import lax
from jax.experimental import pallas as pl
from jax.experimental.pallas import tpu as pltpu

LN_EPS = 1e-5  # PyTorch nn.LayerNorm default

_VMEM = pl.BlockSpec(memory_space=pltpu.MemorySpace.VMEM)


def _round8(x):
    return ((x + 7) // 8) * 8


# ----------------------------------------------------------------------------
# In-kernel helpers
# ----------------------------------------------------------------------------
def _layer_norm(t, g, beta):
    mu = jnp.mean(t, axis=-1, keepdims=True)
    var = jnp.mean(jnp.square(t - mu), axis=-1, keepdims=True)
    return (t - mu) * lax.rsqrt(var + LN_EPS) * g + beta


# ----------------------------------------------------------------------------
# The single fused forward kernel
# ----------------------------------------------------------------------------
def _fused_forward_kernel(x_ref, row_ref, w_ref, vec_ref, out_ref,
                          *, bs, n, n_pad, H, nh, self_len, off):
    hd = H // nh
    scale = 1.0 / math.sqrt(hd)
    H2, H3 = 2 * H, 3 * H

    # ---- hoisted parameter loads (shared across the unrolled batch loop) ----
    b_ent = row_ref[0:n, :]
    g_ent = row_ref[n_pad:n_pad + n, :]
    be_ent = row_ref[2 * n_pad:2 * n_pad + n, :]

    w_qkv = w_ref[off["qkv"]:off["qkv"] + H, :]                 # (H, 3H)
    w_d1 = w_ref[off["d1"]:off["d1"] + H, 0:H]                  # (H, H)
    w_d2y = w_ref[off["d2y"]:off["d2y"] + H, 0:H]               # (H, H)
    w_d2s = w_ref[off["d2s"]:off["d2s"] + self_len, 0:H]        # (self, H)
    w_t1 = w_ref[off["t1"]:off["t1"] + H, 0:H2]                 # (H, 2H)
    w_c2 = w_ref[off["c2"]:off["c2"] + H, 0:H]                  # (H, H)
    w_a2 = w_ref[off["a2"]:off["a2"] + H, 0:H]                  # (H, H)
    w_cl = w_ref[off["cl"]:off["cl"] + H, 0:1]                  # (H, 1)

    b_qkv = vec_ref[0:1, 0:H3]
    b_d1, g_d1, be_d1 = vec_ref[1:2, 0:H], vec_ref[2:3, 0:H], vec_ref[3:4, 0:H]
    b_d2, g_d2, be_d2 = vec_ref[4:5, 0:H], vec_ref[5:6, 0:H], vec_ref[6:7, 0:H]
    b_t1, g_t1, be_t1 = vec_ref[7:8, 0:H2], vec_ref[8:9, 0:H2], vec_ref[9:10, 0:H2]
    b_c2, g_c2, be_c2 = vec_ref[10:11, 0:H], vec_ref[11:12, 0:H], vec_ref[12:13, 0:H]
    b_a2, g_a2, be_a2 = vec_ref[13:14, 0:H], vec_ref[14:15, 0:H], vec_ref[15:16, 0:H]
    b_cl = vec_ref[16:17, 0:1]

    for b in range(bs):            # bs == 2: fully unrolled, data stays in vregs
        r0 = b * n_pad
        # Entity transforms: the wrapper already applied (scatter ∘ W); finish
        # with per-position bias + tanh + LayerNorm here (no batch-tiled params).
        x_b = _layer_norm(jnp.tanh(x_ref[r0:r0 + n, :] + b_ent), g_ent, be_ent)  # (n, H)
        self_b = x_ref[r0 + n:r0 + n + 1, 0:self_len]                            # (1, self)

        # fused q|k|v projection for this batch's entity rows
        qkv = jnp.dot(x_b, w_qkv, preferred_element_type=jnp.float32) + b_qkv    # (n, 3H)

        # attention; each head's output is folded straight into the dense1 matmul,
        # so no (n, H) z concat and no lane relayout.
        acc = jnp.zeros((n, H), jnp.float32)
        for h in range(nh):
            c = h * hd
            q = qkv[:, c:c + hd]
            k = qkv[:, H + c:H + c + hd]
            v = qkv[:, H2 + c:H2 + c + hd]
            # q @ k^T as an NT dot_general (no explicit transpose tile)
            s = lax.dot_general(q, k, (((1,), (1,)), ((), ())),
                                preferred_element_type=jnp.float32) * scale
            e = jnp.exp(s)                       # LN'd inputs -> no max-shift needed
            p = e * pl.reciprocal(jnp.sum(e, axis=-1, keepdims=True), approx=True)
            z = jnp.dot(p, v, preferred_element_type=jnp.float32)                # (n, hd)
            acc = acc + jnp.dot(z, w_d1[c:c + hd, :],
                                preferred_element_type=jnp.float32)              # (n, H)

        y1 = _layer_norm(jnp.tanh(acc + b_d1), g_d1, be_d1) + x_b                # (n, H)
        y1m = jnp.mean(y1, axis=0, keepdims=True)                                # (1, H)

        # attention_dense2 on [mean, self] -- split matmul, no lane concat
        pre2 = (jnp.dot(y1m, w_d2y, preferred_element_type=jnp.float32)
                + jnp.dot(self_b, w_d2s, preferred_element_type=jnp.float32) + b_d2)
        y2 = _layer_norm(jnp.tanh(pre2), g_d2, be_d2)                            # (1, H)

        # critic|actor towers: layer 1 lane-stacked, layer 2 separate weights
        h1 = jnp.tanh(jnp.dot(y2, w_t1, preferred_element_type=jnp.float32) + b_t1)  # (1, 2H)
        hc1 = _layer_norm(h1[:, 0:H], g_t1[:, 0:H], be_t1[:, 0:H])
        ha1 = _layer_norm(h1[:, H:H2], g_t1[:, H:H2], be_t1[:, H:H2])
        hc2 = _layer_norm(jnp.tanh(jnp.dot(hc1, w_c2, preferred_element_type=jnp.float32)
                                   + b_c2), g_c2, be_c2)
        ha2 = _layer_norm(jnp.tanh(jnp.dot(ha1, w_a2, preferred_element_type=jnp.float32)
                                   + b_a2), g_a2, be_a2)
        val = jnp.dot(hc2, w_cl, preferred_element_type=jnp.float32) + b_cl      # (1, 1)

        # single lane-packed output slab: columns [0:H] = actor, [H] = value
        out_ref[b:b + 1, 0:H] = ha2
        out_ref[b:b + 1, H:H + 1] = val


# ----------------------------------------------------------------------------
# Structure analysis & forward builders
# ----------------------------------------------------------------------------
def _analyze_structure(input_structure):
    entity_index = {}
    entity_lens = []
    self_part = (0, 0)
    parts = []
    off = 0
    for name, length in input_structure:
        if name == "self":
            self_part = (off, off + length)
        elif name not in entity_index:
            entity_index[name] = len(entity_lens)
            entity_lens.append(length)
        parts.append((name, off, length))
        off += length
    # positions grouped by entity type (matches torch.cat(hs, dim=1) ordering)
    positions = []
    for t in range(len(entity_lens)):
        for name, s, length in parts:
            if name != "self" and entity_index[name] == t:
                positions.append((t, s, length))
    return self_part, entity_lens, positions, off


def build_pallas_forward(input_structure, hidden_size, num_heads):
    self_part, _entity_lens, positions, num_input = _analyze_structure(input_structure)
    self_len = self_part[1] - self_part[0]
    H = hidden_size
    n = len(positions)
    n_pad = _round8(n + 1)   # +1 spare row per batch block carries raw self features
    assert H % 8 == 0 and H % num_heads == 0 and self_len <= H

    # static row offsets inside the single weight slab (all 8-aligned)
    off = {}
    off["qkv"] = 0
    off["d1"] = off["qkv"] + H
    off["d2y"] = off["d1"] + H
    off["d2s"] = off["d2y"] + H
    off["t1"] = off["d2s"] + _round8(self_len)
    off["c2"] = off["t1"] + H
    off["a2"] = off["c2"] + H
    off["cl"] = off["a2"] + H
    w_rows = off["cl"] + H

    def pack_params(params):
        """ONE-TIME packing of module parameters into 4 kernel slabs
        (hoisted out of the per-call forward path)."""
        f32 = np.float32
        s0, s1 = self_part

        # per-position entity-transform weights with the input scatter folded in
        w_pos = np.zeros((num_input, n_pad * H), f32)
        row_slab = np.zeros((3 * n_pad, H), f32)
        for j, (t, s, length) in enumerate(positions):
            w_t, b_t, g_t, beta_t = [np.asarray(a, f32) for a in params["transforms"][t]]
            col = j * H
            w_pos[s0:s1, col:col + H] = w_t[0:self_len, :]
            w_pos[s:s + length, col:col + H] = w_t[self_len:self_len + length, :]
            row_slab[j, :] = b_t[0]
            row_slab[n_pad + j, :] = g_t[0]
            row_slab[2 * n_pad + j, :] = beta_t[0]
        for i in range(self_len):               # raw-self stash rides in spare row n
            w_pos[s0 + i, n * H + i] = 1.0

        w_slab = np.zeros((w_rows, 3 * H), f32)
        vec_slab = np.zeros((17, 3 * H), f32)

        def put_w(o, w):
            w = np.asarray(w, f32)
            w_slab[o:o + w.shape[0], 0:w.shape[1]] = w

        def put_v(r, *vs):
            v = np.concatenate([np.asarray(a, f32).reshape(1, -1) for a in vs], axis=1)
            vec_slab[r, 0:v.shape[1]] = v[0]

        put_w(off["qkv"], np.concatenate([np.asarray(params["q"][0]),
                                          np.asarray(params["k"][0]),
                                          np.asarray(params["v"][0])], axis=1))
        put_v(0, params["q"][1], params["k"][1], params["v"][1])

        w1, b1, g1, be1 = params["attn_dense1"]
        put_w(off["d1"], w1); put_v(1, b1); put_v(2, g1); put_v(3, be1)

        w2, b2, g2, be2 = params["attn_dense2"]
        w2 = np.asarray(w2, f32)
        put_w(off["d2y"], w2[:H]); put_w(off["d2s"], w2[H:H + self_len])
        put_v(4, b2); put_v(5, g2); put_v(6, be2)

        (wc1, bc1, gc1, bec1), (wc2, bc2, gc2, bec2) = params["critic"]
        (wa1, ba1, ga1, bea1), (wa2, ba2, ga2, bea2) = params["actor"]
        put_w(off["t1"], np.concatenate([np.asarray(wc1), np.asarray(wa1)], axis=1))
        put_v(7, bc1, ba1); put_v(8, gc1, ga1); put_v(9, bec1, bea1)
        put_w(off["c2"], wc2); put_v(10, bc2); put_v(11, gc2); put_v(12, bec2)
        put_w(off["a2"], wa2); put_v(13, ba2); put_v(14, ga2); put_v(15, bea2)

        put_w(off["cl"], params["critic_linear"][0])
        put_v(16, params["critic_linear"][1])

        return {"w_pos": jnp.asarray(w_pos), "row_slab": jnp.asarray(row_slab),
                "w_slab": jnp.asarray(w_slab), "vec_slab": jnp.asarray(vec_slab)}

    def forward(packed, inputs, rnn_hxs, masks):
        del masks  # recurrent=False: GRU path never taken
        bs = inputs.shape[0]
        # One small matmul builds every per-position entity pre-activation row
        # (scatter folded into w_pos); the spare row per batch block carries the
        # raw self features. Replaces the ~18 per-call pad/concat/stack ops.
        x_lin = jnp.dot(inputs, packed["w_pos"],
                        precision=lax.Precision.HIGHEST).reshape(bs * n_pad, H)
        kernel = functools.partial(
            _fused_forward_kernel, bs=bs, n=n, n_pad=n_pad, H=H,
            nh=num_heads, self_len=self_len, off=off)
        out = pl.pallas_call(
            kernel,
            out_shape=jax.ShapeDtypeStruct((bs, H + 1), jnp.float32),
            in_specs=[_VMEM, _VMEM, _VMEM, _VMEM],
            out_specs=_VMEM,
        )(x_lin, packed["row_slab"], packed["w_slab"], packed["vec_slab"])
        # TODO(synk): add a batch-tiled grid with dimension_semantics=("parallel",)
        # once bs grows (v7x dual-TC); at bs=2 a grid is pure per-step overhead.
        return out[:, H:H + 1], out[:, 0:H], rnn_hxs

    return pack_params, forward


# ----------------------------------------------------------------------------
# Pure-JAX reference forward (correctness check)
# ----------------------------------------------------------------------------
def build_reference_forward(input_structure, hidden_size, num_heads):
    self_part, _entity_lens, positions, _num_input = _analyze_structure(input_structure)
    H = hidden_size

    def dense_ln(x, w, b, g, beta):
        t = jnp.tanh(x @ w + b)
        mu = t.mean(-1, keepdims=True)
        var = jnp.square(t - mu).mean(-1, keepdims=True)
        return (t - mu) / jnp.sqrt(var + LN_EPS) * g + beta

    def forward(params, inputs, rnn_hxs, masks):
        del masks
        bs = inputs.shape[0]
        self_x = inputs[:, self_part[0]:self_part[1]]
        hs = []
        for (t, s, length) in positions:
            feat = jnp.concatenate([self_x, inputs[:, s:s + length]], axis=1)
            hs.append(dense_ln(feat, *params["transforms"][t]))
        x = jnp.stack(hs, axis=1)                              # (bs, n, H)
        n = x.shape[1]
        hd = H // num_heads

        def proj(p):
            w, b = p
            return (x @ w + b).reshape(bs, n, num_heads, hd).transpose(0, 2, 1, 3)

        q, k, v = proj(params["q"]), proj(params["k"]), proj(params["v"])
        s = jnp.einsum("bhqd,bhkd->bhqk", q, k) / math.sqrt(hd)
        w = jax.nn.softmax(s, axis=-1)
        z = jnp.einsum("bhqk,bhkd->bhqd", w, v).transpose(0, 2, 1, 3).reshape(bs, n, H)
        y = dense_ln(z, *params["attn_dense1"]) + x
        y = jnp.mean(y, axis=1)
        y = dense_ln(jnp.concatenate([y, self_x], axis=-1), *params["attn_dense2"])
        hc = dense_ln(dense_ln(y, *params["critic"][0]), *params["critic"][1])
        ha = dense_ln(dense_ln(y, *params["actor"][0]), *params["actor"][1])
        value = hc @ params["critic_linear"][0] + params["critic_linear"][1]
        return value, ha, rnn_hxs

    return forward


# ----------------------------------------------------------------------------
# Deterministic parameter init (shapes follow AttentionBase.__init__)
# ----------------------------------------------------------------------------
def make_dense_params(key, in_dim, out_dim):
    k1, k2 = jax.random.split(key)
    w = jax.random.normal(k1, (in_dim, out_dim), jnp.float32) / math.sqrt(in_dim)
    b = jax.random.normal(k2, (1, out_dim), jnp.float32) * 0.01
    g = jnp.ones((1, out_dim), jnp.float32)       # LayerNorm weight (default 1)
    beta = jnp.zeros((1, out_dim), jnp.float32)   # LayerNorm bias   (default 0)
    return (w, b, g, beta)


def make_linear_params(key, in_dim, out_dim):
    k1, k2 = jax.random.split(key)
    w = jax.random.normal(k1, (in_dim, out_dim), jnp.float32) / math.sqrt(in_dim)
    b = jax.random.normal(k2, (1, out_dim), jnp.float32) * 0.01
    return (w, b)


def init_params(key, input_structure, hidden_size):
    self_len = 0
    entity_index = {}
    entity_num_input = []
    for name, length in input_structure:
        if name == "self":
            self_len = length
        elif name not in entity_index:
            entity_index[name] = len(entity_num_input)
            entity_num_input.append(length)

    keys = jax.random.split(key, 16 + len(entity_num_input))
    ki = iter(keys)
    params = {
        "transforms": [
            make_dense_params(next(ki), ln + self_len, hidden_size)
            for ln in entity_num_input
        ],
        "q": make_linear_params(next(ki), hidden_size, hidden_size),
        "k": make_linear_params(next(ki), hidden_size, hidden_size),
        "v": make_linear_params(next(ki), hidden_size, hidden_size),
        "attn_dense1": make_dense_params(next(ki), hidden_size, hidden_size),
        "attn_dense2": make_dense_params(next(ki), hidden_size + self_len, hidden_size),
        "actor": [
            make_dense_params(next(ki), hidden_size, hidden_size),
            make_dense_params(next(ki), hidden_size, hidden_size),
        ],
        "critic": [
            make_dense_params(next(ki), hidden_size, hidden_size),
            make_dense_params(next(ki), hidden_size, hidden_size),
        ],
        "critic_linear": make_linear_params(next(ki), hidden_size, 1),
    }
    return params


# ----------------------------------------------------------------------------
if __name__ == "__main__":
    input_structure = [
        ("self", 8),
        ("enemy", 6), ("enemy", 6),
        ("ally", 5), ("ally", 5), ("ally", 5),
    ]
    hidden_size = 32
    num_heads = 4
    batch = 2
    num_input = sum(length for _, length in input_structure)  # 35

    root = jax.random.PRNGKey(0)
    k_params, k_in = jax.random.split(root)
    params = init_params(k_params, input_structure, hidden_size)

    inputs = jax.random.normal(k_in, (batch, num_input), jnp.float32)
    rnn_hxs = jnp.zeros((batch, 1), jnp.float32)   # recurrent_hidden_state_size == 1
    masks = jnp.ones((batch, 1), jnp.float32)

    pack_params, pallas_forward = build_pallas_forward(input_structure, hidden_size, num_heads)
    packed = pack_params(params)                   # one-time parameter packing
    fwd_pallas = jax.jit(pallas_forward)
    fwd_ref = build_reference_forward(input_structure, hidden_size, num_heads)

    value, hidden_actor, hxs_out = fwd_pallas(packed, inputs, rnn_hxs, masks)
    jax.block_until_ready((value, hidden_actor, hxs_out))

    with jax.default_matmul_precision("highest"):
        v_ref, a_ref, _ = fwd_ref(params, inputs, rnn_hxs, masks)
        jax.block_until_ready((v_ref, a_ref))

    assert value.shape == (batch, 1)
    assert hidden_actor.shape == (batch, hidden_size)
    assert hxs_out.shape == (batch, 1)
    np.testing.assert_allclose(np.asarray(value), np.asarray(v_ref), rtol=2e-3, atol=2e-3)
    np.testing.assert_allclose(np.asarray(hidden_actor), np.asarray(a_ref), rtol=2e-3, atol=2e-3)

    print("KERNEL_OK")
</pallas_src>

<mosaic_0001>
module attributes {stable_mosaic.version = 11 : i64} {
  func.func @_fused_forward_kernel(%arg0: memref<16x32xf32, #tpu.memory_space<vmem>>, %arg1: memref<24x32xf32, #tpu.memory_space<vmem>>, %arg2: memref<232x96xf32, #tpu.memory_space<vmem>>, %arg3: memref<17x96xf32, #tpu.memory_space<vmem>>, %arg4: memref<2x33xf32, #tpu.memory_space<vmem>>) attributes {dimension_semantics = [], scalar_prefetch = 0 : i64, scratch_operands = 0 : i64, tpu.core_type = #tpu.core_type<tc>} {
    %c0 = arith.constant 0 : index
    %c0_0 = arith.constant 0 : index
    %0 = vector.load %arg1[%c0, %c0_0] : memref<24x32xf32, #tpu.memory_space<vmem>>, vector<5x32xf32>
    %c8 = arith.constant 8 : index
    %c0_1 = arith.constant 0 : index
    %1 = vector.load %arg1[%c8, %c0_1] : memref<24x32xf32, #tpu.memory_space<vmem>>, vector<5x32xf32>
    %c16 = arith.constant 16 : index
    %c0_2 = arith.constant 0 : index
    %2 = vector.load %arg1[%c16, %c0_2] : memref<24x32xf32, #tpu.memory_space<vmem>>, vector<5x32xf32>
    %c0_3 = arith.constant 0 : index
    %c0_4 = arith.constant 0 : index
    %3 = vector.load %arg2[%c0_3, %c0_4] : memref<232x96xf32, #tpu.memory_space<vmem>>, vector<32x96xf32>
    %c32 = arith.constant 32 : index
    %c0_5 = arith.constant 0 : index
    %4 = vector.load %arg2[%c32, %c0_5] : memref<232x96xf32, #tpu.memory_space<vmem>>, vector<32x32xf32>
    %c64 = arith.constant 64 : index
    %c0_6 = arith.constant 0 : index
    %5 = vector.load %arg2[%c64, %c0_6] : memref<232x96xf32, #tpu.memory_space<vmem>>, vector<32x32xf32>
    %c96 = arith.constant 96 : index
    %c0_7 = arith.constant 0 : index
    %6 = vector.load %arg2[%c96, %c0_7] : memref<232x96xf32, #tpu.memory_space<vmem>>, vector<8x32xf32>
    %c104 = arith.constant 104 : index
    %c0_8 = arith.constant 0 : index
    %7 = vector.load %arg2[%c104, %c0_8] : memref<232x96xf32, #tpu.memory_space<vmem>>, vector<32x64xf32>
    %c136 = arith.constant 136 : index
    %c0_9 = arith.constant 0 : index
    %8 = vector.load %arg2[%c136, %c0_9] : memref<232x96xf32, #tpu.memory_space<vmem>>, vector<32x32xf32>
    %c168 = arith.constant 168 : index
    %c0_10 = arith.constant 0 : index
    %9 = vector.load %arg2[%c168, %c0_10] : memref<232x96xf32, #tpu.memory_space<vmem>>, vector<32x32xf32>
    %c200 = arith.constant 200 : index
    %c0_11 = arith.constant 0 : index
    %10 = vector.load %arg2[%c200, %c0_11] : memref<232x96xf32, #tpu.memory_space<vmem>>, vector<32x1xf32>
    %c0_12 = arith.constant 0 : index
    %c0_13 = arith.constant 0 : index
    %11 = vector.load %arg3[%c0_12, %c0_13] : memref<17x96xf32, #tpu.memory_space<vmem>>, vector<1x96xf32>
    %c1 = arith.constant 1 : index
    %c0_14 = arith.constant 0 : index
    %12 = vector.load %arg3[%c1, %c0_14] : memref<17x96xf32, #tpu.memory_space<vmem>>, vector<1x32xf32>
    %c2 = arith.constant 2 : index
    %c0_15 = arith.constant 0 : index
    %13 = vector.load %arg3[%c2, %c0_15] : memref<17x96xf32, #tpu.memory_space<vmem>>, vector<1x32xf32>
    %c3 = arith.constant 3 : index
    %c0_16 = arith.constant 0 : index
    %14 = vector.load %arg3[%c3, %c0_16] : memref<17x96xf32, #tpu.memory_space<vmem>>, vector<1x32xf32>
    %c4 = arith.constant 4 : index
    %c0_17 = arith.constant 0 : index
    %15 = vector.load %arg3[%c4, %c0_17] : memref<17x96xf32, #tpu.memory_space<vmem>>, vector<1x32xf32>
    %c5 = arith.constant 5 : index
    %c0_18 = arith.constant 0 : index
    %16 = vector.load %arg3[%c5, %c0_18] : memref<17x96xf32, #tpu.memory_space<vmem>>, vector<1x32xf32>
    %c6 = arith.constant 6 : index
    %c0_19 = arith.constant 0 : index
    %17 = vector.load %arg3[%c6, %c0_19] : memref<17x96xf32, #tpu.memory_space<vmem>>, vector<1x32xf32>
    %c7 = arith.constant 7 : index
    %c0_20 = arith.constant 0 : index
    %18 = vector.load %arg3[%c7, %c0_20] : memref<17x96xf32, #tpu.memory_space<vmem>>, vector<1x64xf32>
    %c8_21 = arith.constant 8 : index
    %c0_22 = arith.constant 0 : index
    %19 = vector.load %arg3[%c8_21, %c0_22] : memref<17x96xf32, #tpu.memory_space<vmem>>, vector<1x64xf32>
    %c9 = arith.constant 9 : index
    %c0_23 = arith.constant 0 : index
    %20 = vector.load %arg3[%c9, %c0_23] : memref<17x96xf32, #tpu.memory_space<vmem>>, vector<1x64xf32>
    %c10 = arith.constant 10 : index
    %c0_24 = arith.constant 0 : index
    %21 = vector.load %arg3[%c10, %c0_24] : memref<17x96xf32, #tpu.memory_space<vmem>>, vector<1x32xf32>
    %c11 = arith.constant 11 : index
    %c0_25 = arith.constant 0 : index
    %22 = vector.load %arg3[%c11, %c0_25] : memref<17x96xf32, #tpu.memory_space<vmem>>, vector<1x32xf32>
    %c12 = arith.constant 12 : index
    %c0_26 = arith.constant 0 : index
    %23 = vector.load %arg3[%c12, %c0_26] : memref<17x96xf32, #tpu.memory_space<vmem>>, vector<1x32xf32>
    %c13 = arith.constant 13 : index
    %c0_27 = arith.constant 0 : index
    %24 = vector.load %arg3[%c13, %c0_27] : memref<17x96xf32, #tpu.memory_space<vmem>>, vector<1x32xf32>
    %c14 = arith.constant 14 : index
    %c0_28 = arith.constant 0 : index
    %25 = vector.load %arg3[%c14, %c0_28] : memref<17x96xf32, #tpu.memory_space<vmem>>, vector<1x32xf32>
    %c15 = arith.constant 15 : index
    %c0_29 = arith.constant 0 : index
    %26 = vector.load %arg3[%c15, %c0_29] : memref<17x96xf32, #tpu.memory_space<vmem>>, vector<1x32xf32>
    %c16_30 = arith.constant 16 : index
    %c0_31 = arith.constant 0 : index
    %27 = vector.load %arg3[%c16_30, %c0_31] : memref<17x96xf32, #tpu.memory_space<vmem>>, vector<1x1xf32>
    %c0_32 = arith.constant 0 : index
    %c0_33 = arith.constant 0 : index
    %28 = vector.load %arg0[%c0_32, %c0_33] : memref<16x32xf32, #tpu.memory_space<vmem>>, vector<5x32xf32>
    %29 = arith.addf %28, %0 : vector<5x32xf32>
    %30 = math.tanh %29 : vector<5x32xf32>
    %cst = arith.constant dense<0.000000e+00> : vector<5xf32>
    %31 = vector.multi_reduction <add>, %30, %cst [1] : vector<5x32xf32> to vector<5xf32>
    %32 = vector.shape_cast %31 : vector<5xf32> to vector<5x1xf32>
    %cst_34 = arith.constant 3.200000e+01 : f32
    %33 = vector.broadcast %cst_34 : f32 to vector<5x1xf32>
    %34 = arith.divf %32, %33 : vector<5x1xf32>
    %35 = vector.broadcast %34 : vector<5x1xf32> to vector<5x32xf32>
    %36 = arith.subf %30, %35 : vector<5x32xf32>
    %37 = arith.mulf %36, %36 : vector<5x32xf32>
    %cst_35 = arith.constant dense<0.000000e+00> : vector<5xf32>
    %38 = vector.multi_reduction <add>, %37, %cst_35 [1] : vector<5x32xf32> to vector<5xf32>
    %39 = vector.shape_cast %38 : vector<5xf32> to vector<5x1xf32>
    %cst_36 = arith.constant 3.200000e+01 : f32
    %40 = vector.broadcast %cst_36 : f32 to vector<5x1xf32>
    %41 = arith.divf %39, %40 : vector<5x1xf32>
    %42 = vector.broadcast %34 : vector<5x1xf32> to vector<5x32xf32>
    %43 = arith.subf %30, %42 : vector<5x32xf32>
    %cst_37 = arith.constant 9.99999974E-6 : f32
    %44 = vector.broadcast %cst_37 : f32 to vector<5x1xf32>
    %45 = arith.addf %41, %44 : vector<5x1xf32>
    %46 = math.rsqrt %45 : vector<5x1xf32>
    %47 = vector.broadcast %46 : vector<5x1xf32> to vector<5x32xf32>
    %48 = arith.mulf %43, %47 : vector<5x32xf32>
    %49 = arith.mulf %48, %1 : vector<5x32xf32>
    %50 = arith.addf %49, %2 : vector<5x32xf32>
    %c5_38 = arith.constant 5 : index
    %c0_39 = arith.constant 0 : index
    %51 = vector.load %arg0[%c5_38, %c0_39] : memref<16x32xf32, #tpu.memory_space<vmem>>, vector<1x8xf32>
    %cst_40 = arith.constant dense<0.000000e+00> : vector<5x96xf32>
    %52 = tpu.matmul %50, %3, %cst_40 {dimension_numbers = #tpu.dot_dimension_numbers<[1], [0], [0], [1], [0, 0, 1, 1], [], []>} : vector<5x32xf32>, vector<32x96xf32>, vector<5x96xf32> -> vector<5x96xf32>
    %53 = vector.broadcast %11 : vector<1x96xf32> to vector<5x96xf32>
    %54 = arith.addf %52, %53 : vector<5x96xf32>
    %cst_41 = arith.constant 0.000000e+00 : f32
    %55 = vector.broadcast %cst_41 : f32 to vector<5x32xf32>
    %56 = vector.extract_strided_slice %54 {offsets = [0, 0], sizes = [5, 8], strides = [1, 1]} : vector<5x96xf32> to vector<5x8xf32>
    %57 = vector.extract_strided_slice %54 {offsets = [0, 32], sizes = [5, 8], strides = [1, 1]} : vector<5x96xf32> to vector<5x8xf32>
    %58 = vector.extract_strided_slice %54 {offsets = [0, 64], sizes = [5, 8], strides = [1, 1]} : vector<5x96xf32> to vector<5x8xf32>
    %cst_42 = arith.constant dense<0.000000e+00> : vector<5x5xf32>
    %59 = tpu.matmul %56, %57, %cst_42 {dimension_numbers = #tpu.dot_dimension_numbers<[1], [1], [0], [0], [0, 0, 1, 0], [], []>} : vector<5x8xf32>, vector<5x8xf32>, vector<5x5xf32> -> vector<5x5xf32>
    %cst_43 = arith.constant 0.353553385 : f32
    %60 = vector.broadcast %cst_43 : f32 to vector<5x5xf32>
    %61 = arith.mulf %59, %60 : vector<5x5xf32>
    %62 = math.exp %61 : vector<5x5xf32>
    %cst_44 = arith.constant dense<0.000000e+00> : vector<5xf32>
    %63 = vector.multi_reduction <add>, %62, %cst_44 [1] : vector<5x5xf32> to vector<5xf32>
    %64 = vector.shape_cast %63 : vector<5xf32> to vector<5x1xf32>
    %65 = tpu.reciprocal %64 {approx = true} : vector<5x1xf32> -> vector<5x1xf32>
    %66 = vector.broadcast %65 : vector<5x1xf32> to vector<5x5xf32>
    %67 = arith.mulf %62, %66 : vector<5x5xf32>
    %cst_45 = arith.constant dense<0.000000e+00> : vector<5x8xf32>
    %68 = tpu.matmul %67, %58, %cst_45 {dimension_numbers = #tpu.dot_dimension_numbers<[1], [0], [0], [1], [0, 0, 1, 1], [], []>} : vector<5x5xf32>, vector<5x8xf32>, vector<5x8xf32> -> vector<5x8xf32>
    %69 = vector.extract_strided_slice %4 {offsets = [0, 0], sizes = [8, 32], strides = [1, 1]} : vector<32x32xf32> to vector<8x32xf32>
    %cst_46 = arith.constant dense<0.000000e+00> : vector<5x32xf32>
    %70 = tpu.matmul %68, %69, %cst_46 {dimension_numbers = #tpu.dot_dimension_numbers<[1], [0], [0], [1], [0, 0, 1, 1], [], []>} : vector<5x8xf32>, vector<8x32xf32>, vector<5x32xf32> -> vector<5x32xf32>
    %71 = arith.addf %55, %70 : vector<5x32xf32>
    %72 = vector.extract_strided_slice %54 {offsets = [0, 8], sizes = [5, 8], strides = [1, 1]} : vector<5x96xf32> to vector<5x8xf32>
    %73 = vector.extract_strided_slice %54 {offsets = [0, 40], sizes = [5, 8], strides = [1, 1]} : vector<5x96xf32> to vector<5x8xf32>
    %74 = vector.extract_strided_slice %54 {offsets = [0, 72], sizes = [5, 8], strides = [1, 1]} : vector<5x96xf32> to vector<5x8xf32>
    %cst_47 = arith.constant dense<0.000000e+00> : vector<5x5xf32>
    %75 = tpu.matmul %72, %73, %cst_47 {dimension_numbers = #tpu.dot_dimension_numbers<[1], [1], [0], [0], [0, 0, 1, 0], [], []>} : vector<5x8xf32>, vector<5x8xf32>, vector<5x5xf32> -> vector<5x5xf32>
    %cst_48 = arith.constant 0.353553385 : f32
    %76 = vector.broadcast %cst_48 : f32 to vector<5x5xf32>
    %77 = arith.mulf %75, %76 : vector<5x5xf32>
    %78 = math.exp %77 : vector<5x5xf32>
    %cst_49 = arith.constant dense<0.000000e+00> : vector<5xf32>
    %79 = vector.multi_reduction <add>, %78, %cst_49 [1] : vector<5x5xf32> to vector<5xf32>
    %80 = vector.shape_cast %79 : vector<5xf32> to vector<5x1xf32>
    %81 = tpu.reciprocal %80 {approx = true} : vector<5x1xf32> -> vector<5x1xf32>
    %82 = vector.broadcast %81 : vector<5x1xf32> to vector<5x5xf32>
    %83 = arith.mulf %78, %82 : vector<5x5xf32>
    %cst_50 = arith.constant dense<0.000000e+00> : vector<5x8xf32>
    %84 = tpu.matmul %83, %74, %cst_50 {dimension_numbers = #tpu.dot_dimension_numbers<[1], [0], [0], [1], [0, 0, 1, 1], [], []>} : vector<5x5xf32>, vector<5x8xf32>, vector<5x8xf32> -> vector<5x8xf32>
    %85 = vector.extract_strided_slice %4 {offsets = [8, 0], sizes = [8, 32], strides = [1, 1]} : vector<32x32xf32> to vector<8x32xf32>
    %cst_51 = arith.constant dense<0.000000e+00> : vector<5x32xf32>
    %86 = tpu.matmul %84, %85, %cst_51 {dimension_numbers = #tpu.dot_dimension_numbers<[1], [0], [0], [1], [0, 0, 1, 1], [], []>} : vector<5x8xf32>, vector<8x32xf32>, vector<5x32xf32> -> vector<5x32xf32>
    %87 = arith.addf %71, %86 : vector<5x32xf32>
    %88 = vector.extract_strided_slice %54 {offsets = [0, 16], sizes = [5, 8], strides = [1, 1]} : vector<5x96xf32> to vector<5x8xf32>
    %89 = vector.extract_strided_slice %54 {offsets = [0, 48], sizes = [5, 8], strides = [1, 1]} : vector<5x96xf32> to vector<5x8xf32>
    %90 = vector.extract_strided_slice %54 {offsets = [0, 80], sizes = [5, 8], strides = [1, 1]} : vector<5x96xf32> to vector<5x8xf32>
    %cst_52 = arith.constant dense<0.000000e+00> : vector<5x5xf32>
    %91 = tpu.matmul %88, %89, %cst_52 {dimension_numbers = #tpu.dot_dimension_numbers<[1], [1], [0], [0], [0, 0, 1, 0], [], []>} : vector<5x8xf32>, vector<5x8xf32>, vector<5x5xf32> -> vector<5x5xf32>
    %cst_53 = arith.constant 0.353553385 : f32
    %92 = vector.broadcast %cst_53 : f32 to vector<5x5xf32>
    %93 = arith.mulf %91, %92 : vector<5x5xf32>
    %94 = math.exp %93 : vector<5x5xf32>
    %cst_54 = arith.constant dense<0.000000e+00> : vector<5xf32>
    %95 = vector.multi_reduction <add>, %94, %cst_54 [1] : vector<5x5xf32> to vector<5xf32>
    %96 = vector.shape_cast %95 : vector<5xf32> to vector<5x1xf32>
    %97 = tpu.reciprocal %96 {approx = true} : vector<5x1xf32> -> vector<5x1xf32>
    %98 = vector.broadcast %97 : vector<5x1xf32> to vector<5x5xf32>
    %99 = arith.mulf %94, %98 : vector<5x5xf32>
    %cst_55 = arith.constant dense<0.000000e+00> : vector<5x8xf32>
    %100 = tpu.matmul %99, %90, %cst_55 {dimension_numbers = #tpu.dot_dimension_numbers<[1], [0], [0], [1], [0, 0, 1, 1], [], []>} : vector<5x5xf32>, vector<5x8xf32>, vector<5x8xf32> -> vector<5x8xf32>
    %101 = vector.extract_strided_slice %4 {offsets = [16, 0], sizes = [8, 32], strides = [1, 1]} : vector<32x32xf32> to vector<8x32xf32>
    %cst_56 = arith.constant dense<0.000000e+00> : vector<5x32xf32>
    %102 = tpu.matmul %100, %101, %cst_56 {dimension_numbers = #tpu.dot_dimension_numbers<[1], [0], [0], [1], [0, 0, 1, 1], [], []>} : vector<5x8xf32>, vector<8x32xf32>, vector<5x32xf32> -> vector<5x32xf32>
    %103 = arith.addf %87, %102 : vector<5x32xf32>
    %104 = vector.extract_strided_slice %54 {offsets = [0, 24], sizes = [5, 8], strides = [1, 1]} : vector<5x96xf32> to vector<5x8xf32>
    %105 = vector.extract_strided_slice %54 {offsets = [0, 56], sizes = [5, 8], strides = [1, 1]} : vector<5x96xf32> to vector<5x8xf32>
    %106 = vector.extract_strided_slice %54 {offsets = [0, 88], sizes = [5, 8], strides = [1, 1]} : vector<5x96xf32> to vector<5x8xf32>
    %cst_57 = arith.constant dense<0.000000e+00> : vector<5x5xf32>
    %107 = tpu.matmul %104, %105, %cst_57 {dimension_numbers = #tpu.dot_dimension_numbers<[1], [1], [0], [0], [0, 0, 1, 0], [], []>} : vector<5x8xf32>, vector<5x8xf32>, vector<5x5xf32> -> vector<5x5xf32>
    %cst_58 = arith.constant 0.353553385 : f32
    %108 = vector.broadcast %cst_58 : f32 to vector<5x5xf32>
    %109 = arith.mulf %107, %108 : vector<5x5xf32>
    %110 = math.exp %109 : vector<5x5xf32>
    %cst_59 = arith.constant dense<0.000000e+00> : vector<5xf32>
    %111 = vector.multi_reduction <add>, %110, %cst_59 [1] : vector<5x5xf32> to vector<5xf32>
    %112 = vector.shape_cast %111 : vector<5xf32> to vector<5x1xf32>
    %113 = tpu.reciprocal %112 {approx = true} : vector<5x1xf32> -> vector<5x1xf32>
    %114 = vector.broadcast %113 : vector<5x1xf32> to vector<5x5xf32>
    %115 = arith.mulf %110, %114 : vector<5x5xf32>
    %cst_60 = arith.constant dense<0.000000e+00> : vector<5x8xf32>
    %116 = tpu.matmul %115, %106, %cst_60 {dimension_numbers = #tpu.dot_dimension_numbers<[1], [0], [0], [1], [0, 0, 1, 1], [], []>} : vector<5x5xf32>, vector<5x8xf32>, vector<5x8xf32> -> vector<5x8xf32>
    %117 = vector.extract_strided_slice %4 {offsets = [24, 0], sizes = [8, 32], strides = [1, 1]} : vector<32x32xf32> to vector<8x32xf32>
    %cst_61 = arith.constant dense<0.000000e+00> : vector<5x32xf32>
    %118 = tpu.matmul %116, %117, %cst_61 {dimension_numbers = #tpu.dot_dimension_numbers<[1], [0], [0], [1], [0, 0, 1, 1], [], []>} : vector<5x8xf32>, vector<8x32xf32>, vector<5x32xf32> -> vector<5x32xf32>
    %119 = arith.addf %103, %118 : vector<5x32xf32>
    %120 = vector.broadcast %12 : vector<1x32xf32> to vector<5x32xf32>
    %121 = arith.addf %119, %120 : vector<5x32xf32>
    %122 = math.tanh %121 : vector<5x32xf32>
    %cst_62 = arith.constant dense<0.000000e+00> : vector<5xf32>
    %123 = vector.multi_reduction <add>, %122, %cst_62 [1] : vector<5x32xf32> to vector<5xf32>
    %124 = vector.shape_cast %123 : vector<5xf32> to vector<5x1xf32>
    %cst_63 = arith.constant 3.200000e+01 : f32
    %125 = vector.broadcast %cst_63 : f32 to vector<5x1xf32>
    %126 = arith.divf %124, %125 : vector<5x1xf32>
    %127 = vector.broadcast %126 : vector<5x1xf32> to vector<5x32xf32>
    %128 = arith.subf %122, %127 : vector<5x32xf32>
    %129 = arith.mulf %128, %128 : vector<5x32xf32>
    %cst_64 = arith.constant dense<0.000000e+00> : vector<5xf32>
    %130 = vector.multi_reduction <add>, %129, %cst_64 [1] : vector<5x32xf32> to vector<5xf32>
    %131 = vector.shape_cast %130 : vector<5xf32> to vector<5x1xf32>
    %cst_65 = arith.constant 3.200000e+01 : f32
    %132 = vector.broadcast %cst_65 : f32 to vector<5x1xf32>
    %133 = arith.divf %131, %132 : vector<5x1xf32>
    %134 = vector.broadcast %126 : vector<5x1xf32> to vector<5x32xf32>
    %135 = arith.subf %122, %134 : vector<5x32xf32>
    %cst_66 = arith.constant 9.99999974E-6 : f32
    %136 = vector.broadcast %cst_66 : f32 to vector<5x1xf32>
    %137 = arith.addf %133, %136 : vector<5x1xf32>
    %138 = math.rsqrt %137 : vector<5x1xf32>
    %139 = vector.broadcast %138 : vector<5x1xf32> to vector<5x32xf32>
    %140 = arith.mulf %135, %139 : vector<5x32xf32>
    %141 = vector.broadcast %13 : vector<1x32xf32> to vector<5x32xf32>
    %142 = arith.mulf %140, %141 : vector<5x32xf32>
    %143 = vector.broadcast %14 : vector<1x32xf32> to vector<5x32xf32>
    %144 = arith.addf %142, %143 : vector<5x32xf32>
    %145 = arith.addf %144, %50 : vector<5x32xf32>
    %cst_67 = arith.constant dense<0.000000e+00> : vector<32xf32>
    %146 = vector.multi_reduction <add>, %145, %cst_67 [0] : vector<5x32xf32> to vector<32xf32>
    %147 = vector.shape_cast %146 : vector<32xf32> to vector<1x32xf32>
    %cst_68 = arith.constant 5.000000e+00 : f32
    %148 = vector.broadcast %cst_68 : f32 to vector<1x32xf32>
    %149 = arith.divf %147, %148 : vector<1x32xf32>
    %cst_69 = arith.constant dense<0.000000e+00> : vector<1x32xf32>
    %150 = tpu.matmul %149, %5, %cst_69 {dimension_numbers = #tpu.dot_dimension_numbers<[1], [0], [0], [1], [0, 0, 1, 1], [], []>} : vector<1x32xf32>, vector<32x32xf32>, vector<1x32xf32> -> vector<1x32xf32>
    %cst_70 = arith.constant dense<0.000000e+00> : vector<1x32xf32>
    %151 = tpu.matmul %51, %6, %cst_70 {dimension_numbers = #tpu.dot_dimension_numbers<[1], [0], [0], [1], [0, 0, 1, 1], [], []>} : vector<1x8xf32>, vector<8x32xf32>, vector<1x32xf32> -> vector<1x32xf32>
    %152 = arith.addf %150, %151 : vector<1x32xf32>
    %153 = arith.addf %152, %15 : vector<1x32xf32>
    %154 = math.tanh %153 : vector<1x32xf32>
    %cst_71 = arith.constant dense<0.000000e+00> : vector<1xf32>
    %155 = vector.multi_reduction <add>, %154, %cst_71 [1] : vector<1x32xf32> to vector<1xf32>
    %156 = vector.shape_cast %155 : vector<1xf32> to vector<1x1xf32>
    %cst_72 = arith.constant 3.200000e+01 : f32
    %157 = vector.broadcast %cst_72 : f32 to vector<1x1xf32>
    %158 = arith.divf %156, %157 : vector<1x1xf32>
    %159 = vector.broadcast %158 : vector<1x1xf32> to vector<1x32xf32>
    %160 = arith.subf %154, %159 : vector<1x32xf32>
    %161 = arith.mulf %160, %160 : vector<1x32xf32>
    %cst_73 = arith.constant dense<0.000000e+00> : vector<1xf32>
    %162 = vector.multi_reduction <add>, %161, %cst_73 [1] : vector<1x32xf32> to vector<1xf32>
    %163 = vector.shape_cast %162 : vector<1xf32> to vector<1x1xf32>
    %cst_74 = arith.constant 3.200000e+01 : f32
    %164 = vector.broadcast %cst_74 : f32 to vector<1x1xf32>
    %165 = arith.divf %163, %164 : vector<1x1xf32>
    %166 = vector.broadcast %158 : vector<1x1xf32> to vector<1x32xf32>
    %167 = arith.subf %154, %166 : vector<1x32xf32>
    %cst_75 = arith.constant 9.99999974E-6 : f32
    %168 = vector.broadcast %cst_75 : f32 to vector<1x1xf32>
    %169 = arith.addf %165, %168 : vector<1x1xf32>
    %170 = math.rsqrt %169 : vector<1x1xf32>
    %171 = vector.broadcast %170 : vector<1x1xf32> to vector<1x32xf32>
    %172 = arith.mulf %167, %171 : vector<1x32xf32>
    %173 = arith.mulf %172, %16 : vector<1x32xf32>
    %174 = arith.addf %173, %17 : vector<1x32xf32>
    %cst_76 = arith.constant dense<0.000000e+00> : vector<1x64xf32>
    %175 = tpu.matmul %174, %7, %cst_76 {dimension_numbers = #tpu.dot_dimension_numbers<[1], [0], [0], [1], [0, 0, 1, 1], [], []>} : vector<1x32xf32>, vector<32x64xf32>, vector<1x64xf32> -> vector<1x64xf32>
    %176 = arith.addf %175, %18 : vector<1x64xf32>
    %177 = math.tanh %176 : vector<1x64xf32>
    %178 = vector.extract_strided_slice %177 {offsets = [0, 0], sizes = [1, 32], strides = [1, 1]} : vector<1x64xf32> to vector<1x32xf32>
    %179 = vector.extract_strided_slice %19 {offsets = [0, 0], sizes = [1, 32], strides = [1, 1]} : vector<1x64xf32> to vector<1x32xf32>
    %180 = vector.extract_strided_slice %20 {offsets = [0, 0], sizes = [1, 32], strides = [1, 1]} : vector<1x64xf32> to vector<1x32xf32>
    %cst_77 = arith.constant dense<0.000000e+00> : vector<1xf32>
    %181 = vector.multi_reduction <add>, %178, %cst_77 [1] : vector<1x32xf32> to vector<1xf32>
    %182 = vector.shape_cast %181 : vector<1xf32> to vector<1x1xf32>
    %cst_78 = arith.constant 3.200000e+01 : f32
    %183 = vector.broadcast %cst_78 : f32 to vector<1x1xf32>
    %184 = arith.divf %182, %183 : vector<1x1xf32>
    %185 = vector.broadcast %184 : vector<1x1xf32> to vector<1x32xf32>
    %186 = arith.subf %178, %185 : vector<1x32xf32>
    %187 = arith.mulf %186, %186 : vector<1x32xf32>
    %cst_79 = arith.constant dense<0.000000e+00> : vector<1xf32>
    %188 = vector.multi_reduction <add>, %187, %cst_79 [1] : vector<1x32xf32> to vector<1xf32>
    %189 = vector.shape_cast %188 : vector<1xf32> to vector<1x1xf32>
    %cst_80 = arith.constant 3.200000e+01 : f32
    %190 = vector.broadcast %cst_80 : f32 to vector<1x1xf32>
    %191 = arith.divf %189, %190 : vector<1x1xf32>
    %192 = vector.broadcast %184 : vector<1x1xf32> to vector<1x32xf32>
    %193 = arith.subf %178, %192 : vector<1x32xf32>
    %cst_81 = arith.constant 9.99999974E-6 : f32
    %194 = vector.broadcast %cst_81 : f32 to vector<1x1xf32>
    %195 = arith.addf %191, %194 : vector<1x1xf32>
    %196 = math.rsqrt %195 : vector<1x1xf32>
    %197 = vector.broadcast %196 : vector<1x1xf32> to vector<1x32xf32>
    %198 = arith.mulf %193, %197 : vector<1x32xf32>
    %199 = arith.mulf %198, %179 : vector<1x32xf32>
    %200 = arith.addf %199, %180 : vector<1x32xf32>
    %201 = vector.extract_strided_slice %177 {offsets = [0, 32], sizes = [1, 32], strides = [1, 1]} : vector<1x64xf32> to vector<1x32xf32>
    %202 = vector.extract_strided_slice %19 {offsets = [0, 32], sizes = [1, 32], strides = [1, 1]} : vector<1x64xf32> to vector<1x32xf32>
    %203 = vector.extract_strided_slice %20 {offsets = [0, 32], sizes = [1, 32], strides = [1, 1]} : vector<1x64xf32> to vector<1x32xf32>
    %cst_82 = arith.constant dense<0.000000e+00> : vector<1xf32>
    %204 = vector.multi_reduction <add>, %201, %cst_82 [1] : vector<1x32xf32> to vector<1xf32>
    %205 = vector.shape_cast %204 : vector<1xf32> to vector<1x1xf32>
    %cst_83 = arith.constant 3.200000e+01 : f32
    %206 = vector.broadcast %cst_83 : f32 to vector<1x1xf32>
    %207 = arith.divf %205, %206 : vector<1x1xf32>
    %208 = vector.broadcast %207 : vector<1x1xf32> to vector<1x32xf32>
    %209 = arith.subf %201, %208 : vector<1x32xf32>
    %210 = arith.mulf %209, %209 : vector<1x32xf32>
    %cst_84 = arith.constant dense<0.000000e+00> : vector<1xf32>
    %211 = vector.multi_reduction <add>, %210, %cst_84 [1] : vector<1x32xf32> to vector<1xf32>
    %212 = vector.shape_cast %211 : vector<1xf32> to vector<1x1xf32>
    %cst_85 = arith.constant 3.200000e+01 : f32
    %213 = vector.broadcast %cst_85 : f32 to vector<1x1xf32>
    %214 = arith.divf %212, %213 : vector<1x1xf32>
    %215 = vector.broadcast %207 : vector<1x1xf32> to vector<1x32xf32>
    %216 = arith.subf %201, %215 : vector<1x32xf32>
    %cst_86 = arith.constant 9.99999974E-6 : f32
    %217 = vector.broadcast %cst_86 : f32 to vector<1x1xf32>
    %218 = arith.addf %214, %217 : vector<1x1xf32>
    %219 = math.rsqrt %218 : vector<1x1xf32>
    %220 = vector.broadcast %219 : vector<1x1xf32> to vector<1x32xf32>
    %221 = arith.mulf %216, %220 : vector<1x32xf32>
    %222 = arith.mulf %221, %202 : vector<1x32xf32>
    %223 = arith.addf %222, %203 : vector<1x32xf32>
    %cst_87 = arith.constant dense<0.000000e+00> : vector<1x32xf32>
    %224 = tpu.matmul %200, %8, %cst_87 {dimension_numbers = #tpu.dot_dimension_numbers<[1], [0], [0], [1], [0, 0, 1, 1], [], []>} : vector<1x32xf32>, vector<32x32xf32>, vector<1x32xf32> -> vector<1x32xf32>
    %225 = arith.addf %224, %21 : vector<1x32xf32>
    %226 = math.tanh %225 : vector<1x32xf32>
    %cst_88 = arith.constant dense<0.000000e+00> : vector<1xf32>
    %227 = vector.multi_reduction <add>, %226, %cst_88 [1] : vector<1x32xf32> to vector<1xf32>
    %228 = vector.shape_cast %227 : vector<1xf32> to vector<1x1xf32>
    %cst_89 = arith.constant 3.200000e+01 : f32
    %229 = vector.broadcast %cst_89 : f32 to vector<1x1xf32>
    %230 = arith.divf %228, %229 : vector<1x1xf32>
    %231 = vector.broadcast %230 : vector<1x1xf32> to vector<1x32xf32>
    %232 = arith.subf %226, %231 : vector<1x32xf32>
    %233 = arith.mulf %232, %232 : vector<1x32xf32>
    %cst_90 = arith.constant dense<0.000000e+00> : vector<1xf32>
    %234 = vector.multi_reduction <add>, %233, %cst_90 [1] : vector<1x32xf32> to vector<1xf32>
    %235 = vector.shape_cast %234 : vector<1xf32> to vector<1x1xf32>
    %cst_91 = arith.constant 3.200000e+01 : f32
    %236 = vector.broadcast %cst_91 : f32 to vector<1x1xf32>
    %237 = arith.divf %235, %236 : vector<1x1xf32>
    %238 = vector.broadcast %230 : vector<1x1xf32> to vector<1x32xf32>
    %239 = arith.subf %226, %238 : vector<1x32xf32>
    %cst_92 = arith.constant 9.99999974E-6 : f32
    %240 = vector.broadcast %cst_92 : f32 to vector<1x1xf32>
    %241 = arith.addf %237, %240 : vector<1x1xf32>
    %242 = math.rsqrt %241 : vector<1x1xf32>
    %243 = vector.broadcast %242 : vector<1x1xf32> to vector<1x32xf32>
    %244 = arith.mulf %239, %243 : vector<1x32xf32>
    %245 = arith.mulf %244, %22 : vector<1x32xf32>
    %246 = arith.addf %245, %23 : vector<1x32xf32>
    %cst_93 = arith.constant dense<0.000000e+00> : vector<1x32xf32>
    %247 = tpu.matmul %223, %9, %cst_93 {dimension_numbers = #tpu.dot_dimension_numbers<[1], [0], [0], [1], [0, 0, 1, 1], [], []>} : vector<1x32xf32>, vector<32x32xf32>, vector<1x32xf32> -> vector<1x32xf32>
    %248 = arith.addf %247, %24 : vector<1x32xf32>
    %249 = math.tanh %248 : vector<1x32xf32>
    %cst_94 = arith.constant dense<0.000000e+00> : vector<1xf32>
    %250 = vector.multi_reduction <add>, %249, %cst_94 [1] : vector<1x32xf32> to vector<1xf32>
    %251 = vector.shape_cast %250 : vector<1xf32> to vector<1x1xf32>
    %cst_95 = arith.constant 3.200000e+01 : f32
    %252 = vector.broadcast %cst_95 : f32 to vector<1x1xf32>
    %253 = arith.divf %251, %252 : vector<1x1xf32>
    %254 = vector.broadcast %253 : vector<1x1xf32> to vector<1x32xf32>
    %255 = arith.subf %249, %254 : vector<1x32xf32>
    %256 = arith.mulf %255, %255 : vector<1x32xf32>
    %cst_96 = arith.constant dense<0.000000e+00> : vector<1xf32>
    %257 = vector.multi_reduction <add>, %256, %cst_96 [1] : vector<1x32xf32> to vector<1xf32>
    %258 = vector.shape_cast %257 : vector<1xf32> to vector<1x1xf32>
    %cst_97 = arith.constant 3.200000e+01 : f32
    %259 = vector.broadcast %cst_97 : f32 to vector<1x1xf32>
    %260 = arith.divf %258, %259 : vector<1x1xf32>
    %261 = vector.broadcast %253 : vector<1x1xf32> to vector<1x32xf32>
    %262 = arith.subf %249, %261 : vector<1x32xf32>
    %cst_98 = arith.constant 9.99999974E-6 : f32
    %263 = vector.broadcast %cst_98 : f32 to vector<1x1xf32>
    %264 = arith.addf %260, %263 : vector<1x1xf32>
    %265 = math.rsqrt %264 : vector<1x1xf32>
    %266 = vector.broadcast %265 : vector<1x1xf32> to vector<1x32xf32>
    %267 = arith.mulf %262, %266 : vector<1x32xf32>
    %268 = arith.mulf %267, %25 : vector<1x32xf32>
    %269 = arith.addf %268, %26 : vector<1x32xf32>
    %cst_99 = arith.constant dense<0.000000e+00> : vector<1x1xf32>
    %270 = tpu.matmul %246, %10, %cst_99 {dimension_numbers = #tpu.dot_dimension_numbers<[1], [0], [0], [1], [0, 0, 1, 1], [], []>} : vector<1x32xf32>, vector<32x1xf32>, vector<1x1xf32> -> vector<1x1xf32>
    %271 = arith.addf %270, %27 : vector<1x1xf32>
    %c0_100 = arith.constant 0 : index
    %c0_101 = arith.constant 0 : index
    %272 = vector.load %arg4[%c0_100, %c0_101] : memref<2x33xf32, #tpu.memory_space<vmem>>, vector<1x32xf32>
    tpu.vector_store %arg4[%c0_100, %c0_101], %269 {strides = array<i32>} : memref<2x33xf32, #tpu.memory_space<vmem>>, vector<1x32xf32>,
    %c0_102 = arith.constant 0 : index
    %c32_103 = arith.constant 32 : index
    %273 = vector.load %arg4[%c0_102, %c32_103] : memref<2x33xf32, #tpu.memory_space<vmem>>, vector<1x1xf32>
    tpu.vector_store %arg4[%c0_102, %c32_103], %271 {strides = array<i32>} : memref<2x33xf32, #tpu.memory_space<vmem>>, vector<1x1xf32>,
    %c8_104 = arith.constant 8 : index
    %c0_105 = arith.constant 0 : index
    %274 = vector.load %arg0[%c8_104, %c0_105] : memref<16x32xf32, #tpu.memory_space<vmem>>, vector<5x32xf32>
    %275 = arith.addf %274, %0 : vector<5x32xf32>
    %276 = math.tanh %275 : vector<5x32xf32>
    %cst_106 = arith.constant dense<0.000000e+00> : vector<5xf32>
    %277 = vector.multi_reduction <add>, %276, %cst_106 [1] : vector<5x32xf32> to vector<5xf32>
    %278 = vector.shape_cast %277 : vector<5xf32> to vector<5x1xf32>
    %cst_107 = arith.constant 3.200000e+01 : f32
    %279 = vector.broadcast %cst_107 : f32 to vector<5x1xf32>
    %280 = arith.divf %278, %279 : vector<5x1xf32>
    %281 = vector.broadcast %280 : vector<5x1xf32> to vector<5x32xf32>
    %282 = arith.subf %276, %281 : vector<5x32xf32>
    %283 = arith.mulf %282, %282 : vector<5x32xf32>
    %cst_108 = arith.constant dense<0.000000e+00> : vector<5xf32>
    %284 = vector.multi_reduction <add>, %283, %cst_108 [1] : vector<5x32xf32> to vector<5xf32>
    %285 = vector.shape_cast %284 : vector<5xf32> to vector<5x1xf32>
    %cst_109 = arith.constant 3.200000e+01 : f32
    %286 = vector.broadcast %cst_109 : f32 to vector<5x1xf32>
    %287 = arith.divf %285, %286 : vector<5x1xf32>
    %288 = vector.broadcast %280 : vector<5x1xf32> to vector<5x32xf32>
    %289 = arith.subf %276, %288 : vector<5x32xf32>
    %cst_110 = arith.constant 9.99999974E-6 : f32
    %290 = vector.broadcast %cst_110 : f32 to vector<5x1xf32>
    %291 = arith.addf %287, %290 : vector<5x1xf32>
    %292 = math.rsqrt %291 : vector<5x1xf32>
    %293 = vector.broadcast %292 : vector<5x1xf32> to vector<5x32xf32>
    %294 = arith.mulf %289, %293 : vector<5x32xf32>
    %295 = arith.mulf %294, %1 : vector<5x32xf32>
    %296 = arith.addf %295, %2 : vector<5x32xf32>
    %c13_111 = arith.constant 13 : index
    %c0_112 = arith.constant 0 : index
    %297 = vector.load %arg0[%c13_111, %c0_112] : memref<16x32xf32, #tpu.memory_space<vmem>>, vector<1x8xf32>
    %cst_113 = arith.constant dense<0.000000e+00> : vector<5x96xf32>
    %298 = tpu.matmul %296, %3, %cst_113 {dimension_numbers = #tpu.dot_dimension_numbers<[1], [0], [0], [1], [0, 0, 1, 1], [], []>} : vector<5x32xf32>, vector<32x96xf32>, vector<5x96xf32> -> vector<5x96xf32>
    %299 = vector.broadcast %11 : vector<1x96xf32> to vector<5x96xf32>
    %300 = arith.addf %298, %299 : vector<5x96xf32>
    %cst_114 = arith.constant 0.000000e+00 : f32
    %301 = vector.broadcast %cst_114 : f32 to vector<5x32xf32>
    %302 = vector.extract_strided_slice %300 {offsets = [0, 0], sizes = [5, 8], strides = [1, 1]} : vector<5x96xf32> to vector<5x8xf32>
    %303 = vector.extract_strided_slice %300 {offsets = [0, 32], sizes = [5, 8], strides = [1, 1]} : vector<5x96xf32> to vector<5x8xf32>
    %304 = vector.extract_strided_slice %300 {offsets = [0, 64], sizes = [5, 8], strides = [1, 1]} : vector<5x96xf32> to vector<5x8xf32>
    %cst_115 = arith.constant dense<0.000000e+00> : vector<5x5xf32>
    %305 = tpu.matmul %302, %303, %cst_115 {dimension_numbers = #tpu.dot_dimension_numbers<[1], [1], [0], [0], [0, 0, 1, 0], [], []>} : vector<5x8xf32>, vector<5x8xf32>, vector<5x5xf32> -> vector<5x5xf32>
    %cst_116 = arith.constant 0.353553385 : f32
    %306 = vector.broadcast %cst_116 : f32 to vector<5x5xf32>
    %307 = arith.mulf %305, %306 : vector<5x5xf32>
    %308 = math.exp %307 : vector<5x5xf32>
    %cst_117 = arith.constant dense<0.000000e+00> : vector<5xf32>
    %309 = vector.multi_reduction <add>, %308, %cst_117 [1] : vector<5x5xf32> to vector<5xf32>
    %310 = vector.shape_cast %309 : vector<5xf32> to vector<5x1xf32>
    %311 = tpu.reciprocal %310 {approx = true} : vector<5x1xf32> -> vector<5x1xf32>
    %312 = vector.broadcast %311 : vector<5x1xf32> to vector<5x5xf32>
    %313 = arith.mulf %308, %312 : vector<5x5xf32>
    %cst_118 = arith.constant dense<0.000000e+00> : vector<5x8xf32>
    %314 = tpu.matmul %313, %304, %cst_118 {dimension_numbers = #tpu.dot_dimension_numbers<[1], [0], [0], [1], [0, 0, 1, 1], [], []>} : vector<5x5xf32>, vector<5x8xf32>, vector<5x8xf32> -> vector<5x8xf32>
    %315 = vector.extract_strided_slice %4 {offsets = [0, 0], sizes = [8, 32], strides = [1, 1]} : vector<32x32xf32> to vector<8x32xf32>
    %cst_119 = arith.constant dense<0.000000e+00> : vector<5x32xf32>
    %316 = tpu.matmul %314, %315, %cst_119 {dimension_numbers = #tpu.dot_dimension_numbers<[1], [0], [0], [1], [0, 0, 1, 1], [], []>} : vector<5x8xf32>, vector<8x32xf32>, vector<5x32xf32> -> vector<5x32xf32>
    %317 = arith.addf %301, %316 : vector<5x32xf32>
    %318 = vector.extract_strided_slice %300 {offsets = [0, 8], sizes = [5, 8], strides = [1, 1]} : vector<5x96xf32> to vector<5x8xf32>
    %319 = vector.extract_strided_slice %300 {offsets = [0, 40], sizes = [5, 8], strides = [1, 1]} : vector<5x96xf32> to vector<5x8xf32>
    %320 = vector.extract_strided_slice %300 {offsets = [0, 72], sizes = [5, 8], strides = [1, 1]} : vector<5x96xf32> to vector<5x8xf32>
    %cst_120 = arith.constant dense<0.000000e+00> : vector<5x5xf32>
    %321 = tpu.matmul %318, %319, %cst_120 {dimension_numbers = #tpu.dot_dimension_numbers<[1], [1], [0], [0], [0, 0, 1, 0], [], []>} : vector<5x8xf32>, vector<5x8xf32>, vector<5x5xf32> -> vector<5x5xf32>
    %cst_121 = arith.constant 0.353553385 : f32
    %322 = vector.broadcast %cst_121 : f32 to vector<5x5xf32>
    %323 = arith.mulf %321, %322 : vector<5x5xf32>
    %324 = math.exp %323 : vector<5x5xf32>
    %cst_122 = arith.constant dense<0.000000e+00> : vector<5xf32>
    %325 = vector.multi_reduction <add>, %324, %cst_122 [1] : vector<5x5xf32> to vector<5xf32>
    %326 = vector.shape_cast %325 : vector<5xf32> to vector<5x1xf32>
    %327 = tpu.reciprocal %326 {approx = true} : vector<5x1xf32> -> vector<5x1xf32>
    %328 = vector.broadcast %327 : vector<5x1xf32> to vector<5x5xf32>
    %329 = arith.mulf %324, %328 : vector<5x5xf32>
    %cst_123 = arith.constant dense<0.000000e+00> : vector<5x8xf32>
    %330 = tpu.matmul %329, %320, %cst_123 {dimension_numbers = #tpu.dot_dimension_numbers<[1], [0], [0], [1], [0, 0, 1, 1], [], []>} : vector<5x5xf32>, vector<5x8xf32>, vector<5x8xf32> -> vector<5x8xf32>
    %331 = vector.extract_strided_slice %4 {offsets = [8, 0], sizes = [8, 32], strides = [1, 1]} : vector<32x32xf32> to vector<8x32xf32>
    %cst_124 = arith.constant dense<0.000000e+00> : vector<5x32xf32>
    %332 = tpu.matmul %330, %331, %cst_124 {dimension_numbers = #tpu.dot_dimension_numbers<[1], [0], [0], [1], [0, 0, 1, 1], [], []>} : vector<5x8xf32>, vector<8x32xf32>, vector<5x32xf32> -> vector<5x32xf32>
    %333 = arith.addf %317, %332 : vector<5x32xf32>
    %334 = vector.extract_strided_slice %300 {offsets = [0, 16], sizes = [5, 8], strides = [1, 1]} : vector<5x96xf32> to vector<5x8xf32>
    %335 = vector.extract_strided_slice %300 {offsets = [0, 48], sizes = [5, 8], strides = [1, 1]} : vector<5x96xf32> to vector<5x8xf32>
    %336 = vector.extract_strided_slice %300 {offsets = [0, 80], sizes = [5, 8], strides = [1, 1]} : vector<5x96xf32> to vector<5x8xf32>
    %cst_125 = arith.constant dense<0.000000e+00> : vector<5x5xf32>
    %337 = tpu.matmul %334, %335, %cst_125 {dimension_numbers = #tpu.dot_dimension_numbers<[1], [1], [0], [0], [0, 0, 1, 0], [], []>} : vector<5x8xf32>, vector<5x8xf32>, vector<5x5xf32> -> vector<5x5xf32>
    %cst_126 = arith.constant 0.353553385 : f32
    %338 = vector.broadcast %cst_126 : f32 to vector<5x5xf32>
    %339 = arith.mulf %337, %338 : vector<5x5xf32>
    %340 = math.exp %339 : vector<5x5xf32>
    %cst_127 = arith.constant dense<0.000000e+00> : vector<5xf32>
    %341 = vector.multi_reduction <add>, %340, %cst_127 [1] : vector<5x5xf32> to vector<5xf32>
    %342 = vector.shape_cast %341 : vector<5xf32> to vector<5x1xf32>
    %343 = tpu.reciprocal %342 {approx = true} : vector<5x1xf32> -> vector<5x1xf32>
    %344 = vector.broadcast %343 : vector<5x1xf32> to vector<5x5xf32>
    %345 = arith.mulf %340, %344 : vector<5x5xf32>
    %cst_128 = arith.constant dense<0.000000e+00> : vector<5x8xf32>
    %346 = tpu.matmul %345, %336, %cst_128 {dimension_numbers = #tpu.dot_dimension_numbers<[1], [0], [0], [1], [0, 0, 1, 1], [], []>} : vector<5x5xf32>, vector<5x8xf32>, vector<5x8xf32> -> vector<5x8xf32>
    %347 = vector.extract_strided_slice %4 {offsets = [16, 0], sizes = [8, 32], strides = [1, 1]} : vector<32x32xf32> to vector<8x32xf32>
    %cst_129 = arith.constant dense<0.000000e+00> : vector<5x32xf32>
    %348 = tpu.matmul %346, %347, %cst_129 {dimension_numbers = #tpu.dot_dimension_numbers<[1], [0], [0], [1], [0, 0, 1, 1], [], []>} : vector<5x8xf32>, vector<8x32xf32>, vector<5x32xf32> -> vector<5x32xf32>
    %349 = arith.addf %333, %348 : vector<5x32xf32>
    %350 = vector.extract_strided_slice %300 {offsets = [0, 24], sizes = [5, 8], strides = [1, 1]} : vector<5x96xf32> to vector<5x8xf32>
    %351 = vector.extract_strided_slice %300 {offsets = [0, 56], sizes = [5, 8], strides = [1, 1]} : vector<5x96xf32> to vector<5x8xf32>
    %352 = vector.extract_strided_slice %300 {offsets = [0, 88], sizes = [5, 8], strides = [1, 1]} : vector<5x96xf32> to vector<5x8xf32>
    %cst_130 = arith.constant dense<0.000000e+00> : vector<5x5xf32>
    %353 = tpu.matmul %350, %351, %cst_130 {dimension_numbers = #tpu.dot_dimension_numbers<[1], [1], [0], [0], [0, 0, 1, 0], [], []>} : vector<5x8xf32>, vector<5x8xf32>, vector<5x5xf32> -> vector<5x5xf32>
    %cst_131 = arith.constant 0.353553385 : f32
    %354 = vector.broadcast %cst_131 : f32 to vector<5x5xf32>
    %355 = arith.mulf %353, %354 : vector<5x5xf32>
    %356 = math.exp %355 : vector<5x5xf32>
    %cst_132 = arith.constant dense<0.000000e+00> : vector<5xf32>
    %357 = vector.multi_reduction <add>, %356, %cst_132 [1] : vector<5x5xf32> to vector<5xf32>
    %358 = vector.shape_cast %357 : vector<5xf32> to vector<5x1xf32>
    %359 = tpu.reciprocal %358 {approx = true} : vector<5x1xf32> -> vector<5x1xf32>
    %360 = vector.broadcast %359 : vector<5x1xf32> to vector<5x5xf32>
    %361 = arith.mulf %356, %360 : vector<5x5xf32>
    %cst_133 = arith.constant dense<0.000000e+00> : vector<5x8xf32>
    %362 = tpu.matmul %361, %352, %cst_133 {dimension_numbers = #tpu.dot_dimension_numbers<[1], [0], [0], [1], [0, 0, 1, 1], [], []>} : vector<5x5xf32>, vector<5x8xf32>, vector<5x8xf32> -> vector<5x8xf32>
    %363 = vector.extract_strided_slice %4 {offsets = [24, 0], sizes = [8, 32], strides = [1, 1]} : vector<32x32xf32> to vector<8x32xf32>
    %cst_134 = arith.constant dense<0.000000e+00> : vector<5x32xf32>
    %364 = tpu.matmul %362, %363, %cst_134 {dimension_numbers = #tpu.dot_dimension_numbers<[1], [0], [0], [1], [0, 0, 1, 1], [], []>} : vector<5x8xf32>, vector<8x32xf32>, vector<5x32xf32> -> vector<5x32xf32>
    %365 = arith.addf %349, %364 : vector<5x32xf32>
    %366 = vector.broadcast %12 : vector<1x32xf32> to vector<5x32xf32>
    %367 = arith.addf %365, %366 : vector<5x32xf32>
    %368 = math.tanh %367 : vector<5x32xf32>
    %cst_135 = arith.constant dense<0.000000e+00> : vector<5xf32>
    %369 = vector.multi_reduction <add>, %368, %cst_135 [1] : vector<5x32xf32> to vector<5xf32>
    %370 = vector.shape_cast %369 : vector<5xf32> to vector<5x1xf32>
    %cst_136 = arith.constant 3.200000e+01 : f32
    %371 = vector.broadcast %cst_136 : f32 to vector<5x1xf32>
    %372 = arith.divf %370, %371 : vector<5x1xf32>
    %373 = vector.broadcast %372 : vector<5x1xf32> to vector<5x32xf32>
    %374 = arith.subf %368, %373 : vector<5x32xf32>
    %375 = arith.mulf %374, %374 : vector<5x32xf32>
    %cst_137 = arith.constant dense<0.000000e+00> : vector<5xf32>
    %376 = vector.multi_reduction <add>, %375, %cst_137 [1] : vector<5x32xf32> to vector<5xf32>
    %377 = vector.shape_cast %376 : vector<5xf32> to vector<5x1xf32>
    %cst_138 = arith.constant 3.200000e+01 : f32
    %378 = vector.broadcast %cst_138 : f32 to vector<5x1xf32>
    %379 = arith.divf %377, %378 : vector<5x1xf32>
    %380 = vector.broadcast %372 : vector<5x1xf32> to vector<5x32xf32>
    %381 = arith.subf %368, %380 : vector<5x32xf32>
    %cst_139 = arith.constant 9.99999974E-6 : f32
    %382 = vector.broadcast %cst_139 : f32 to vector<5x1xf32>
    %383 = arith.addf %379, %382 : vector<5x1xf32>
    %384 = math.rsqrt %383 : vector<5x1xf32>
    %385 = vector.broadcast %384 : vector<5x1xf32> to vector<5x32xf32>
    %386 = arith.mulf %381, %385 : vector<5x32xf32>
    %387 = vector.broadcast %13 : vector<1x32xf32> to vector<5x32xf32>
    %388 = arith.mulf %386, %387 : vector<5x32xf32>
    %389 = vector.broadcast %14 : vector<1x32xf32> to vector<5x32xf32>
    %390 = arith.addf %388, %389 : vector<5x32xf32>
    %391 = arith.addf %390, %296 : vector<5x32xf32>
    %cst_140 = arith.constant dense<0.000000e+00> : vector<32xf32>
    %392 = vector.multi_reduction <add>, %391, %cst_140 [0] : vector<5x32xf32> to vector<32xf32>
    %393 = vector.shape_cast %392 : vector<32xf32> to vector<1x32xf32>
    %cst_141 = arith.constant 5.000000e+00 : f32
    %394 = vector.broadcast %cst_141 : f32 to vector<1x32xf32>
    %395 = arith.divf %393, %394 : vector<1x32xf32>
    %cst_142 = arith.constant dense<0.000000e+00> : vector<1x32xf32>
    %396 = tpu.matmul %395, %5, %cst_142 {dimension_numbers = #tpu.dot_dimension_numbers<[1], [0], [0], [1], [0, 0, 1, 1], [], []>} : vector<1x32xf32>, vector<32x32xf32>, vector<1x32xf32> -> vector<1x32xf32>
    %cst_143 = arith.constant dense<0.000000e+00> : vector<1x32xf32>
    %397 = tpu.matmul %297, %6, %cst_143 {dimension_numbers = #tpu.dot_dimension_numbers<[1], [0], [0], [1], [0, 0, 1, 1], [], []>} : vector<1x8xf32>, vector<8x32xf32>, vector<1x32xf32> -> vector<1x32xf32>
    %398 = arith.addf %396, %397 : vector<1x32xf32>
    %399 = arith.addf %398, %15 : vector<1x32xf32>
    %400 = math.tanh %399 : vector<1x32xf32>
    %cst_144 = arith.constant dense<0.000000e+00> : vector<1xf32>
    %401 = vector.multi_reduction <add>, %400, %cst_144 [1] : vector<1x32xf32> to vector<1xf32>
    %402 = vector.shape_cast %401 : vector<1xf32> to vector<1x1xf32>
    %cst_145 = arith.constant 3.200000e+01 : f32
    %403 = vector.broadcast %cst_145 : f32 to vector<1x1xf32>
    %404 = arith.divf %402, %403 : vector<1x1xf32>
    %405 = vector.broadcast %404 : vector<1x1xf32> to vector<1x32xf32>
    %406 = arith.subf %400, %405 : vector<1x32xf32>
    %407 = arith.mulf %406, %406 : vector<1x32xf32>
    %cst_146 = arith.constant dense<0.000000e+00> : vector<1xf32>
    %408 = vector.multi_reduction <add>, %407, %cst_146 [1] : vector<1x32xf32> to vector<1xf32>
    %409 = vector.shape_cast %408 : vector<1xf32> to vector<1x1xf32>
    %cst_147 = arith.constant 3.200000e+01 : f32
    %410 = vector.broadcast %cst_147 : f32 to vector<1x1xf32>
    %411 = arith.divf %409, %410 : vector<1x1xf32>
    %412 = vector.broadcast %404 : vector<1x1xf32> to vector<1x32xf32>
    %413 = arith.subf %400, %412 : vector<1x32xf32>
    %cst_148 = arith.constant 9.99999974E-6 : f32
    %414 = vector.broadcast %cst_148 : f32 to vector<1x1xf32>
    %415 = arith.addf %411, %414 : vector<1x1xf32>
    %416 = math.rsqrt %415 : vector<1x1xf32>
    %417 = vector.broadcast %416 : vector<1x1xf32> to vector<1x32xf32>
    %418 = arith.mulf %413, %417 : vector<1x32xf32>
    %419 = arith.mulf %418, %16 : vector<1x32xf32>
    %420 = arith.addf %419, %17 : vector<1x32xf32>
    %cst_149 = arith.constant dense<0.000000e+00> : vector<1x64xf32>
    %421 = tpu.matmul %420, %7, %cst_149 {dimension_numbers = #tpu.dot_dimension_numbers<[1], [0], [0], [1], [0, 0, 1, 1], [], []>} : vector<1x32xf32>, vector<32x64xf32>, vector<1x64xf32> -> vector<1x64xf32>
    %422 = arith.addf %421, %18 : vector<1x64xf32>
    %423 = math.tanh %422 : vector<1x64xf32>
    %424 = vector.extract_strided_slice %423 {offsets = [0, 0], sizes = [1, 32], strides = [1, 1]} : vector<1x64xf32> to vector<1x32xf32>
    %425 = vector.extract_strided_slice %19 {offsets = [0, 0], sizes = [1, 32], strides = [1, 1]} : vector<1x64xf32> to vector<1x32xf32>
    %426 = vector.extract_strided_slice %20 {offsets = [0, 0], sizes = [1, 32], strides = [1, 1]} : vector<1x64xf32> to vector<1x32xf32>
    %cst_150 = arith.constant dense<0.000000e+00> : vector<1xf32>
    %427 = vector.multi_reduction <add>, %424, %cst_150 [1] : vector<1x32xf32> to vector<1xf32>
    %428 = vector.shape_cast %427 : vector<1xf32> to vector<1x1xf32>
    %cst_151 = arith.constant 3.200000e+01 : f32
    %429 = vector.broadcast %cst_151 : f32 to vector<1x1xf32>
    %430 = arith.divf %428, %429 : vector<1x1xf32>
    %431 = vector.broadcast %430 : vector<1x1xf32> to vector<1x32xf32>
    %432 = arith.subf %424, %431 : vector<1x32xf32>
    %433 = arith.mulf %432, %432 : vector<1x32xf32>
    %cst_152 = arith.constant dense<0.000000e+00> : vector<1xf32>
    %434 = vector.multi_reduction <add>, %433, %cst_152 [1] : vector<1x32xf32> to vector<1xf32>
    %435 = vector.shape_cast %434 : vector<1xf32> to vector<1x1xf32>
    %cst_153 = arith.constant 3.200000e+01 : f32
    %436 = vector.broadcast %cst_153 : f32 to vector<1x1xf32>
    %437 = arith.divf %435, %436 : vector<1x1xf32>
    %438 = vector.broadcast %430 : vector<1x1xf32> to vector<1x32xf32>
    %439 = arith.subf %424, %438 : vector<1x32xf32>
    %cst_154 = arith.constant 9.99999974E-6 : f32
    %440 = vector.broadcast %cst_154 : f32 to vector<1x1xf32>
    %441 = arith.addf %437, %440 : vector<1x1xf32>
    %442 = math.rsqrt %441 : vector<1x1xf32>
    %443 = vector.broadcast %442 : vector<1x1xf32> to vector<1x32xf32>
    %444 = arith.mulf %439, %443 : vector<1x32xf32>
    %445 = arith.mulf %444, %425 : vector<1x32xf32>
    %446 = arith.addf %445, %426 : vector<1x32xf32>
    %447 = vector.extract_strided_slice %423 {offsets = [0, 32], sizes = [1, 32], strides = [1, 1]} : vector<1x64xf32> to vector<1x32xf32>
    %448 = vector.extract_strided_slice %19 {offsets = [0, 32], sizes = [1, 32], strides = [1, 1]} : vector<1x64xf32> to vector<1x32xf32>
    %449 = vector.extract_strided_slice %20 {offsets = [0, 32], sizes = [1, 32], strides = [1, 1]} : vector<1x64xf32> to vector<1x32xf32>
    %cst_155 = arith.constant dense<0.000000e+00> : vector<1xf32>
    %450 = vector.multi_reduction <add>, %447, %cst_155 [1] : vector<1x32xf32> to vector<1xf32>
    %451 = vector.shape_cast %450 : vector<1xf32> to vector<1x1xf32>
    %cst_156 = arith.constant 3.200000e+01 : f32
    %452 = vector.broadcast %cst_156 : f32 to vector<1x1xf32>
    %453 = arith.divf %451, %452 : vector<1x1xf32>
    %454 = vector.broadcast %453 : vector<1x1xf32> to vector<1x32xf32>
    %455 = arith.subf %447, %454 : vector<1x32xf32>
    %456 = arith.mulf %455, %455 : vector<1x32xf32>
    %cst_157 = arith.constant dense<0.000000e+00> : vector<1xf32>
    %457 = vector.multi_reduction <add>, %456, %cst_157 [1] : vector<1x32xf32> to vector<1xf32>
    %458 = vector.shape_cast %457 : vector<1xf32> to vector<1x1xf32>
    %cst_158 = arith.constant 3.200000e+01 : f32
    %459 = vector.broadcast %cst_158 : f32 to vector<1x1xf32>
    %460 = arith.divf %458, %459 : vector<1x1xf32>
    %461 = vector.broadcast %453 : vector<1x1xf32> to vector<1x32xf32>
    %462 = arith.subf %447, %461 : vector<1x32xf32>
    %cst_159 = arith.constant 9.99999974E-6 : f32
    %463 = vector.broadcast %cst_159 : f32 to vector<1x1xf32>
    %464 = arith.addf %460, %463 : vector<1x1xf32>
    %465 = math.rsqrt %464 : vector<1x1xf32>
    %466 = vector.broadcast %465 : vector<1x1xf32> to vector<1x32xf32>
    %467 = arith.mulf %462, %466 : vector<1x32xf32>
    %468 = arith.mulf %467, %448 : vector<1x32xf32>
    %469 = arith.addf %468, %449 : vector<1x32xf32>
    %cst_160 = arith.constant dense<0.000000e+00> : vector<1x32xf32>
    %470 = tpu.matmul %446, %8, %cst_160 {dimension_numbers = #tpu.dot_dimension_numbers<[1], [0], [0], [1], [0, 0, 1, 1], [], []>} : vector<1x32xf32>, vector<32x32xf32>, vector<1x32xf32> -> vector<1x32xf32>
    %471 = arith.addf %470, %21 : vector<1x32xf32>
    %472 = math.tanh %471 : vector<1x32xf32>
    %cst_161 = arith.constant dense<0.000000e+00> : vector<1xf32>
    %473 = vector.multi_reduction <add>, %472, %cst_161 [1] : vector<1x32xf32> to vector<1xf32>
    %474 = vector.shape_cast %473 : vector<1xf32> to vector<1x1xf32>
    %cst_162 = arith.constant 3.200000e+01 : f32
    %475 = vector.broadcast %cst_162 : f32 to vector<1x1xf32>
    %476 = arith.divf %474, %475 : vector<1x1xf32>
    %477 = vector.broadcast %476 : vector<1x1xf32> to vector<1x32xf32>
    %478 = arith.subf %472, %477 : vector<1x32xf32>
    %479 = arith.mulf %478, %478 : vector<1x32xf32>
    %cst_163 = arith.constant dense<0.000000e+00> : vector<1xf32>
    %480 = vector.multi_reduction <add>, %479, %cst_163 [1] : vector<1x32xf32> to vector<1xf32>
    %481 = vector.shape_cast %480 : vector<1xf32> to vector<1x1xf32>
    %cst_164 = arith.constant 3.200000e+01 : f32
    %482 = vector.broadcast %cst_164 : f32 to vector<1x1xf32>
    %483 = arith.divf %481, %482 : vector<1x1xf32>
    %484 = vector.broadcast %476 : vector<1x1xf32> to vector<1x32xf32>
    %485 = arith.subf %472, %484 : vector<1x32xf32>
    %cst_165 = arith.constant 9.99999974E-6 : f32
    %486 = vector.broadcast %cst_165 : f32 to vector<1x1xf32>
    %487 = arith.addf %483, %486 : vector<1x1xf32>
    %488 = math.rsqrt %487 : vector<1x1xf32>
    %489 = vector.broadcast %488 : vector<1x1xf32> to vector<1x32xf32>
    %490 = arith.mulf %485, %489 : vector<1x32xf32>
    %491 = arith.mulf %490, %22 : vector<1x32xf32>
    %492 = arith.addf %491, %23 : vector<1x32xf32>
    %cst_166 = arith.constant dense<0.000000e+00> : vector<1x32xf32>
    %493 = tpu.matmul %469, %9, %cst_166 {dimension_numbers = #tpu.dot_dimension_numbers<[1], [0], [0], [1], [0, 0, 1, 1], [], []>} : vector<1x32xf32>, vector<32x32xf32>, vector<1x32xf32> -> vector<1x32xf32>
    %494 = arith.addf %493, %24 : vector<1x32xf32>
    %495 = math.tanh %494 : vector<1x32xf32>
    %cst_167 = arith.constant dense<0.000000e+00> : vector<1xf32>
    %496 = vector.multi_reduction <add>, %495, %cst_167 [1] : vector<1x32xf32> to vector<1xf32>
    %497 = vector.shape_cast %496 : vector<1xf32> to vector<1x1xf32>
    %cst_168 = arith.constant 3.200000e+01 : f32
    %498 = vector.broadcast %cst_168 : f32 to vector<1x1xf32>
    %499 = arith.divf %497, %498 : vector<1x1xf32>
    %500 = vector.broadcast %499 : vector<1x1xf32> to vector<1x32xf32>
    %501 = arith.subf %495, %500 : vector<1x32xf32>
    %502 = arith.mulf %501, %501 : vector<1x32xf32>
    %cst_169 = arith.constant dense<0.000000e+00> : vector<1xf32>
    %503 = vector.multi_reduction <add>, %502, %cst_169 [1] : vector<1x32xf32> to vector<1xf32>
    %504 = vector.shape_cast %503 : vector<1xf32> to vector<1x1xf32>
    %cst_170 = arith.constant 3.200000e+01 : f32
    %505 = vector.broadcast %cst_170 : f32 to vector<1x1xf32>
    %506 = arith.divf %504, %505 : vector<1x1xf32>
    %507 = vector.broadcast %499 : vector<1x1xf32> to vector<1x32xf32>
    %508 = arith.subf %495, %507 : vector<1x32xf32>
    %cst_171 = arith.constant 9.99999974E-6 : f32
    %509 = vector.broadcast %cst_171 : f32 to vector<1x1xf32>
    %510 = arith.addf %506, %509 : vector<1x1xf32>
    %511 = math.rsqrt %510 : vector<1x1xf32>
    %512 = vector.broadcast %511 : vector<1x1xf32> to vector<1x32xf32>
    %513 = arith.mulf %508, %512 : vector<1x32xf32>
    %514 = arith.mulf %513, %25 : vector<1x32xf32>
    %515 = arith.addf %514, %26 : vector<1x32xf32>
    %cst_172 = arith.constant dense<0.000000e+00> : vector<1x1xf32>
    %516 = tpu.matmul %492, %10, %cst_172 {dimension_numbers = #tpu.dot_dimension_numbers<[1], [0], [0], [1], [0, 0, 1, 1], [], []>} : vector<1x32xf32>, vector<32x1xf32>, vector<1x1xf32> -> vector<1x1xf32>
    %517 = arith.addf %516, %27 : vector<1x1xf32>
    %c1_173 = arith.constant 1 : index
    %c0_174 = arith.constant 0 : index
    %518 = vector.load %arg4[%c1_173, %c0_174] : memref<2x33xf32, #tpu.memory_space<vmem>>, vector<1x32xf32>
    tpu.vector_store %arg4[%c1_173, %c0_174], %515 {strides = array<i32>} : memref<2x33xf32, #tpu.memory_space<vmem>>, vector<1x32xf32>,
    %c1_175 = arith.constant 1 : index
    %c32_176 = arith.constant 32 : index
    %519 = vector.load %arg4[%c1_175, %c32_176] : memref<2x33xf32, #tpu.memory_space<vmem>>, vector<1x1xf32>
    tpu.vector_store %arg4[%c1_175, %c32_176], %517 {strides = array<i32>} : memref<2x33xf32, #tpu.memory_space<vmem>>, vector<1x1xf32>,
    return
  }
}

</mosaic_0001>

<llo_original>
// kernel: forward.1
$region0: #{forward.1}
  #allocation0 [shape = 'u32[]', space=smem, size = 0x4, offset = 0x4, fixed_abs, tag = 'smem constant byte address 0x4 - core index']
  #allocation1 [shape = 'u32[144,128]{1,0:T(1,128)}', space=vmem, size = 0x12000, scoped, tag = 'internal scratch']
  %s0 = inlined_call_operand.vmem [shape: f32[16,32], index: 0, kind: input, shape index: {}]
  %s1 = inlined_call_operand.vmem [shape: f32[24,32], index: 1, kind: input, shape index: {}]
  %s2 = inlined_call_operand.vmem [shape: f32[232,96], index: 2, kind: input, shape index: {}]
  %s3 = inlined_call_operand.vmem [shape: f32[17,96], index: 3, kind: input, shape index: {}]
  %s4 = inlined_call_operand.vmem [shape: f32[2,33], index: 4, kind: output, shape index: {}]
  %s5 = sld [smem:[#allocation0]]
  $region26: #{forward.1} parent=0
    _
  %s7 = ssub.s32 1, %s5
  %s8 = scalar_select 0, %s7, %s5
  // Predicated region
  $region2: #{forward.1} parent=0 // pred_check
    _
  $region3: #{forward.1} parent=0 // pred_check_branch
    %10 = sbr.rel (0) target = $region5
  $region4: #{forward.1} parent=0 // pred_region
    _
  $region5: #{forward.1} parent=0 // pred_fallthru
    _
  // Predicated region
  $region6: #{forward.1} parent=0 // pred_check
    _
  $region7: #{forward.1} parent=0 // pred_check_branch
    %12 = sbr.rel (0) target = $region9
  $region8: #{forward.1} parent=0 // pred_region
    _
  $region9: #{forward.1} parent=0 // pred_fallthru
    _
  // Predicated region
  $region10: #{forward.1} parent=0 // pred_check
    _
  $region11: #{forward.1} parent=0 // pred_check_branch
    %14 = sbr.rel (0) target = $region13
  $region12: #{forward.1} parent=0 // pred_region
    _
  $region13: #{forward.1} parent=0 // pred_fallthru
    _
  // Predicated region
  $region14: #{forward.1} parent=0 // pred_check
    _
  $region15: #{forward.1} parent=0 // pred_check_branch
    %16 = sbr.rel (0) target = $region17
  $region16: #{forward.1} parent=0 // pred_region
    _
  $region17: #{forward.1} parent=0 // pred_fallthru
    _
  %v17 = vld [vmem:[%s1] sm:$0x1f]
  %v18 = vld [vmem:[%s1 + $0x8] sm:$0x1f]
  %v19 = vld [vmem:[%s1 + $0x10] sm:$0x1f]
  %v20 = vld [vmem:[%s2] sm:$0xff]
  %v21 = vld [vmem:[%s2 + $0x8] sm:$0xff]
  %v22 = vld [vmem:[%s2 + $0x10] sm:$0xff]
  %v23 = vld [vmem:[%s2 + $0x18] sm:$0xff]
  %v24 = vld [vmem:[%s2 + $0x20] sm:$0xff]
  %v25 = vld [vmem:[%s2 + $0x28] sm:$0xff]
  %v26 = vld [vmem:[%s2 + $0x30] sm:$0xff]
  %v27 = vld [vmem:[%s2 + $0x38] sm:$0xff]
  %v28 = vld [vmem:[%s2 + $0x40] sm:$0xff]
  %v29 = vld [vmem:[%s2 + $0x48] sm:$0xff]
  %v30 = vld [vmem:[%s2 + $0x50] sm:$0xff]
  %v31 = vld [vmem:[%s2 + $0x58] sm:$0xff]
  %v32 = vld [vmem:[%s2 + $0x60] sm:$0xff]
  %v33 = vld [vmem:[%s2 + $0x68] sm:$0xff]
  %v34 = vld [vmem:[%s2 + $0x70] sm:$0xff]
  %v35 = vld [vmem:[%s2 + $0x78] sm:$0xff]
  %v36 = vld [vmem:[%s2 + $0x80] sm:$0xff]
  %v37 = vld [vmem:[%s2 + $0x88] sm:$0xff]
  %v38 = vld [vmem:[%s2 + $0x90] sm:$0xff]
  %v39 = vld [vmem:[%s2 + $0x98] sm:$0xff]
  %v40 = vld [vmem:[%s2 + $0xa0] sm:$0xff]
  %v41 = vld [vmem:[%s2 + $0xa8] sm:$0xff]
  %v42 = vld [vmem:[%s2 + $0xb0] sm:$0xff]
  %v43 = vld [vmem:[%s2 + $0xb8] sm:$0xff]
  %v44 = vld [vmem:[%s2 + $0xc0] sm:$0xff]
  %v45 = vld [vmem:[%s2 + $0xc8] sm:$0xff]
  %v46 = vld [vmem:[%s2 + $0xd0] sm:$0xff]
  %v47 = vld [vmem:[%s2 + $0xd8] sm:$0xff]
  %v48 = vld [vmem:[%s2 + $0xe0] sm:$0xff]
  %v49 = vld [vmem:[%s3] sm:$0x1]
  %v50 = vld [vmem:[%s3 + $0x1] sm:$0x1]
  %v51 = vld [vmem:[%s3 + $0x2] sm:$0x1]
  %v52 = vld [vmem:[%s3 + $0x3] sm:$0x1]
  %v53 = vld [vmem:[%s3 + $0x4] sm:$0x1]
  %v54 = vld [vmem:[%s3 + $0x5] sm:$0x1]
  %v55 = vld [vmem:[%s3 + $0x6] sm:$0x1]
  %v56 = vld [vmem:[%s3 + $0x7] sm:$0x1]
  %v57 = vld [vmem:[%s3 + $0x8] sm:$0x1]
  %v58 = vld [vmem:[%s3 + $0x9] sm:$0x1]
  %v59 = vld [vmem:[%s3 + $0xa] sm:$0x1]
  %v60 = vld [vmem:[%s3 + $0xb] sm:$0x1]
  %v61 = vld [vmem:[%s3 + $0xc] sm:$0x1]
  %v62 = vld [vmem:[%s3 + $0xd] sm:$0x1]
  %v63 = vld [vmem:[%s3 + $0xe] sm:$0x1]
  %v64 = vld [vmem:[%s3 + $0xf] sm:$0x1]
  %v65 = vld [vmem:[%s3 + $0x10] sm:$0x1]
  %v66 = vld [vmem:[%s0] sm:$0x1f]
  %v67 = vadd.f32 %v66, %v17
  %v68 = vtanh.pop %v67
  %vm69 = vcmask 258048
  %v70 = vsel %vm69, %v68, 0.0
  %71 = vadd.xlane.f32.xlu0 %v70
  %v72 = vpop.xlane.xlu0 %71
  %v73 = vrcp.pop 32.0
  %v74 = vmul.f32 %v72, %v73
  %v75 = vsub.f32 %v68, %v74
  %v76 = vmul.f32 %v75, %v75
  %v77 = vsel %vm69, %v76, 0.0
  %78 = vadd.xlane.f32.xlu0 %v77
  %v79 = vpop.xlane.xlu0 %78
  %v80 = vmul.f32 %v79, %v73
  %v81 = vadd.f32 %v80, 1e-05
  %v82 = vrsqrt.pop %v81
  %v83 = vmul.f32 %v75, %v82
  %v84 = vmul.f32 %v83, %v18
  %v85 = vadd.f32 %v84, %v19
  %v86 = vld [vmem:[%s0 + $0x5] sm:$0x1]
  %v87 = vlaneseq
  %v88 = vshrl.u32 %v87, 7
  %v89 = vsub.s32 0, %v88
  %v90 = vrot.slane %v49, %v89
  %vm91 = vcmask 261120
  %v93 = vsel %vm91, %v85, 0
  %95 = vmatprep.subr.mxu0 0.0
  %96 = vmatpush1.msra.mxu0 %v20
  %97 = vmatprep.subr.mxu0 0.0
  %98 = vmatpush1.msra.mxu0 %v21
  %99 = vmatprep.subr.mxu0 0.0
  %100 = vmatpush1.msra.mxu0 %v22
  %101 = vmatprep.subr.mxu0 0.0
  %102 = vmatpush1.msra.mxu0 %v23
  %103 = vmatprep.subr.mxu0 0.0
  %104 = vmatpush1.msra.mxu0 0.0
  %105 = vmatprep.subr.mxu0 0.0
  %106 = vmatpush1.msra.mxu0 0.0
  %107 = vmatprep.subr.mxu0 0.0
  %108 = vmatpush1.msra.mxu0 0.0
  %109 = vmatprep.subr.mxu0 0.0
  %110 = vmatpush1.msra.mxu0 0.0
  %111 = vmatprep.subr.mxu0 0.0
  %112 = vmatpush1.msra.mxu0 0.0
  %113 = vmatprep.subr.mxu0 0.0
  %114 = vmatpush1.msra.mxu0 0.0
  %115 = vmatprep.subr.mxu0 0.0
  %116 = vmatpush1.msra.mxu0 0.0
  %117 = vmatprep.subr.mxu0 0.0
  %118 = vmatpush1.msra.mxu0 0.0
  %119 = vmatprep.subr.mxu0 0.0
  %120 = vmatpush1.msra.mxu0 0.0
  %121 = vmatprep.subr.mxu0 0.0
  %122 = vmatpush1.msra.mxu0 0.0
  %123 = vmatprep.subr.mxu0 0.0
  %124 = vmatpush1.msra.mxu0 0.0
  %125 = vmatprep.subr.mxu0 0.0
  %126 = vmatpush1.msra.mxu0 0.0
  %127 = vmatprep.subr.mxu0 0.0
  %128 = vmatpush1.msra.mxu0 0.0
  %129 = vmatprep.subr.mxu0 0.0
  %130 = vmatpush1.msra.mxu0 0.0
  %131 = vmatprep.subr.mxu0 0.0
  %132 = vmatpush1.msra.mxu0 0.0
  %133 = vmatprep.subr.mxu0 0.0
  %134 = vmatpush1.msra.mxu0 0.0
  %135 = vmatprep.subr.mxu0 0.0
  %136 = vmatpush1.msra.mxu0 0.0
  %137 = vmatprep.subr.mxu0 0.0
  %138 = vmatpush1.msra.mxu0 0.0
  %139 = vmatprep.subr.mxu0 0.0
  %140 = vmatpush1.msra.mxu0 0.0
  %141 = vmatprep.subr.mxu0 0.0
  %142 = vmatpush1.msra.mxu0 0.0
  %143 = vmatprep.subr.mxu0 0.0
  %144 = vmatpush1.msra.mxu0 0.0
  %145 = vmatprep.subr.mxu0 0.0
  %146 = vmatpush1.msra.mxu0 0.0
  %147 = vmatprep.subr.mxu0 0.0
  %148 = vmatpush1.msra.mxu0 0.0
  %149 = vmatprep.subr.mxu0 0.0
  %150 = vmatpush1.msra.mxu0 0.0
  %151 = vmatprep.subr.mxu0 0.0
  %152 = vmatpush1.msra.mxu0 0.0
  %153 = vmatprep.subr.mxu0 0.0
  %154 = vmatpush1.msra.mxu0 0.0
  %155 = vmatprep.subr.mxu0 0.0
  %156 = vmatpush1.msra.mxu0 0.0
  %157 = vmatprep.subr.mxu0 0.0
  %158 = vmatpush1.msra.mxu0 0.0
  %159 = vmatprep.mubr.f32.mxu0 0.0
  %160 = vmatmul.mubr.f32.gmra.mrb[0].mxu0 %v93
  %v161 = vpop.f32.mrb[0].mxu0
  %v162 = vadd.f32 %v90, %v161
  %v163 = vpop.f32.mrb[0].mxu0
  %164 = vdwg.mxu0
  %166 = vrot.lane.b32.xlu0 %v162, 96
  %v167 = vpop.permute.xlu0 %166
  %vm168 = vcmask 64512
  %v169 = vsel %vm168, %v162, 0
  %v171 = vsel %vm168, %v167, 0
  %173 = vmatprep.subr.mxu0 0.0
  %174 = vmatpush1.xpose.msra.mxu0 %v171
  %175 = vmatprep.subr.mxu0 0.0
  %176 = vmatpush1.xpose.msra.mxu0 0.0
  %177 = vmatprep.subr.mxu0 0.0
  %178 = vmatpush1.xpose.msra.mxu0 0.0
  %179 = vmatprep.subr.mxu0 0.0
  %180 = vmatpush1.xpose.msra.mxu0 0.0
  %181 = vmatprep.subr.mxu0 0.0
  %182 = vmatpush1.xpose.msra.mxu0 0.0
  %183 = vmatprep.subr.mxu0 0.0
  %184 = vmatpush1.xpose.msra.mxu0 0.0
  %185 = vmatprep.subr.mxu0 0.0
  %186 = vmatpush1.xpose.msra.mxu0 0.0
  %187 = vmatprep.subr.mxu0 0.0
  %188 = vmatpush1.xpose.msra.mxu0 0.0
  %189 = vmatprep.subr.mxu0 0.0
  %190 = vmatpush1.xpose.msra.mxu0 0.0
  %191 = vmatprep.subr.mxu0 0.0
  %192 = vmatpush1.xpose.msra.mxu0 0.0
  %193 = vmatprep.subr.mxu0 0.0
  %194 = vmatpush1.xpose.msra.mxu0 0.0
  %195 = vmatprep.subr.mxu0 0.0
  %196 = vmatpush1.xpose.msra.mxu0 0.0
  %197 = vmatprep.subr.mxu0 0.0
  %198 = vmatpush1.xpose.msra.mxu0 0.0
  %199 = vmatprep.subr.mxu0 0.0
  %200 = vmatpush1.xpose.msra.mxu0 0.0
  %201 = vmatprep.subr.mxu0 0.0
  %202 = vmatpush1.xpose.msra.mxu0 0.0
  %203 = vmatprep.subr.mxu0 0.0
  %204 = vmatpush1.xpose.msra.mxu0 0.0
  %205 = vmatprep.subr.mxu0 0.0
  %206 = vmatpush1.xpose.msra.mxu0 0.0
  %207 = vmatprep.subr.mxu0 0.0
  %208 = vmatpush1.xpose.msra.mxu0 0.0
  %209 = vmatprep.subr.mxu0 0.0
  %210 = vmatpush1.xpose.msra.mxu0 0.0
  %211 = vmatprep.subr.mxu0 0.0
  %212 = vmatpush1.xpose.msra.mxu0 0.0
  %213 = vmatprep.subr.mxu0 0.0
  %214 = vmatpush1.xpose.msra.mxu0 0.0
  %215 = vmatprep.subr.mxu0 0.0
  %216 = vmatpush1.xpose.msra.mxu0 0.0
  %217 = vmatprep.subr.mxu0 0.0
  %218 = vmatpush1.xpose.msra.mxu0 0.0
  %219 = vmatprep.subr.mxu0 0.0
  %220 = vmatpush1.xpose.msra.mxu0 0.0
  %221 = vmatprep.subr.mxu0 0.0
  %222 = vmatpush1.xpose.msra.mxu0 0.0
  %223 = vmatprep.subr.mxu0 0.0
  %224 = vmatpush1.xpose.msra.mxu0 0.0
  %225 = vmatprep.subr.mxu0 0.0
  %226 = vmatpush1.xpose.msra.mxu0 0.0
  %227 = vmatprep.subr.mxu0 0.0
  %228 = vmatpush1.xpose.msra.mxu0 0.0
  %229 = vmatprep.subr.mxu0 0.0
  %230 = vmatpush1.xpose.msra.mxu0 0.0
  %231 = vmatprep.subr.mxu0 0.0
  %232 = vmatpush1.xpose.msra.mxu0 0.0
  %233 = vmatprep.subr.mxu0 0.0
  %234 = vmatpush1.xpose.msra.mxu0 0.0
  %235 = vmatprep.subr.mxu0 0.0
  %236 = vmatpush1.xpose.msra.mxu0 0.0
  %237 = vmatprep.mubr.f32.mxu0 0.0
  %238 = vmatmul.mubr.f32.gmra.mrb[0].mxu0 %v169
  %v239 = vpop.f32.mrb[0].mxu0
  %v240 = vadd.f32 0.0, %v239
  %v241 = vpop.f32.mrb[0].mxu0
  %242 = vdwg.mxu0
  %v243 = vmul.f32 %v240, 0.35355338
  %v244 = vmul.f32 %v243, 1.442695
  %v245 = vpow.pop %v244
  %vm246 = vcmask 36864
  %v247 = vsel %vm246, %v245, 0.0
  %248 = vadd.xlane.f32.xlu0 %v247
  %v249 = vpop.xlane.xlu0 %248
  %v250 = vrcp.pop %v249
  %v251 = vmul.f32 %v245, %v250
  %252 = vrot.lane.b32.xlu0 %v162, 64
  %v253 = vpop.permute.xlu0 %252
  %vm254 = vcmask 39936
  %v256 = vsel %vm254, %v251, 0
  %vm258 = vcmask 1044480
  %v259 = vsel %vm258, %v253, 0
  %261 = vmatprep.subr.mxu0 0.0
  %262 = vmatpush1.msra.mxu0 %v259
  %263 = vmatprep.subr.mxu0 0.0
  %264 = vmatpush1.msra.mxu0 0.0
  %265 = vmatprep.subr.mxu0 0.0
  %266 = vmatpush1.msra.mxu0 0.0
  %267 = vmatprep.subr.mxu0 0.0
  %268 = vmatpush1.msra.mxu0 0.0
  %269 = vmatprep.subr.mxu0 0.0
  %270 = vmatpush1.msra.mxu0 0.0
  %271 = vmatprep.subr.mxu0 0.0
  %272 = vmatpush1.msra.mxu0 0.0
  %273 = vmatprep.subr.mxu0 0.0
  %274 = vmatpush1.msra.mxu0 0.0
  %275 = vmatprep.subr.mxu0 0.0
  %276 = vmatpush1.msra.mxu0 0.0
  %277 = vmatprep.subr.mxu0 0.0
  %278 = vmatpush1.msra.mxu0 0.0
  %279 = vmatprep.subr.mxu0 0.0
  %280 = vmatpush1.msra.mxu0 0.0
  %281 = vmatprep.subr.mxu0 0.0
  %282 = vmatpush1.msra.mxu0 0.0
  %283 = vmatprep.subr.mxu0 0.0
  %284 = vmatpush1.msra.mxu0 0.0
  %285 = vmatprep.subr.mxu0 0.0
  %286 = vmatpush1.msra.mxu0 0.0
  %287 = vmatprep.subr.mxu0 0.0
  %288 = vmatpush1.msra.mxu0 0.0
  %289 = vmatprep.subr.mxu0 0.0
  %290 = vmatpush1.msra.mxu0 0.0
  %291 = vmatprep.subr.mxu0 0.0
  %292 = vmatpush1.msra.mxu0 0.0
  %293 = vmatprep.subr.mxu0 0.0
  %294 = vmatpush1.msra.mxu0 0.0
  %295 = vmatprep.subr.mxu0 0.0
  %296 = vmatpush1.msra.mxu0 0.0
  %297 = vmatprep.subr.mxu0 0.0
  %298 = vmatpush1.msra.mxu0 0.0
  %299 = vmatprep.subr.mxu0 0.0
  %300 = vmatpush1.msra.mxu0 0.0
  %301 = vmatprep.subr.mxu0 0.0
  %302 = vmatpush1.msra.mxu0 0.0
  %303 = vmatprep.subr.mxu0 0.0
  %304 = vmatpush1.msra.mxu0 0.0
  %305 = vmatprep.subr.mxu0 0.0
  %306 = vmatpush1.msra.mxu0 0.0
  %307 = vmatprep.subr.mxu0 0.0
  %308 = vmatpush1.msra.mxu0 0.0
  %309 = vmatprep.subr.mxu0 0.0
  %310 = vmatpush1.msra.mxu0 0.0
  %311 = vmatprep.subr.mxu0 0.0
  %312 = vmatpush1.msra.mxu0 0.0
  %313 = vmatprep.subr.mxu0 0.0
  %314 = vmatpush1.msra.mxu0 0.0
  %315 = vmatprep.subr.mxu0 0.0
  %316 = vmatpush1.msra.mxu0 0.0
  %317 = vmatprep.subr.mxu0 0.0
  %318 = vmatpush1.msra.mxu0 0.0
  %319 = vmatprep.subr.mxu0 0.0
  %320 = vmatpush1.msra.mxu0 0.0
  %321 = vmatprep.subr.mxu0 0.0
  %322 = vmatpush1.msra.mxu0 0.0
  %323 = vmatprep.subr.mxu0 0.0
  %324 = vmatpush1.msra.mxu0 0.0
  %325 = vmatprep.mubr.f32.mxu0 0.0
  %326 = vmatmul.mubr.f32.gmra.mrb[0].mxu0 %v256
  %v327 = vpop.f32.mrb[0].mxu0
  %v328 = vadd.f32 0.0, %v327
  %v329 = vpop.f32.mrb[0].mxu0
  %330 = vdwg.mxu0
  %331 = vrot.lane.b32.xlu0 %v162, 120
  %v332 = vpop.permute.xlu0 %331
  %333 = vrot.lane.b32.xlu0 %v162, 88
  %v334 = vpop.permute.xlu0 %333
  %v335 = vsel %vm168, %v332, 0
  %v337 = vsel %vm168, %v334, 0
  %339 = vmatprep.subr.mxu0 0.0
  %340 = vmatpush1.xpose.msra.mxu0 %v337
  %341 = vmatprep.subr.mxu0 0.0
  %342 = vmatpush1.xpose.msra.mxu0 0.0
  %343 = vmatprep.subr.mxu0 0.0
  %344 = vmatpush1.xpose.msra.mxu0 0.0
  %345 = vmatprep.subr.mxu0 0.0
  %346 = vmatpush1.xpose.msra.mxu0 0.0
  %347 = vmatprep.subr.mxu0 0.0
  %348 = vmatpush1.xpose.msra.mxu0 0.0
  %349 = vmatprep.subr.mxu0 0.0
  %350 = vmatpush1.xpose.msra.mxu0 0.0
  %351 = vmatprep.subr.mxu0 0.0
  %352 = vmatpush1.xpose.msra.mxu0 0.0
  %353 = vmatprep.subr.mxu0 0.0
  %354 = vmatpush1.xpose.msra.mxu0 0.0
  %355 = vmatprep.subr.mxu0 0.0
  %356 = vmatpush1.xpose.msra.mxu0 0.0
  %357 = vmatprep.subr.mxu0 0.0
  %358 = vmatpush1.xpose.msra.mxu0 0.0
  %359 = vmatprep.subr.mxu0 0.0
  %360 = vmatpush1.xpose.msra.mxu0 0.0
  %361 = vmatprep.subr.mxu0 0.0
  %362 = vmatpush1.xpose.msra.mxu0 0.0
  %363 = vmatprep.subr.mxu0 0.0
  %364 = vmatpush1.xpose.msra.mxu0 0.0
  %365 = vmatprep.subr.mxu0 0.0
  %366 = vmatpush1.xpose.msra.mxu0 0.0
  %367 = vmatprep.subr.mxu0 0.0
  %368 = vmatpush1.xpose.msra.mxu0 0.0
  %369 = vmatprep.subr.mxu0 0.0
  %370 = vmatpush1.xpose.msra.mxu0 0.0
  %371 = vmatprep.subr.mxu0 0.0
  %372 = vmatpush1.xpose.msra.mxu0 0.0
  %373 = vmatprep.subr.mxu0 0.0
  %374 = vmatpush1.xpose.msra.mxu0 0.0
  %375 = vmatprep.subr.mxu0 0.0
  %376 = vmatpush1.xpose.msra.mxu0 0.0
  %377 = vmatprep.subr.mxu0 0.0
  %378 = vmatpush1.xpose.msra.mxu0 0.0
  %379 = vmatprep.subr.mxu0 0.0
  %380 = vmatpush1.xpose.msra.mxu0 0.0
  %381 = vmatprep.subr.mxu0 0.0
  %382 = vmatpush1.xpose.msra.mxu0 0.0
  %383 = vmatprep.subr.mxu0 0.0
  %384 = vmatpush1.xpose.msra.mxu0 0.0
  %385 = vmatprep.subr.mxu0 0.0
  %386 = vmatpush1.xpose.msra.mxu0 0.0
  %387 = vmatprep.subr.mxu0 0.0
  %388 = vmatpush1.xpose.msra.mxu0 0.0
  %389 = vmatprep.subr.mxu0 0.0
  %390 = vmatpush1.xpose.msra.mxu0 0.0
  %391 = vmatprep.subr.mxu0 0.0
  %392 = vmatpush1.xpose.msra.mxu0 0.0
  %393 = vmatprep.subr.mxu0 0.0
  %394 = vmatpush1.xpose.msra.mxu0 0.0
  %395 = vmatprep.subr.mxu0 0.0
  %396 = vmatpush1.xpose.msra.mxu0 0.0
  %397 = vmatprep.subr.mxu0 0.0
  %398 = vmatpush1.xpose.msra.mxu0 0.0
  %399 = vmatprep.subr.mxu0 0.0
  %400 = vmatpush1.xpose.msra.mxu0 0.0
  %401 = vmatprep.subr.mxu0 0.0
  %402 = vmatpush1.xpose.msra.mxu0 0.0
  %403 = vmatprep.mubr.f32.mxu0 0.0
  %404 = vmatmul.mubr.f32.gmra.mrb[0].mxu0 %v335
  %v405 = vpop.f32.mrb[0].mxu0
  %v406 = vadd.f32 0.0, %v405
  %v407 = vpop.f32.mrb[0].mxu0
  %408 = vdwg.mxu0
  %v409 = vmul.f32 %v406, 0.35355338
  %v410 = vmul.f32 %v409, 1.442695
  %v411 = vpow.pop %v410
  %v412 = vsel %vm246, %v411, 0.0
  %413 = vadd.xlane.f32.xlu0 %v412
  %v414 = vpop.xlane.xlu0 %413
  %v415 = vrcp.pop %v414
  %v416 = vmul.f32 %v411, %v415
  %417 = vrot.lane.b32.xlu0 %v162, 56
  %v418 = vpop.permute.xlu0 %417
  %v420 = vsel %vm254, %v416, 0
  %v422 = vsel %vm258, %v418, 0
  %424 = vmatprep.subr.mxu0 0.0
  %425 = vmatpush1.msra.mxu0 %v422
  %426 = vmatprep.subr.mxu0 0.0
  %427 = vmatpush1.msra.mxu0 0.0
  %428 = vmatprep.subr.mxu0 0.0
  %429 = vmatpush1.msra.mxu0 0.0
  %430 = vmatprep.subr.mxu0 0.0
  %431 = vmatpush1.msra.mxu0 0.0
  %432 = vmatprep.subr.mxu0 0.0
  %433 = vmatpush1.msra.mxu0 0.0
  %434 = vmatprep.subr.mxu0 0.0
  %435 = vmatpush1.msra.mxu0 0.0
  %436 = vmatprep.subr.mxu0 0.0
  %437 = vmatpush1.msra.mxu0 0.0
  %438 = vmatprep.subr.mxu0 0.0
  %439 = vmatpush1.msra.mxu0 0.0
  %440 = vmatprep.subr.mxu0 0.0
  %441 = vmatpush1.msra.mxu0 0.0
  %442 = vmatprep.subr.mxu0 0.0
  %443 = vmatpush1.msra.mxu0 0.0
  %444 = vmatprep.subr.mxu0 0.0
  %445 = vmatpush1.msra.mxu0 0.0
  %446 = vmatprep.subr.mxu0 0.0
  %447 = vmatpush1.msra.mxu0 0.0
  %448 = vmatprep.subr.mxu0 0.0
  %449 = vmatpush1.msra.mxu0 0.0
  %450 = vmatprep.subr.mxu0 0.0
  %451 = vmatpush1.msra.mxu0 0.0
  %452 = vmatprep.subr.mxu0 0.0
  %453 = vmatpush1.msra.mxu0 0.0
  %454 = vmatprep.subr.mxu0 0.0
  %455 = vmatpush1.msra.mxu0 0.0
  %456 = vmatprep.subr.mxu0 0.0
  %457 = vmatpush1.msra.mxu0 0.0
  %458 = vmatprep.subr.mxu0 0.0
  %459 = vmatpush1.msra.mxu0 0.0
  %460 = vmatprep.subr.mxu0 0.0
  %461 = vmatpush1.msra.mxu0 0.0
  %462 = vmatprep.subr.mxu0 0.0
  %463 = vmatpush1.msra.mxu0 0.0
  %464 = vmatprep.subr.mxu0 0.0
  %465 = vmatpush1.msra.mxu0 0.0
  %466 = vmatprep.subr.mxu0 0.0
  %467 = vmatpush1.msra.mxu0 0.0
  %468 = vmatprep.subr.mxu0 0.0
  %469 = vmatpush1.msra.mxu0 0.0
  %470 = vmatprep.subr.mxu0 0.0
  %471 = vmatpush1.msra.mxu0 0.0
  %472 = vmatprep.subr.mxu0 0.0
  %473 = vmatpush1.msra.mxu0 0.0
  %474 = vmatprep.subr.mxu0 0.0
  %475 = vmatpush1.msra.mxu0 0.0
  %476 = vmatprep.subr.mxu0 0.0
  %477 = vmatpush1.msra.mxu0 0.0
  %478 = vmatprep.subr.mxu0 0.0
  %479 = vmatpush1.msra.mxu0 0.0
  %480 = vmatprep.subr.mxu0 0.0
  %481 = vmatpush1.msra.mxu0 0.0
  %482 = vmatprep.subr.mxu0 0.0
  %483 = vmatpush1.msra.mxu0 0.0
  %484 = vmatprep.subr.mxu0 0.0
  %485 = vmatpush1.msra.mxu0 0.0
  %486 = vmatprep.subr.mxu0 0.0
  %487 = vmatpush1.msra.mxu0 0.0
  %488 = vmatprep.mubr.f32.mxu0 0.0
  %489 = vmatmul.mubr.f32.gmra.mrb[0].mxu0 %v420
  %v490 = vpop.f32.mrb[0].mxu0
  %v491 = vadd.f32 0.0, %v490
  %v492 = vpop.f32.mrb[0].mxu0
  %493 = vdwg.mxu0
  %v495 = vsel %vm168, %v491, 0
  %497 = vmatprep.subr.mxu0 0.0
  %498 = vmatpush1.msra.mxu0 %v25
  %499 = vmatprep.subr.mxu0 0.0
  %500 = vmatpush1.msra.mxu0 0.0
  %501 = vmatprep.subr.mxu0 0.0
  %502 = vmatpush1.msra.mxu0 0.0
  %503 = vmatprep.subr.mxu0 0.0
  %504 = vmatpush1.msra.mxu0 0.0
  %505 = vmatprep.subr.mxu0 0.0
  %506 = vmatpush1.msra.mxu0 0.0
  %507 = vmatprep.subr.mxu0 0.0
  %508 = vmatpush1.msra.mxu0 0.0
  %509 = vmatprep.subr.mxu0 0.0
  %510 = vmatpush1.msra.mxu0 0.0
  %511 = vmatprep.subr.mxu0 0.0
  %512 = vmatpush1.msra.mxu0 0.0
  %513 = vmatprep.subr.mxu0 0.0
  %514 = vmatpush1.msra.mxu0 0.0
  %515 = vmatprep.subr.mxu0 0.0
  %516 = vmatpush1.msra.mxu0 0.0
  %517 = vmatprep.subr.mxu0 0.0
  %518 = vmatpush1.msra.mxu0 0.0
  %519 = vmatprep.subr.mxu0 0.0
  %520 = vmatpush1.msra.mxu0 0.0
  %521 = vmatprep.subr.mxu0 0.0
  %522 = vmatpush1.msra.mxu0 0.0
  %523 = vmatprep.subr.mxu0 0.0
  %524 = vmatpush1.msra.mxu0 0.0
  %525 = vmatprep.subr.mxu0 0.0
  %526 = vmatpush1.msra.mxu0 0.0
  %527 = vmatprep.subr.mxu0 0.0
  %528 = vmatpush1.msra.mxu0 0.0
  %529 = vmatprep.subr.mxu0 0.0
  %530 = vmatpush1.msra.mxu0 0.0
  %531 = vmatprep.subr.mxu0 0.0
  %532 = vmatpush1.msra.mxu0 0.0
  %533 = vmatprep.subr.mxu0 0.0
  %534 = vmatpush1.msra.mxu0 0.0
  %535 = vmatprep.subr.mxu0 0.0
  %536 = vmatpush1.msra.mxu0 0.0
  %537 = vmatprep.subr.mxu0 0.0
  %538 = vmatpush1.msra.mxu0 0.0
  %539 = vmatprep.subr.mxu0 0.0
  %540 = vmatpush1.msra.mxu0 0.0
  %541 = vmatprep.subr.mxu0 0.0
  %542 = vmatpush1.msra.mxu0 0.0
  %543 = vmatprep.subr.mxu0 0.0
  %544 = vmatpush1.msra.mxu0 0.0
  %545 = vmatprep.subr.mxu0 0.0
  %546 = vmatpush1.msra.mxu0 0.0
  %547 = vmatprep.subr.mxu0 0.0
  %548 = vmatpush1.msra.mxu0 0.0
  %549 = vmatprep.subr.mxu0 0.0
  %550 = vmatpush1.msra.mxu0 0.0
  %551 = vmatprep.subr.mxu0 0.0
  %552 = vmatpush1.msra.mxu0 0.0
  %553 = vmatprep.subr.mxu0 0.0
  %554 = vmatpush1.msra.mxu0 0.0
  %555 = vmatprep.subr.mxu0 0.0
  %556 = vmatpush1.msra.mxu0 0.0
  %557 = vmatprep.subr.mxu0 0.0
  %558 = vmatpush1.msra.mxu0 0.0
  %559 = vmatprep.subr.mxu0 0.0
  %560 = vmatpush1.msra.mxu0 0.0
  %561 = vmatprep.mubr.f32.mxu0 0.0
  %562 = vmatmul.mubr.f32.gmra.mrb[0].mxu0 %v495
  %v563 = vpop.f32.mrb[0].mxu0
  %v564 = vadd.f32 0.0, %v563
  %v565 = vpop.f32.mrb[0].mxu0
  %566 = vdwg.mxu0
  %v568 = vsel %vm168, %v328, 0
  %570 = vmatprep.subr.mxu0 0.0
  %571 = vmatpush1.msra.mxu0 %v24
  %572 = vmatprep.subr.mxu0 0.0
  %573 = vmatpush1.msra.mxu0 0.0
  %574 = vmatprep.subr.mxu0 0.0
  %575 = vmatpush1.msra.mxu0 0.0
  %576 = vmatprep.subr.mxu0 0.0
  %577 = vmatpush1.msra.mxu0 0.0
  %578 = vmatprep.subr.mxu0 0.0
  %579 = vmatpush1.msra.mxu0 0.0
  %580 = vmatprep.subr.mxu0 0.0
  %581 = vmatpush1.msra.mxu0 0.0
  %582 = vmatprep.subr.mxu0 0.0
  %583 = vmatpush1.msra.mxu0 0.0
  %584 = vmatprep.subr.mxu0 0.0
  %585 = vmatpush1.msra.mxu0 0.0
  %586 = vmatprep.subr.mxu0 0.0
  %587 = vmatpush1.msra.mxu0 0.0
  %588 = vmatprep.subr.mxu0 0.0
  %589 = vmatpush1.msra.mxu0 0.0
  %590 = vmatprep.subr.mxu0 0.0
  %591 = vmatpush1.msra.mxu0 0.0
  %592 = vmatprep.subr.mxu0 0.0
  %593 = vmatpush1.msra.mxu0 0.0
  %594 = vmatprep.subr.mxu0 0.0
  %595 = vmatpush1.msra.mxu0 0.0
  %596 = vmatprep.subr.mxu0 0.0
  %597 = vmatpush1.msra.mxu0 0.0
  %598 = vmatprep.subr.mxu0 0.0
  %599 = vmatpush1.msra.mxu0 0.0
  %600 = vmatprep.subr.mxu0 0.0
  %601 = vmatpush1.msra.mxu0 0.0
  %602 = vmatprep.subr.mxu0 0.0
  %603 = vmatpush1.msra.mxu0 0.0
  %604 = vmatprep.subr.mxu0 0.0
  %605 = vmatpush1.msra.mxu0 0.0
  %606 = vmatprep.subr.mxu0 0.0
  %607 = vmatpush1.msra.mxu0 0.0
  %608 = vmatprep.subr.mxu0 0.0
  %609 = vmatpush1.msra.mxu0 0.0
  %610 = vmatprep.subr.mxu0 0.0
  %611 = vmatpush1.msra.mxu0 0.0
  %612 = vmatprep.subr.mxu0 0.0
  %613 = vmatpush1.msra.mxu0 0.0
  %614 = vmatprep.subr.mxu0 0.0
  %615 = vmatpush1.msra.mxu0 0.0
  %616 = vmatprep.subr.mxu0 0.0
  %617 = vmatpush1.msra.mxu0 0.0
  %618 = vmatprep.subr.mxu0 0.0
  %619 = vmatpush1.msra.mxu0 0.0
  %620 = vmatprep.subr.mxu0 0.0
  %621 = vmatpush1.msra.mxu0 0.0
  %622 = vmatprep.subr.mxu0 0.0
  %623 = vmatpush1.msra.mxu0 0.0
  %624 = vmatprep.subr.mxu0 0.0
  %625 = vmatpush1.msra.mxu0 0.0
  %626 = vmatprep.subr.mxu0 0.0
  %627 = vmatpush1.msra.mxu0 0.0
  %628 = vmatprep.subr.mxu0 0.0
  %629 = vmatpush1.msra.mxu0 0.0
  %630 = vmatprep.subr.mxu0 0.0
  %631 = vmatpush1.msra.mxu0 0.0
  %632 = vmatprep.subr.mxu0 0.0
  %633 = vmatpush1.msra.mxu0 0.0
  %634 = vmatprep.mubr.f32.mxu0 0.0
  %635 = vmatmul.mubr.f32.gmra.mrb[0].mxu0 %v568
  %v636 = vpop.f32.mrb[0].mxu0
  %v637 = vadd.f32 %v564, %v636
  %v638 = vpop.f32.mrb[0].mxu0
  %639 = vdwg.mxu0
  %640 = vrot.lane.b32.xlu0 %v162, 112
  %v641 = vpop.permute.xlu0 %640
  %642 = vrot.lane.b32.xlu0 %v162, 80
  %v643 = vpop.permute.xlu0 %642
  %v644 = vsel %vm168, %v641, 0
  %v646 = vsel %vm168, %v643, 0
  %648 = vmatprep.subr.mxu0 0.0
  %649 = vmatpush1.xpose.msra.mxu0 %v646
  %650 = vmatprep.subr.mxu0 0.0
  %651 = vmatpush1.xpose.msra.mxu0 0.0
  %652 = vmatprep.subr.mxu0 0.0
  %653 = vmatpush1.xpose.msra.mxu0 0.0
  %654 = vmatprep.subr.mxu0 0.0
  %655 = vmatpush1.xpose.msra.mxu0 0.0
  %656 = vmatprep.subr.mxu0 0.0
  %657 = vmatpush1.xpose.msra.mxu0 0.0
  %658 = vmatprep.subr.mxu0 0.0
  %659 = vmatpush1.xpose.msra.mxu0 0.0
  %660 = vmatprep.subr.mxu0 0.0
  %661 = vmatpush1.xpose.msra.mxu0 0.0
  %662 = vmatprep.subr.mxu0 0.0
  %663 = vmatpush1.xpose.msra.mxu0 0.0
  %664 = vmatprep.subr.mxu0 0.0
  %665 = vmatpush1.xpose.msra.mxu0 0.0
  %666 = vmatprep.subr.mxu0 0.0
  %667 = vmatpush1.xpose.msra.mxu0 0.0
  %668 = vmatprep.subr.mxu0 0.0
  %669 = vmatpush1.xpose.msra.mxu0 0.0
  %670 = vmatprep.subr.mxu0 0.0
  %671 = vmatpush1.xpose.msra.mxu0 0.0
  %672 = vmatprep.subr.mxu0 0.0
  %673 = vmatpush1.xpose.msra.mxu0 0.0
  %674 = vmatprep.subr.mxu0 0.0
  %675 = vmatpush1.xpose.msra.mxu0 0.0
  %676 = vmatprep.subr.mxu0 0.0
  %677 = vmatpush1.xpose.msra.mxu0 0.0
  %678 = vmatprep.subr.mxu0 0.0
  %679 = vmatpush1.xpose.msra.mxu0 0.0
  %680 = vmatprep.subr.mxu0 0.0
  %681 = vmatpush1.xpose.msra.mxu0 0.0
  %682 = vmatprep.subr.mxu0 0.0
  %683 = vmatpush1.xpose.msra.mxu0 0.0
  %684 = vmatprep.subr.mxu0 0.0
  %685 = vmatpush1.xpose.msra.mxu0 0.0
  %686 = vmatprep.subr.mxu0 0.0
  %687 = vmatpush1.xpose.msra.mxu0 0.0
  %688 = vmatprep.subr.mxu0 0.0
  %689 = vmatpush1.xpose.msra.mxu0 0.0
  %690 = vmatprep.subr.mxu0 0.0
  %691 = vmatpush1.xpose.msra.mxu0 0.0
  %692 = vmatprep.subr.mxu0 0.0
  %693 = vmatpush1.xpose.msra.mxu0 0.0
  %694 = vmatprep.subr.mxu0 0.0
  %695 = vmatpush1.xpose.msra.mxu0 0.0
  %696 = vmatprep.subr.mxu0 0.0
  %697 = vmatpush1.xpose.msra.mxu0 0.0
  %698 = vmatprep.subr.mxu0 0.0
  %699 = vmatpush1.xpose.msra.mxu0 0.0
  %700 = vmatprep.subr.mxu0 0.0
  %701 = vmatpush1.xpose.msra.mxu0 0.0
  %702 = vmatprep.subr.mxu0 0.0
  %703 = vmatpush1.xpose.msra.mxu0 0.0
  %704 = vmatprep.subr.mxu0 0.0
  %705 = vmatpush1.xpose.msra.mxu0 0.0
  %706 = vmatprep.subr.mxu0 0.0
  %707 = vmatpush1.xpose.msra.mxu0 0.0
  %708 = vmatprep.subr.mxu0 0.0
  %709 = vmatpush1.xpose.msra.mxu0 0.0
  %710 = vmatprep.subr.mxu0 0.0
  %711 = vmatpush1.xpose.msra.mxu0 0.0
  %712 = vmatprep.mubr.f32.mxu0 0.0
  %713 = vmatmul.mubr.f32.gmra.mrb[0].mxu0 %v644
  %v714 = vpop.f32.mrb[0].mxu0
  %v715 = vadd.f32 0.0, %v714
  %v716 = vpop.f32.mrb[0].mxu0
  %717 = vdwg.mxu0
  %v718 = vmul.f32 %v715, 0.35355338
  %v719 = vmul.f32 %v718, 1.442695
  %v720 = vpow.pop %v719
  %v721 = vsel %vm246, %v720, 0.0
  %722 = vadd.xlane.f32.xlu0 %v721
  %v723 = vpop.xlane.xlu0 %722
  %v724 = vrcp.pop %v723
  %v725 = vmul.f32 %v720, %v724
  %726 = vrot.lane.b32.xlu0 %v162, 48
  %v727 = vpop.permute.xlu0 %726
  %v729 = vsel %vm254, %v725, 0
  %v731 = vsel %vm258, %v727, 0
  %733 = vmatprep.subr.mxu0 0.0
  %734 = vmatpush1.msra.mxu0 %v731
  %735 = vmatprep.subr.mxu0 0.0
  %736 = vmatpush1.msra.mxu0 0.0
  %737 = vmatprep.subr.mxu0 0.0
  %738 = vmatpush1.msra.mxu0 0.0
  %739 = vmatprep.subr.mxu0 0.0
  %740 = vmatpush1.msra.mxu0 0.0
  %741 = vmatprep.subr.mxu0 0.0
  %742 = vmatpush1.msra.mxu0 0.0
  %743 = vmatprep.subr.mxu0 0.0
  %744 = vmatpush1.msra.mxu0 0.0
  %745 = vmatprep.subr.mxu0 0.0
  %746 = vmatpush1.msra.mxu0 0.0
  %747 = vmatprep.subr.mxu0 0.0
  %748 = vmatpush1.msra.mxu0 0.0
  %749 = vmatprep.subr.mxu0 0.0
  %750 = vmatpush1.msra.mxu0 0.0
  %751 = vmatprep.subr.mxu0 0.0
  %752 = vmatpush1.msra.mxu0 0.0
  %753 = vmatprep.subr.mxu0 0.0
  %754 = vmatpush1.msra.mxu0 0.0
  %755 = vmatprep.subr.mxu0 0.0
  %756 = vmatpush1.msra.mxu0 0.0
  %757 = vmatprep.subr.mxu0 0.0
  %758 = vmatpush1.msra.mxu0 0.0
  %759 = vmatprep.subr.mxu0 0.0
  %760 = vmatpush1.msra.mxu0 0.0
  %761 = vmatprep.subr.mxu0 0.0
  %762 = vmatpush1.msra.mxu0 0.0
  %763 = vmatprep.subr.mxu0 0.0
  %764 = vmatpush1.msra.mxu0 0.0
  %765 = vmatprep.subr.mxu0 0.0
  %766 = vmatpush1.msra.mxu0 0.0
  %767 = vmatprep.subr.mxu0 0.0
  %768 = vmatpush1.msra.mxu0 0.0
  %769 = vmatprep.subr.mxu0 0.0
  %770 = vmatpush1.msra.mxu0 0.0
  %771 = vmatprep.subr.mxu0 0.0
  %772 = vmatpush1.msra.mxu0 0.0
  %773 = vmatprep.subr.mxu0 0.0
  %774 = vmatpush1.msra.mxu0 0.0
  %775 = vmatprep.subr.mxu0 0.0
  %776 = vmatpush1.msra.mxu0 0.0
  %777 = vmatprep.subr.mxu0 0.0
  %778 = vmatpush1.msra.mxu0 0.0
  %779 = vmatprep.subr.mxu0 0.0
  %780 = vmatpush1.msra.mxu0 0.0
  %781 = vmatprep.subr.mxu0 0.0
  %782 = vmatpush1.msra.mxu0 0.0
  %783 = vmatprep.subr.mxu0 0.0
  %784 = vmatpush1.msra.mxu0 0.0
  %785 = vmatprep.subr.mxu0 0.0
  %786 = vmatpush1.msra.mxu0 0.0
  %787 = vmatprep.subr.mxu0 0.0
  %788 = vmatpush1.msra.mxu0 0.0
  %789 = vmatprep.subr.mxu0 0.0
  %790 = vmatpush1.msra.mxu0 0.0
  %791 = vmatprep.subr.mxu0 0.0
  %792 = vmatpush1.msra.mxu0 0.0
  %793 = vmatprep.subr.mxu0 0.0
  %794 = vmatpush1.msra.mxu0 0.0
  %795 = vmatprep.subr.mxu0 0.0
  %796 = vmatpush1.msra.mxu0 0.0
  %797 = vmatprep.mubr.f32.mxu0 0.0
  %798 = vmatmul.mubr.f32.gmra.mrb[0].mxu0 %v729
  %v799 = vpop.f32.mrb[0].mxu0
  %v800 = vadd.f32 0.0, %v799
  %v801 = vpop.f32.mrb[0].mxu0
  %802 = vdwg.mxu0
  %v804 = vsel %vm168, %v800, 0
  %806 = vmatprep.subr.mxu0 0.0
  %807 = vmatpush1.msra.mxu0 %v26
  %808 = vmatprep.subr.mxu0 0.0
  %809 = vmatpush1.msra.mxu0 0.0
  %810 = vmatprep.subr.mxu0 0.0
  %811 = vmatpush1.msra.mxu0 0.0
  %812 = vmatprep.subr.mxu0 0.0
  %813 = vmatpush1.msra.mxu0 0.0
  %814 = vmatprep.subr.mxu0 0.0
  %815 = vmatpush1.msra.mxu0 0.0
  %816 = vmatprep.subr.mxu0 0.0
  %817 = vmatpush1.msra.mxu0 0.0
  %818 = vmatprep.subr.mxu0 0.0
  %819 = vmatpush1.msra.mxu0 0.0
  %820 = vmatprep.subr.mxu0 0.0
  %821 = vmatpush1.msra.mxu0 0.0
  %822 = vmatprep.subr.mxu0 0.0
  %823 = vmatpush1.msra.mxu0 0.0
  %824 = vmatprep.subr.mxu0 0.0
  %825 = vmatpush1.msra.mxu0 0.0
  %826 = vmatprep.subr.mxu0 0.0
  %827 = vmatpush1.msra.mxu0 0.0
  %828 = vmatprep.subr.mxu0 0.0
  %829 = vmatpush1.msra.mxu0 0.0
  %830 = vmatprep.subr.mxu0 0.0
  %831 = vmatpush1.msra.mxu0 0.0
  %832 = vmatprep.subr.mxu0 0.0
  %833 = vmatpush1.msra.mxu0 0.0
  %834 = vmatprep.subr.mxu0 0.0
  %835 = vmatpush1.msra.mxu0 0.0
  %836 = vmatprep.subr.mxu0 0.0
  %837 = vmatpush1.msra.mxu0 0.0
  %838 = vmatprep.subr.mxu0 0.0
  %839 = vmatpush1.msra.mxu0 0.0
  %840 = vmatprep.subr.mxu0 0.0
  %841 = vmatpush1.msra.mxu0 0.0
  %842 = vmatprep.subr.mxu0 0.0
  %843 = vmatpush1.msra.mxu0 0.0
  %844 = vmatprep.subr.mxu0 0.0
  %845 = vmatpush1.msra.mxu0 0.0
  %846 = vmatprep.subr.mxu0 0.0
  %847 = vmatpush1.msra.mxu0 0.0
  %848 = vmatprep.subr.mxu0 0.0
  %849 = vmatpush1.msra.mxu0 0.0
  %850 = vmatprep.subr.mxu0 0.0
  %851 = vmatpush1.msra.mxu0 0.0
  %852 = vmatprep.subr.mxu0 0.0
  %853 = vmatpush1.msra.mxu0 0.0
  %854 = vmatprep.subr.mxu0 0.0
  %855 = vmatpush1.msra.mxu0 0.0
  %856 = vmatprep.subr.mxu0 0.0
  %857 = vmatpush1.msra.mxu0 0.0
  %858 = vmatprep.subr.mxu0 0.0
  %859 = vmatpush1.msra.mxu0 0.0
  %860 = vmatprep.subr.mxu0 0.0
  %861 = vmatpush1.msra.mxu0 0.0
  %862 = vmatprep.subr.mxu0 0.0
  %863 = vmatpush1.msra.mxu0 0.0
  %864 = vmatprep.subr.mxu0 0.0
  %865 = vmatpush1.msra.mxu0 0.0
  %866 = vmatprep.subr.mxu0 0.0
  %867 = vmatpush1.msra.mxu0 0.0
  %868 = vmatprep.subr.mxu0 0.0
  %869 = vmatpush1.msra.mxu0 0.0
  %870 = vmatprep.mubr.f32.mxu0 0.0
  %871 = vmatmul.mubr.f32.gmra.mrb[0].mxu0 %v804
  %v872 = vpop.f32.mrb[0].mxu0
  %v873 = vadd.f32 0.0, %v872
  %v874 = vpop.f32.mrb[0].mxu0
  %875 = vdwg.mxu0
  %v876 = vadd.f32 %v637, %v873
  %877 = vrot.lane.b32.xlu0 %v162, 104
  %v878 = vpop.permute.xlu0 %877
  %879 = vrot.lane.b32.xlu0 %v162, 72
  %v880 = vpop.permute.xlu0 %879
  %v881 = vsel %vm168, %v878, 0
  %v883 = vsel %vm168, %v880, 0
  %885 = vmatprep.subr.mxu0 0.0
  %886 = vmatpush1.xpose.msra.mxu0 %v883
  %887 = vmatprep.subr.mxu0 0.0
  %888 = vmatpush1.xpose.msra.mxu0 0.0
  %889 = vmatprep.subr.mxu0 0.0
  %890 = vmatpush1.xpose.msra.mxu0 0.0
  %891 = vmatprep.subr.mxu0 0.0
  %892 = vmatpush1.xpose.msra.mxu0 0.0
  %893 = vmatprep.subr.mxu0 0.0
  %894 = vmatpush1.xpose.msra.mxu0 0.0
  %895 = vmatprep.subr.mxu0 0.0
  %896 = vmatpush1.xpose.msra.mxu0 0.0
  %897 = vmatprep.subr.mxu0 0.0
  %898 = vmatpush1.xpose.msra.mxu0 0.0
  %899 = vmatprep.subr.mxu0 0.0
  %900 = vmatpush1.xpose.msra.mxu0 0.0
  %901 = vmatprep.subr.mxu0 0.0
  %902 = vmatpush1.xpose.msra.mxu0 0.0
  %903 = vmatprep.subr.mxu0 0.0
  %904 = vmatpush1.xpose.msra.mxu0 0.0
  %905 = vmatprep.subr.mxu0 0.0
  %906 = vmatpush1.xpose.msra.mxu0 0.0
  %907 = vmatprep.subr.mxu0 0.0
  %908 = vmatpush1.xpose.msra.mxu0 0.0
  %909 = vmatprep.subr.mxu0 0.0
  %910 = vmatpush1.xpose.msra.mxu0 0.0
  %911 = vmatprep.subr.mxu0 0.0
  %912 = vmatpush1.xpose.msra.mxu0 0.0
  %913 = vmatprep.subr.mxu0 0.0
  %914 = vmatpush1.xpose.msra.mxu0 0.0
  %915 = vmatprep.subr.mxu0 0.0
  %916 = vmatpush1.xpose.msra.mxu0 0.0
  %917 = vmatprep.subr.mxu0 0.0
  %918 = vmatpush1.xpose.msra.mxu0 0.0
  %919 = vmatprep.subr.mxu0 0.0
  %920 = vmatpush1.xpose.msra.mxu0 0.0
  %921 = vmatprep.subr.mxu0 0.0
  %922 = vmatpush1.xpose.msra.mxu0 0.0
  %923 = vmatprep.subr.mxu0 0.0
  %924 = vmatpush1.xpose.msra.mxu0 0.0
  %925 = vmatprep.subr.mxu0 0.0
  %926 = vmatpush1.xpose.msra.mxu0 0.0
  %927 = vmatprep.subr.mxu0 0.0
  %928 = vmatpush1.xpose.msra.mxu0 0.0
  %929 = vmatprep.subr.mxu0 0.0
  %930 = vmatpush1.xpose.msra.mxu0 0.0
  %931 = vmatprep.subr.mxu0 0.0
  %932 = vmatpush1.xpose.msra.mxu0 0.0
  %933 = vmatprep.subr.mxu0 0.0
  %934 = vmatpush1.xpose.msra.mxu0 0.0
  %935 = vmatprep.subr.mxu0 0.0
  %936 = vmatpush1.xpose.msra.mxu0 0.0
  %937 = vmatprep.subr.mxu0 0.0
  %938 = vmatpush1.xpose.msra.mxu0 0.0
  %939 = vmatprep.subr.mxu0 0.0
  %940 = vmatpush1.xpose.msra.mxu0 0.0
  %941 = vmatprep.subr.mxu0 0.0
  %942 = vmatpush1.xpose.msra.mxu0 0.0
  %943 = vmatprep.subr.mxu0 0.0
  %944 = vmatpush1.xpose.msra.mxu0 0.0
  %945 = vmatprep.subr.mxu0 0.0
  %946 = vmatpush1.xpose.msra.mxu0 0.0
  %947 = vmatprep.subr.mxu0 0.0
  %948 = vmatpush1.xpose.msra.mxu0 0.0
  %949 = vmatprep.mubr.f32.mxu0 0.0
  %950 = vmatmul.mubr.f32.gmra.mrb[0].mxu0 %v881
  %v951 = vpop.f32.mrb[0].mxu0
  %v952 = vadd.f32 0.0, %v951
  %v953 = vpop.f32.mrb[0].mxu0
  %954 = vdwg.mxu0
  %v955 = vmul.f32 %v952, 0.35355338
  %v956 = vmul.f32 %v955, 1.442695
  %v957 = vpow.pop %v956
  %v958 = vsel %vm246, %v957, 0.0
  %959 = vadd.xlane.f32.xlu0 %v958
  %v960 = vpop.xlane.xlu0 %959
  %v961 = vrcp.pop %v960
  %v962 = vmul.f32 %v957, %v961
  %963 = vrot.lane.b32.xlu0 %v162, 40
  %v964 = vpop.permute.xlu0 %963
  %v966 = vsel %vm254, %v962, 0
  %v968 = vsel %vm258, %v964, 0
  %970 = vmatprep.subr.mxu0 0.0
  %971 = vmatpush1.msra.mxu0 %v968
  %972 = vmatprep.subr.mxu0 0.0
  %973 = vmatpush1.msra.mxu0 0.0
  %974 = vmatprep.subr.mxu0 0.0
  %975 = vmatpush1.msra.mxu0 0.0
  %976 = vmatprep.subr.mxu0 0.0
  %977 = vmatpush1.msra.mxu0 0.0
  %978 = vmatprep.subr.mxu0 0.0
  %979 = vmatpush1.msra.mxu0 0.0
  %980 = vmatprep.subr.mxu0 0.0
  %981 = vmatpush1.msra.mxu0 0.0
  %982 = vmatprep.subr.mxu0 0.0
  %983 = vmatpush1.msra.mxu0 0.0
  %984 = vmatprep.subr.mxu0 0.0
  %985 = vmatpush1.msra.mxu0 0.0
  %986 = vmatprep.subr.mxu0 0.0
  %987 = vmatpush1.msra.mxu0 0.0
  %988 = vmatprep.subr.mxu0 0.0
  %989 = vmatpush1.msra.mxu0 0.0
  %990 = vmatprep.subr.mxu0 0.0
  %991 = vmatpush1.msra.mxu0 0.0
  %992 = vmatprep.subr.mxu0 0.0
  %993 = vmatpush1.msra.mxu0 0.0
  %994 = vmatprep.subr.mxu0 0.0
  %995 = vmatpush1.msra.mxu0 0.0
  %996 = vmatprep.subr.mxu0 0.0
  %997 = vmatpush1.msra.mxu0 0.0
  %998 = vmatprep.subr.mxu0 0.0
  %999 = vmatpush1.msra.mxu0 0.0
  %1000 = vmatprep.subr.mxu0 0.0
  %1001 = vmatpush1.msra.mxu0 0.0
  %1002 = vmatprep.subr.mxu0 0.0
  %1003 = vmatpush1.msra.mxu0 0.0
  %1004 = vmatprep.subr.mxu0 0.0
  %1005 = vmatpush1.msra.mxu0 0.0
  %1006 = vmatprep.subr.mxu0 0.0
  %1007 = vmatpush1.msra.mxu0 0.0
  %1008 = vmatprep.subr.mxu0 0.0
  %1009 = vmatpush1.msra.mxu0 0.0
  %1010 = vmatprep.subr.mxu0 0.0
  %1011 = vmatpush1.msra.mxu0 0.0
  %1012 = vmatprep.subr.mxu0 0.0
  %1013 = vmatpush1.msra.mxu0 0.0
  %1014 = vmatprep.subr.mxu0 0.0
  %1015 = vmatpush1.msra.mxu0 0.0
  %1016 = vmatprep.subr.mxu0 0.0
  %1017 = vmatpush1.msra.mxu0 0.0
  %1018 = vmatprep.subr.mxu0 0.0
  %1019 = vmatpush1.msra.mxu0 0.0
  %1020 = vmatprep.subr.mxu0 0.0
  %1021 = vmatpush1.msra.mxu0 0.0
  %1022 = vmatprep.subr.mxu0 0.0
  %1023 = vmatpush1.msra.mxu0 0.0
  %1024 = vmatprep.subr.mxu0 0.0
  %1025 = vmatpush1.msra.mxu0 0.0
  %1026 = vmatprep.subr.mxu0 0.0
  %1027 = vmatpush1.msra.mxu0 0.0
  %1028 = vmatprep.subr.mxu0 0.0
  %1029 = vmatpush1.msra.mxu0 0.0
  %1030 = vmatprep.subr.mxu0 0.0
  %1031 = vmatpush1.msra.mxu0 0.0
  %1032 = vmatprep.subr.mxu0 0.0
  %1033 = vmatpush1.msra.mxu0 0.0
  %1034 = vmatprep.mubr.f32.mxu0 0.0
  %1035 = vmatmul.mubr.f32.gmra.mrb[0].mxu0 %v966
  %v1036 = vpop.f32.mrb[0].mxu0
  %v1037 = vadd.f32 0.0, %v1036
  %v1038 = vpop.f32.mrb[0].mxu0
  %1039 = vdwg.mxu0
  %v1041 = vsel %vm168, %v1037, 0
  %1043 = vmatprep.subr.mxu0 0.0
  %1044 = vmatpush1.msra.mxu0 %v27
  %1045 = vmatprep.subr.mxu0 0.0
  %1046 = vmatpush1.msra.mxu0 0.0
  %1047 = vmatprep.subr.mxu0 0.0
  %1048 = vmatpush1.msra.mxu0 0.0
  %1049 = vmatprep.subr.mxu0 0.0
  %1050 = vmatpush1.msra.mxu0 0.0
  %1051 = vmatprep.subr.mxu0 0.0
  %1052 = vmatpush1.msra.mxu0 0.0
  %1053 = vmatprep.subr.mxu0 0.0
  %1054 = vmatpush1.msra.mxu0 0.0
  %1055 = vmatprep.subr.mxu0 0.0
  %1056 = vmatpush1.msra.mxu0 0.0
  %1057 = vmatprep.subr.mxu0 0.0
  %1058 = vmatpush1.msra.mxu0 0.0
  %1059 = vmatprep.subr.mxu0 0.0
  %1060 = vmatpush1.msra.mxu0 0.0
  %1061 = vmatprep.subr.mxu0 0.0
  %1062 = vmatpush1.msra.mxu0 0.0
  %1063 = vmatprep.subr.mxu0 0.0
  %1064 = vmatpush1.msra.mxu0 0.0
  %1065 = vmatprep.subr.mxu0 0.0
  %1066 = vmatpush1.msra.mxu0 0.0
  %1067 = vmatprep.subr.mxu0 0.0
  %1068 = vmatpush1.msra.mxu0 0.0
  %1069 = vmatprep.subr.mxu0 0.0
  %1070 = vmatpush1.msra.mxu0 0.0
  %1071 = vmatprep.subr.mxu0 0.0
  %1072 = vmatpush1.msra.mxu0 0.0
  %1073 = vmatprep.subr.mxu0 0.0
  %1074 = vmatpush1.msra.mxu0 0.0
  %1075 = vmatprep.subr.mxu0 0.0
  %1076 = vmatpush1.msra.mxu0 0.0
  %1077 = vmatprep.subr.mxu0 0.0
  %1078 = vmatpush1.msra.mxu0 0.0
  %1079 = vmatprep.subr.mxu0 0.0
  %1080 = vmatpush1.msra.mxu0 0.0
  %1081 = vmatprep.subr.mxu0 0.0
  %1082 = vmatpush1.msra.mxu0 0.0
  %1083 = vmatprep.subr.mxu0 0.0
  %1084 = vmatpush1.msra.mxu0 0.0
  %1085 = vmatprep.subr.mxu0 0.0
  %1086 = vmatpush1.msra.mxu0 0.0
  %1087 = vmatprep.subr.mxu0 0.0
  %1088 = vmatpush1.msra.mxu0 0.0
  %1089 = vmatprep.subr.mxu0 0.0
  %1090 = vmatpush1.msra.mxu0 0.0
  %1091 = vmatprep.subr.mxu0 0.0
  %1092 = vmatpush1.msra.mxu0 0.0
  %1093 = vmatprep.subr.mxu0 0.0
  %1094 = vmatpush1.msra.mxu0 0.0
  %1095 = vmatprep.subr.mxu0 0.0
  %1096 = vmatpush1.msra.mxu0 0.0
  %1097 = vmatprep.subr.mxu0 0.0
  %1098 = vmatpush1.msra.mxu0 0.0
  %1099 = vmatprep.subr.mxu0 0.0
  %1100 = vmatpush1.msra.mxu0 0.0
  %1101 = vmatprep.subr.mxu0 0.0
  %1102 = vmatpush1.msra.mxu0 0.0
  %1103 = vmatprep.subr.mxu0 0.0
  %1104 = vmatpush1.msra.mxu0 0.0
  %1105 = vmatprep.subr.mxu0 0.0
  %1106 = vmatpush1.msra.mxu0 0.0
  %1107 = vmatprep.mubr.f32.mxu0 0.0
  %1108 = vmatmul.mubr.f32.gmra.mrb[0].mxu0 %v1041
  %v1109 = vpop.f32.mrb[0].mxu0
  %v1110 = vadd.f32 0.0, %v1109
  %v1111 = vpop.f32.mrb[0].mxu0
  %1112 = vdwg.mxu0
  %v1113 = vadd.f32 %v876, %v1110
  %v1114 = vlaneseq
  %v1115 = vshrl.u32 %v1114, 7
  %v1116 = vsub.s32 0, %v1115
  %v1117 = vrot.slane %v50, %v1116
  %v1118 = vadd.f32 %v1113, %v1117
  %v1119 = vtanh.pop %v1118
  %v1120 = vsel %vm69, %v1119, 0.0
  %1121 = vadd.xlane.f32.xlu0 %v1120
  %v1122 = vpop.xlane.xlu0 %1121
  %v1123 = vmul.f32 %v1122, %v73
  %v1124 = vsub.f32 %v1119, %v1123
  %v1125 = vmul.f32 %v1124, %v1124
  %v1126 = vsel %vm69, %v1125, 0.0
  %1127 = vadd.xlane.f32.xlu0 %v1126
  %v1128 = vpop.xlane.xlu0 %1127
  %v1129 = vmul.f32 %v1128, %v73
  %v1130 = vadd.f32 %v1129, 1e-05
  %v1131 = vrsqrt.pop %v1130
  %v1132 = vmul.f32 %v1124, %v1131
  %v1133 = vlaneseq
  %v1134 = vshrl.u32 %v1133, 7
  %v1135 = vsub.s32 0, %v1134
  %v1136 = vrot.slane %v51, %v1135
  %v1137 = vmul.f32 %v1132, %v1136
  %v1138 = vlaneseq
  %v1139 = vshrl.u32 %v1138, 7
  %v1140 = vsub.s32 0, %v1139
  %v1141 = vrot.slane %v52, %v1140
  %v1142 = vadd.f32 %v1137, %v1141
  %v1143 = vadd.f32 %v1142, %v85
  %v1144 = vsel %vm69, %v1143, 0.0
  %v1145 = vrot.slane %v1144, 4
  %v1146 = vadd.f32 %v1144, %v1145
  %v1147 = vrot.slane %v1146, 2
  %v1148 = vadd.f32 %v1146, %v1147
  %v1149 = vrot.slane %v1148, 1
  %v1150 = vadd.f32 %v1148, %v1149
  %v1151 = vrcp.pop 5.0
  %v1152 = vmul.f32 %v1150, %v1151
  %v1154 = vsel %vm168, %v86, 0
  %1156 = vmatprep.subr.mxu0 0.0
  %1157 = vmatpush1.msra.mxu0 %v32
  %1158 = vmatprep.subr.mxu0 0.0
  %1159 = vmatpush1.msra.mxu0 0.0
  %1160 = vmatprep.subr.mxu0 0.0
  %1161 = vmatpush1.msra.mxu0 0.0
  %1162 = vmatprep.subr.mxu0 0.0
  %1163 = vmatpush1.msra.mxu0 0.0
  %1164 = vmatprep.subr.mxu0 0.0
  %1165 = vmatpush1.msra.mxu0 0.0
  %1166 = vmatprep.subr.mxu0 0.0
  %1167 = vmatpush1.msra.mxu0 0.0
  %1168 = vmatprep.subr.mxu0 0.0
  %1169 = vmatpush1.msra.mxu0 0.0
  %1170 = vmatprep.subr.mxu0 0.0
  %1171 = vmatpush1.msra.mxu0 0.0
  %1172 = vmatprep.subr.mxu0 0.0
  %1173 = vmatpush1.msra.mxu0 0.0
  %1174 = vmatprep.subr.mxu0 0.0
  %1175 = vmatpush1.msra.mxu0 0.0
  %1176 = vmatprep.subr.mxu0 0.0
  %1177 = vmatpush1.msra.mxu0 0.0
  %1178 = vmatprep.subr.mxu0 0.0
  %1179 = vmatpush1.msra.mxu0 0.0
  %1180 = vmatprep.subr.mxu0 0.0
  %1181 = vmatpush1.msra.mxu0 0.0
  %1182 = vmatprep.subr.mxu0 0.0
  %1183 = vmatpush1.msra.mxu0 0.0
  %1184 = vmatprep.subr.mxu0 0.0
  %1185 = vmatpush1.msra.mxu0 0.0
  %1186 = vmatprep.subr.mxu0 0.0
  %1187 = vmatpush1.msra.mxu0 0.0
  %1188 = vmatprep.subr.mxu0 0.0
  %1189 = vmatpush1.msra.mxu0 0.0
  %1190 = vmatprep.subr.mxu0 0.0
  %1191 = vmatpush1.msra.mxu0 0.0
  %1192 = vmatprep.subr.mxu0 0.0
  %1193 = vmatpush1.msra.mxu0 0.0
  %1194 = vmatprep.subr.mxu0 0.0
  %1195 = vmatpush1.msra.mxu0 0.0
  %1196 = vmatprep.subr.mxu0 0.0
  %1197 = vmatpush1.msra.mxu0 0.0
  %1198 = vmatprep.subr.mxu0 0.0
  %1199 = vmatpush1.msra.mxu0 0.0
  %1200 = vmatprep.subr.mxu0 0.0
  %1201 = vmatpush1.msra.mxu0 0.0
  %1202 = vmatprep.subr.mxu0 0.0
  %1203 = vmatpush1.msra.mxu0 0.0
  %1204 = vmatprep.subr.mxu0 0.0
  %1205 = vmatpush1.msra.mxu0 0.0
  %1206 = vmatprep.subr.mxu0 0.0
  %1207 = vmatpush1.msra.mxu0 0.0
  %1208 = vmatprep.subr.mxu0 0.0
  %1209 = vmatpush1.msra.mxu0 0.0
  %1210 = vmatprep.subr.mxu0 0.0
  %1211 = vmatpush1.msra.mxu0 0.0
  %1212 = vmatprep.subr.mxu0 0.0
  %1213 = vmatpush1.msra.mxu0 0.0
  %1214 = vmatprep.subr.mxu0 0.0
  %1215 = vmatpush1.msra.mxu0 0.0
  %1216 = vmatprep.subr.mxu0 0.0
  %1217 = vmatpush1.msra.mxu0 0.0
  %1218 = vmatprep.subr.mxu0 0.0
  %1219 = vmatpush1.msra.mxu0 0.0
  %1220 = vmatprep.mubr.f32.mxu0 0.0
  %1221 = vmatmul.mubr.f32.gmra.mrb[0].mxu0 %v1154
  %v1222 = vpop.f32.mrb[0].mxu0
  %v1223 = vadd.f32 0.0, %v1222
  %v1224 = vpop.f32.mrb[0].mxu0
  %1225 = vdwg.mxu0
  %v1227 = vsel %vm91, %v1152, 0
  %1229 = vmatprep.subr.mxu0 0.0
  %1230 = vmatpush1.msra.mxu0 %v28
  %1231 = vmatprep.subr.mxu0 0.0
  %1232 = vmatpush1.msra.mxu0 %v29
  %1233 = vmatprep.subr.mxu0 0.0
  %1234 = vmatpush1.msra.mxu0 %v30
  %1235 = vmatprep.subr.mxu0 0.0
  %1236 = vmatpush1.msra.mxu0 %v31
  %1237 = vmatprep.subr.mxu0 0.0
  %1238 = vmatpush1.msra.mxu0 0.0
  %1239 = vmatprep.subr.mxu0 0.0
  %1240 = vmatpush1.msra.mxu0 0.0
  %1241 = vmatprep.subr.mxu0 0.0
  %1242 = vmatpush1.msra.mxu0 0.0
  %1243 = vmatprep.subr.mxu0 0.0
  %1244 = vmatpush1.msra.mxu0 0.0
  %1245 = vmatprep.subr.mxu0 0.0
  %1246 = vmatpush1.msra.mxu0 0.0
  %1247 = vmatprep.subr.mxu0 0.0
  %1248 = vmatpush1.msra.mxu0 0.0
  %1249 = vmatprep.subr.mxu0 0.0
  %1250 = vmatpush1.msra.mxu0 0.0
  %1251 = vmatprep.subr.mxu0 0.0
  %1252 = vmatpush1.msra.mxu0 0.0
  %1253 = vmatprep.subr.mxu0 0.0
  %1254 = vmatpush1.msra.mxu0 0.0
  %1255 = vmatprep.subr.mxu0 0.0
  %1256 = vmatpush1.msra.mxu0 0.0
  %1257 = vmatprep.subr.mxu0 0.0
  %1258 = vmatpush1.msra.mxu0 0.0
  %1259 = vmatprep.subr.mxu0 0.0
  %1260 = vmatpush1.msra.mxu0 0.0
  %1261 = vmatprep.subr.mxu0 0.0
  %1262 = vmatpush1.msra.mxu0 0.0
  %1263 = vmatprep.subr.mxu0 0.0
  %1264 = vmatpush1.msra.mxu0 0.0
  %1265 = vmatprep.subr.mxu0 0.0
  %1266 = vmatpush1.msra.mxu0 0.0
  %1267 = vmatprep.subr.mxu0 0.0
  %1268 = vmatpush1.msra.mxu0 0.0
  %1269 = vmatprep.subr.mxu0 0.0
  %1270 = vmatpush1.msra.mxu0 0.0
  %1271 = vmatprep.subr.mxu0 0.0
  %1272 = vmatpush1.msra.mxu0 0.0
  %1273 = vmatprep.subr.mxu0 0.0
  %1274 = vmatpush1.msra.mxu0 0.0
  %1275 = vmatprep.subr.mxu0 0.0
  %1276 = vmatpush1.msra.mxu0 0.0
  %1277 = vmatprep.subr.mxu0 0.0
  %1278 = vmatpush1.msra.mxu0 0.0
  %1279 = vmatprep.subr.mxu0 0.0
  %1280 = vmatpush1.msra.mxu0 0.0
  %1281 = vmatprep.subr.mxu0 0.0
  %1282 = vmatpush1.msra.mxu0 0.0
  %1283 = vmatprep.subr.mxu0 0.0
  %1284 = vmatpush1.msra.mxu0 0.0
  %1285 = vmatprep.subr.mxu0 0.0
  %1286 = vmatpush1.msra.mxu0 0.0
  %1287 = vmatprep.subr.mxu0 0.0
  %1288 = vmatpush1.msra.mxu0 0.0
  %1289 = vmatprep.subr.mxu0 0.0
  %1290 = vmatpush1.msra.mxu0 0.0
  %1291 = vmatprep.subr.mxu0 0.0
  %1292 = vmatpush1.msra.mxu0 0.0
  %1293 = vmatprep.mubr.f32.mxu0 0.0
  %1294 = vmatmul.mubr.f32.gmra.mrb[0].mxu0 %v1227
  %v1295 = vpop.f32.mrb[0].mxu0
  %v1296 = vadd.f32 %v1223, %v1295
  %v1297 = vpop.f32.mrb[0].mxu0
  %1298 = vdwg.mxu0
  %v1299 = vadd.f32 %v1296, %v53
  %v1300 = vtanh.pop %v1299
  %vm1301 = vcmask 253952
  %v1302 = vsel %vm1301, %v1300, 0.0
  %1303 = vadd.xlane.f32.xlu0 %v1302
  %v1304 = vpop.xlane.xlu0 %1303
  %v1305 = vmul.f32 %v1304, %v73
  %v1306 = vsub.f32 %v1300, %v1305
  %v1307 = vmul.f32 %v1306, %v1306
  %v1308 = vsel %vm1301, %v1307, 0.0
  %1309 = vadd.xlane.f32.xlu0 %v1308
  %v1310 = vpop.xlane.xlu0 %1309
  %v1311 = vmul.f32 %v1310, %v73
  %v1312 = vadd.f32 %v1311, 1e-05
  %v1313 = vrsqrt.pop %v1312
  %v1314 = vmul.f32 %v1306, %v1313
  %v1315 = vmul.f32 %v1314, %v54
  %v1316 = vadd.f32 %v1315, %v55
  %v1318 = vsel %vm91, %v1316, 0
  %1320 = vmatprep.subr.mxu0 0.0
  %1321 = vmatpush1.msra.mxu0 %v33
  %1322 = vmatprep.subr.mxu0 0.0
  %1323 = vmatpush1.msra.mxu0 %v34
  %1324 = vmatprep.subr.mxu0 0.0
  %1325 = vmatpush1.msra.mxu0 %v35
  %1326 = vmatprep.subr.mxu0 0.0
  %1327 = vmatpush1.msra.mxu0 %v36
  %1328 = vmatprep.subr.mxu0 0.0
  %1329 = vmatpush1.msra.mxu0 0.0
  %1330 = vmatprep.subr.mxu0 0.0
  %1331 = vmatpush1.msra.mxu0 0.0
  %1332 = vmatprep.subr.mxu0 0.0
  %1333 = vmatpush1.msra.mxu0 0.0
  %1334 = vmatprep.subr.mxu0 0.0
  %1335 = vmatpush1.msra.mxu0 0.0
  %1336 = vmatprep.subr.mxu0 0.0
  %1337 = vmatpush1.msra.mxu0 0.0
  %1338 = vmatprep.subr.mxu0 0.0
  %1339 = vmatpush1.msra.mxu0 0.0
  %1340 = vmatprep.subr.mxu0 0.0
  %1341 = vmatpush1.msra.mxu0 0.0
  %1342 = vmatprep.subr.mxu0 0.0
  %1343 = vmatpush1.msra.mxu0 0.0
  %1344 = vmatprep.subr.mxu0 0.0
  %1345 = vmatpush1.msra.mxu0 0.0
  %1346 = vmatprep.subr.mxu0 0.0
  %1347 = vmatpush1.msra.mxu0 0.0
  %1348 = vmatprep.subr.mxu0 0.0
  %1349 = vmatpush1.msra.mxu0 0.0
  %1350 = vmatprep.subr.mxu0 0.0
  %1351 = vmatpush1.msra.mxu0 0.0
  %1352 = vmatprep.subr.mxu0 0.0
  %1353 = vmatpush1.msra.mxu0 0.0
  %1354 = vmatprep.subr.mxu0 0.0
  %1355 = vmatpush1.msra.mxu0 0.0
  %1356 = vmatprep.subr.mxu0 0.0
  %1357 = vmatpush1.msra.mxu0 0.0
  %1358 = vmatprep.subr.mxu0 0.0
  %1359 = vmatpush1.msra.mxu0 0.0
  %1360 = vmatprep.subr.mxu0 0.0
  %1361 = vmatpush1.msra.mxu0 0.0
  %1362 = vmatprep.subr.mxu0 0.0
  %1363 = vmatpush1.msra.mxu0 0.0
  %1364 = vmatprep.subr.mxu0 0.0
  %1365 = vmatpush1.msra.mxu0 0.0
  %1366 = vmatprep.subr.mxu0 0.0
  %1367 = vmatpush1.msra.mxu0 0.0
  %1368 = vmatprep.subr.mxu0 0.0
  %1369 = vmatpush1.msra.mxu0 0.0
  %1370 = vmatprep.subr.mxu0 0.0
  %1371 = vmatpush1.msra.mxu0 0.0
  %1372 = vmatprep.subr.mxu0 0.0
  %1373 = vmatpush1.msra.mxu0 0.0
  %1374 = vmatprep.subr.mxu0 0.0
  %1375 = vmatpush1.msra.mxu0 0.0
  %1376 = vmatprep.subr.mxu0 0.0
  %1377 = vmatpush1.msra.mxu0 0.0
  %1378 = vmatprep.subr.mxu0 0.0
  %1379 = vmatpush1.msra.mxu0 0.0
  %1380 = vmatprep.subr.mxu0 0.0
  %1381 = vmatpush1.msra.mxu0 0.0
  %1382 = vmatprep.subr.mxu0 0.0
  %1383 = vmatpush1.msra.mxu0 0.0
  %1384 = vmatprep.mubr.f32.mxu0 0.0
  %1385 = vmatmul.mubr.f32.gmra.mrb[0].mxu0 %v1318
  %v1386 = vpop.f32.mrb[0].mxu0
  %v1387 = vadd.f32 %v56, %v1386
  %v1388 = vpop.f32.mrb[0].mxu0
  %1389 = vdwg.mxu0
  %v1390 = vtanh.pop %v1387
  %v1391 = vsel %vm1301, %v1390, 0.0
  %1392 = vadd.xlane.f32.xlu0 %v1391
  %v1393 = vpop.xlane.xlu0 %1392
  %v1394 = vmul.f32 %v1393, %v73
  %v1395 = vsub.f32 %v1390, %v1394
  %v1396 = vmul.f32 %v1395, %v1395
  %v1397 = vsel %vm1301, %v1396, 0.0
  %1398 = vadd.xlane.f32.xlu0 %v1397
  %v1399 = vpop.xlane.xlu0 %1398
  %v1400 = vmul.f32 %v1399, %v73
  %v1401 = vadd.f32 %v1400, 1e-05
  %v1402 = vrsqrt.pop %v1401
  %v1403 = vmul.f32 %v1395, %v1402
  %v1404 = vmul.f32 %v1403, %v57
  %v1405 = vadd.f32 %v1404, %v58
  %1407 = vrot.lane.b32.xlu0 %v1390, 96
  %v1408 = vpop.permute.xlu0 %1407
  %v1410 = vsel %vm1301, %v1408, 0.0
  %1411 = vadd.xlane.f32.xlu0 %v1410
  %v1412 = vpop.xlane.xlu0 %1411
  %v1413 = vmul.f32 %v1412, %v73
  %v1414 = vsub.f32 %v1390, %v1413
  %v1415 = vmul.f32 %v1414, %v1414
  %1417 = vrot.lane.b32.xlu0 %v1415, 96
  %v1418 = vpop.permute.xlu0 %1417
  %v1420 = vsel %vm1301, %v1418, 0.0
  %1421 = vadd.xlane.f32.xlu0 %v1420
  %v1422 = vpop.xlane.xlu0 %1421
  %v1423 = vmul.f32 %v1422, %v73
  %v1424 = vadd.f32 %v1423, 1e-05
  %v1425 = vrsqrt.pop %v1424
  %v1426 = vmul.f32 %v1414, %v1425
  %v1427 = vmul.f32 %v1426, %v57
  %v1428 = vadd.f32 %v1427, %v58
  %v1430 = vsel %vm91, %v1405, 0
  %1432 = vmatprep.subr.mxu0 0.0
  %1433 = vmatpush1.msra.mxu0 %v37
  %1434 = vmatprep.subr.mxu0 0.0
  %1435 = vmatpush1.msra.mxu0 %v38
  %1436 = vmatprep.subr.mxu0 0.0
  %1437 = vmatpush1.msra.mxu0 %v39
  %1438 = vmatprep.subr.mxu0 0.0
  %1439 = vmatpush1.msra.mxu0 %v40
  %1440 = vmatprep.subr.mxu0 0.0
  %1441 = vmatpush1.msra.mxu0 0.0
  %1442 = vmatprep.subr.mxu0 0.0
  %1443 = vmatpush1.msra.mxu0 0.0
  %1444 = vmatprep.subr.mxu0 0.0
  %1445 = vmatpush1.msra.mxu0 0.0
  %1446 = vmatprep.subr.mxu0 0.0
  %1447 = vmatpush1.msra.mxu0 0.0
  %1448 = vmatprep.subr.mxu0 0.0
  %1449 = vmatpush1.msra.mxu0 0.0
  %1450 = vmatprep.subr.mxu0 0.0
  %1451 = vmatpush1.msra.mxu0 0.0
  %1452 = vmatprep.subr.mxu0 0.0
  %1453 = vmatpush1.msra.mxu0 0.0
  %1454 = vmatprep.subr.mxu0 0.0
  %1455 = vmatpush1.msra.mxu0 0.0
  %1456 = vmatprep.subr.mxu0 0.0
  %1457 = vmatpush1.msra.mxu0 0.0
  %1458 = vmatprep.subr.mxu0 0.0
  %1459 = vmatpush1.msra.mxu0 0.0
  %1460 = vmatprep.subr.mxu0 0.0
  %1461 = vmatpush1.msra.mxu0 0.0
  %1462 = vmatprep.subr.mxu0 0.0
  %1463 = vmatpush1.msra.mxu0 0.0
  %1464 = vmatprep.subr.mxu0 0.0
  %1465 = vmatpush1.msra.mxu0 0.0
  %1466 = vmatprep.subr.mxu0 0.0
  %1467 = vmatpush1.msra.mxu0 0.0
  %1468 = vmatprep.subr.mxu0 0.0
  %1469 = vmatpush1.msra.mxu0 0.0
  %1470 = vmatprep.subr.mxu0 0.0
  %1471 = vmatpush1.msra.mxu0 0.0
  %1472 = vmatprep.subr.mxu0 0.0
  %1473 = vmatpush1.msra.mxu0 0.0
  %1474 = vmatprep.subr.mxu0 0.0
  %1475 = vmatpush1.msra.mxu0 0.0
  %1476 = vmatprep.subr.mxu0 0.0
  %1477 = vmatpush1.msra.mxu0 0.0
  %1478 = vmatprep.subr.mxu0 0.0
  %1479 = vmatpush1.msra.mxu0 0.0
  %1480 = vmatprep.subr.mxu0 0.0
  %1481 = vmatpush1.msra.mxu0 0.0
  %1482 = vmatprep.subr.mxu0 0.0
  %1483 = vmatpush1.msra.mxu0 0.0
  %1484 = vmatprep.subr.mxu0 0.0
  %1485 = vmatpush1.msra.mxu0 0.0
  %1486 = vmatprep.subr.mxu0 0.0
  %1487 = vmatpush1.msra.mxu0 0.0
  %1488 = vmatprep.subr.mxu0 0.0
  %1489 = vmatpush1.msra.mxu0 0.0
  %1490 = vmatprep.subr.mxu0 0.0
  %1491 = vmatpush1.msra.mxu0 0.0
  %1492 = vmatprep.subr.mxu0 0.0
  %1493 = vmatpush1.msra.mxu0 0.0
  %1494 = vmatprep.subr.mxu0 0.0
  %1495 = vmatpush1.msra.mxu0 0.0
  %1496 = vmatprep.mubr.f32.mxu0 0.0
  %1497 = vmatmul.mubr.f32.gmra.mrb[0].mxu0 %v1430
  %v1498 = vpop.f32.mrb[0].mxu0
  %v1499 = vadd.f32 %v59, %v1498
  %v1500 = vpop.f32.mrb[0].mxu0
  %1501 = vdwg.mxu0
  %v1502 = vtanh.pop %v1499
  %v1503 = vsel %vm1301, %v1502, 0.0
  %1504 = vadd.xlane.f32.xlu0 %v1503
  %v1505 = vpop.xlane.xlu0 %1504
  %v1506 = vmul.f32 %v1505, %v73
  %v1507 = vsub.f32 %v1502, %v1506
  %v1508 = vmul.f32 %v1507, %v1507
  %v1509 = vsel %vm1301, %v1508, 0.0
  %1510 = vadd.xlane.f32.xlu0 %v1509
  %v1511 = vpop.xlane.xlu0 %1510
  %v1512 = vmul.f32 %v1511, %v73
  %v1513 = vadd.f32 %v1512, 1e-05
  %v1514 = vrsqrt.pop %v1513
  %v1515 = vmul.f32 %v1507, %v1514
  %v1516 = vmul.f32 %v1515, %v60
  %v1517 = vadd.f32 %v1516, %v61
  %1519 = vrot.lane.b32.xlu0 %v1428, 96
  %v1520 = vpop.permute.xlu0 %1519
  %v1521 = vsel %vm91, %v1520, 0
  %1523 = vmatprep.subr.mxu0 0.0
  %1524 = vmatpush1.msra.mxu0 %v41
  %1525 = vmatprep.subr.mxu0 0.0
  %1526 = vmatpush1.msra.mxu0 %v42
  %1527 = vmatprep.subr.mxu0 0.0
  %1528 = vmatpush1.msra.mxu0 %v43
  %1529 = vmatprep.subr.mxu0 0.0
  %1530 = vmatpush1.msra.mxu0 %v44
  %1531 = vmatprep.subr.mxu0 0.0
  %1532 = vmatpush1.msra.mxu0 0.0
  %1533 = vmatprep.subr.mxu0 0.0
  %1534 = vmatpush1.msra.mxu0 0.0
  %1535 = vmatprep.subr.mxu0 0.0
  %1536 = vmatpush1.msra.mxu0 0.0
  %1537 = vmatprep.subr.mxu0 0.0
  %1538 = vmatpush1.msra.mxu0 0.0
  %1539 = vmatprep.subr.mxu0 0.0
  %1540 = vmatpush1.msra.mxu0 0.0
  %1541 = vmatprep.subr.mxu0 0.0
  %1542 = vmatpush1.msra.mxu0 0.0
  %1543 = vmatprep.subr.mxu0 0.0
  %1544 = vmatpush1.msra.mxu0 0.0
  %1545 = vmatprep.subr.mxu0 0.0
  %1546 = vmatpush1.msra.mxu0 0.0
  %1547 = vmatprep.subr.mxu0 0.0
  %1548 = vmatpush1.msra.mxu0 0.0
  %1549 = vmatprep.subr.mxu0 0.0
  %1550 = vmatpush1.msra.mxu0 0.0
  %1551 = vmatprep.subr.mxu0 0.0
  %1552 = vmatpush1.msra.mxu0 0.0
  %1553 = vmatprep.subr.mxu0 0.0
  %1554 = vmatpush1.msra.mxu0 0.0
  %1555 = vmatprep.subr.mxu0 0.0
  %1556 = vmatpush1.msra.mxu0 0.0
  %1557 = vmatprep.subr.mxu0 0.0
  %1558 = vmatpush1.msra.mxu0 0.0
  %1559 = vmatprep.subr.mxu0 0.0
  %1560 = vmatpush1.msra.mxu0 0.0
  %1561 = vmatprep.subr.mxu0 0.0
  %1562 = vmatpush1.msra.mxu0 0.0
  %1563 = vmatprep.subr.mxu0 0.0
  %1564 = vmatpush1.msra.mxu0 0.0
  %1565 = vmatprep.subr.mxu0 0.0
  %1566 = vmatpush1.msra.mxu0 0.0
  %1567 = vmatprep.subr.mxu0 0.0
  %1568 = vmatpush1.msra.mxu0 0.0
  %1569 = vmatprep.subr.mxu0 0.0
  %1570 = vmatpush1.msra.mxu0 0.0
  %1571 = vmatprep.subr.mxu0 0.0
  %1572 = vmatpush1.msra.mxu0 0.0
  %1573 = vmatprep.subr.mxu0 0.0
  %1574 = vmatpush1.msra.mxu0 0.0
  %1575 = vmatprep.subr.mxu0 0.0
  %1576 = vmatpush1.msra.mxu0 0.0
  %1577 = vmatprep.subr.mxu0 0.0
  %1578 = vmatpush1.msra.mxu0 0.0
  %1579 = vmatprep.subr.mxu0 0.0
  %1580 = vmatpush1.msra.mxu0 0.0
  %1581 = vmatprep.subr.mxu0 0.0
  %1582 = vmatpush1.msra.mxu0 0.0
  %1583 = vmatprep.subr.mxu0 0.0
  %1584 = vmatpush1.msra.mxu0 0.0
  %1585 = vmatprep.subr.mxu0 0.0
  %1586 = vmatpush1.msra.mxu0 0.0
  %1587 = vmatprep.mubr.f32.mxu0 0.0
  %1588 = vmatmul.mubr.f32.gmra.mrb[0].mxu0 %v1521
  %v1589 = vpop.f32.mrb[0].mxu0
  %v1590 = vadd.f32 %v62, %v1589
  %v1591 = vpop.f32.mrb[0].mxu0
  %1592 = vdwg.mxu0
  %v1593 = vtanh.pop %v1590
  %v1594 = vsel %vm1301, %v1593, 0.0
  %1595 = vadd.xlane.f32.xlu0 %v1594
  %v1596 = vpop.xlane.xlu0 %1595
  %v1597 = vmul.f32 %v1596, %v73
  %v1598 = vsub.f32 %v1593, %v1597
  %v1599 = vmul.f32 %v1598, %v1598
  %v1600 = vsel %vm1301, %v1599, 0.0
  %1601 = vadd.xlane.f32.xlu0 %v1600
  %v1602 = vpop.xlane.xlu0 %1601
  %v1603 = vmul.f32 %v1602, %v73
  %v1604 = vadd.f32 %v1603, 1e-05
  %v1605 = vrsqrt.pop %v1604
  %v1606 = vmul.f32 %v1598, %v1605
  %v1607 = vmul.f32 %v1606, %v63
  %v1608 = vadd.f32 %v1607, %v64
  %v1610 = vsel %vm91, %v1517, 0
  %1612 = vmatprep.subr.mxu0 0.0
  %1613 = vmatpush1.msra.mxu0 %v45
  %1614 = vmatprep.subr.mxu0 0.0
  %1615 = vmatpush1.msra.mxu0 %v46
  %1616 = vmatprep.subr.mxu0 0.0
  %1617 = vmatpush1.msra.mxu0 %v47
  %1618 = vmatprep.subr.mxu0 0.0
  %1619 = vmatpush1.msra.mxu0 %v48
  %1620 = vmatprep.subr.mxu0 0.0
  %1621 = vmatpush1.msra.mxu0 0.0
  %1622 = vmatprep.subr.mxu0 0.0
  %1623 = vmatpush1.msra.mxu0 0.0
  %1624 = vmatprep.subr.mxu0 0.0
  %1625 = vmatpush1.msra.mxu0 0.0
  %1626 = vmatprep.subr.mxu0 0.0
  %1627 = vmatpush1.msra.mxu0 0.0
  %1628 = vmatprep.subr.mxu0 0.0
  %1629 = vmatpush1.msra.mxu0 0.0
  %1630 = vmatprep.subr.mxu0 0.0
  %1631 = vmatpush1.msra.mxu0 0.0
  %1632 = vmatprep.subr.mxu0 0.0
  %1633 = vmatpush1.msra.mxu0 0.0
  %1634 = vmatprep.subr.mxu0 0.0
  %1635 = vmatpush1.msra.mxu0 0.0
  %1636 = vmatprep.subr.mxu0 0.0
  %1637 = vmatpush1.msra.mxu0 0.0
  %1638 = vmatprep.subr.mxu0 0.0
  %1639 = vmatpush1.msra.mxu0 0.0
  %1640 = vmatprep.subr.mxu0 0.0
  %1641 = vmatpush1.msra.mxu0 0.0
  %1642 = vmatprep.subr.mxu0 0.0
  %1643 = vmatpush1.msra.mxu0 0.0
  %1644 = vmatprep.subr.mxu0 0.0
  %1645 = vmatpush1.msra.mxu0 0.0
  %1646 = vmatprep.subr.mxu0 0.0
  %1647 = vmatpush1.msra.mxu0 0.0
  %1648 = vmatprep.subr.mxu0 0.0
  %1649 = vmatpush1.msra.mxu0 0.0
  %1650 = vmatprep.subr.mxu0 0.0
  %1651 = vmatpush1.msra.mxu0 0.0
  %1652 = vmatprep.subr.mxu0 0.0
  %1653 = vmatpush1.msra.mxu0 0.0
  %1654 = vmatprep.subr.mxu0 0.0
  %1655 = vmatpush1.msra.mxu0 0.0
  %1656 = vmatprep.subr.mxu0 0.0
  %1657 = vmatpush1.msra.mxu0 0.0
  %1658 = vmatprep.subr.mxu0 0.0
  %1659 = vmatpush1.msra.mxu0 0.0
  %1660 = vmatprep.subr.mxu0 0.0
  %1661 = vmatpush1.msra.mxu0 0.0
  %1662 = vmatprep.subr.mxu0 0.0
  %1663 = vmatpush1.msra.mxu0 0.0
  %1664 = vmatprep.subr.mxu0 0.0
  %1665 = vmatpush1.msra.mxu0 0.0
  %1666 = vmatprep.subr.mxu0 0.0
  %1667 = vmatpush1.msra.mxu0 0.0
  %1668 = vmatprep.subr.mxu0 0.0
  %1669 = vmatpush1.msra.mxu0 0.0
  %1670 = vmatprep.subr.mxu0 0.0
  %1671 = vmatpush1.msra.mxu0 0.0
  %1672 = vmatprep.subr.mxu0 0.0
  %1673 = vmatpush1.msra.mxu0 0.0
  %1674 = vmatprep.subr.mxu0 0.0
  %1675 = vmatpush1.msra.mxu0 0.0
  %1676 = vmatprep.mubr.f32.mxu0 0.0
  %1677 = vmatmul.mubr.f32.gmra.mrb[0].mxu0 %v1610
  %v1678 = vpop.f32.mrb[0].mxu0
  %v1679 = vadd.f32 %v65, %v1678
  %v1680 = vpop.f32.mrb[0].mxu0
  %1681 = vdwg.mxu0
  %1682 = vst.msk [vmem:[%s4] sm:$0x1] %vm1301, %v1608
  %1684 = vrot.lane.b32.xlu0 %v1679, 32
  %v1685 = vpop.permute.xlu0 %1684
  %vm1687 = vcmask 262400
  %1688 = vst.msk [vmem:[%s4] sm:$0x1] %vm1687, %v1685
  %v1689 = vld [vmem:[%s0 + $0x8] sm:$0x1f]
  %v1690 = vadd.f32 %v1689, %v17
  %v1691 = vtanh.pop %v1690
  %v1692 = vsel %vm69, %v1691, 0.0
  %1693 = vadd.xlane.f32.xlu0 %v1692
  %v1694 = vpop.xlane.xlu0 %1693
  %v1695 = vmul.f32 %v1694, %v73
  %v1696 = vsub.f32 %v1691, %v1695
  %v1697 = vmul.f32 %v1696, %v1696
  %v1698 = vsel %vm69, %v1697, 0.0
  %1699 = vadd.xlane.f32.xlu0 %v1698
  %v1700 = vpop.xlane.xlu0 %1699
  %v1701 = vmul.f32 %v1700, %v73
  %v1702 = vadd.f32 %v1701, 1e-05
  %v1703 = vrsqrt.pop %v1702
  %v1704 = vmul.f32 %v1696, %v1703
  %v1705 = vmul.f32 %v1704, %v18
  %v1706 = vadd.f32 %v1705, %v19
  %v1707 = vld [vmem:[%s0 + $0xd] sm:$0x1]
  %v1709 = vsel %vm91, %v1706, 0
  %1711 = vmatprep.subr.mxu0 0.0
  %1712 = vmatpush1.msra.mxu0 %v20
  %1713 = vmatprep.subr.mxu0 0.0
  %1714 = vmatpush1.msra.mxu0 %v21
  %1715 = vmatprep.subr.mxu0 0.0
  %1716 = vmatpush1.msra.mxu0 %v22
  %1717 = vmatprep.subr.mxu0 0.0
  %1718 = vmatpush1.msra.mxu0 %v23
  %1719 = vmatprep.subr.mxu0 0.0
  %1720 = vmatpush1.msra.mxu0 0.0
  %1721 = vmatprep.subr.mxu0 0.0
  %1722 = vmatpush1.msra.mxu0 0.0
  %1723 = vmatprep.subr.mxu0 0.0
  %1724 = vmatpush1.msra.mxu0 0.0
  %1725 = vmatprep.subr.mxu0 0.0
  %1726 = vmatpush1.msra.mxu0 0.0
  %1727 = vmatprep.subr.mxu0 0.0
  %1728 = vmatpush1.msra.mxu0 0.0
  %1729 = vmatprep.subr.mxu0 0.0
  %1730 = vmatpush1.msra.mxu0 0.0
  %1731 = vmatprep.subr.mxu0 0.0
  %1732 = vmatpush1.msra.mxu0 0.0
  %1733 = vmatprep.subr.mxu0 0.0
  %1734 = vmatpush1.msra.mxu0 0.0
  %1735 = vmatprep.subr.mxu0 0.0
  %1736 = vmatpush1.msra.mxu0 0.0
  %1737 = vmatprep.subr.mxu0 0.0
  %1738 = vmatpush1.msra.mxu0 0.0
  %1739 = vmatprep.subr.mxu0 0.0
  %1740 = vmatpush1.msra.mxu0 0.0
  %1741 = vmatprep.subr.mxu0 0.0
  %1742 = vmatpush1.msra.mxu0 0.0
  %1743 = vmatprep.subr.mxu0 0.0
  %1744 = vmatpush1.msra.mxu0 0.0
  %1745 = vmatprep.subr.mxu0 0.0
  %1746 = vmatpush1.msra.mxu0 0.0
  %1747 = vmatprep.subr.mxu0 0.0
  %1748 = vmatpush1.msra.mxu0 0.0
  %1749 = vmatprep.subr.mxu0 0.0
  %1750 = vmatpush1.msra.mxu0 0.0
  %1751 = vmatprep.subr.mxu0 0.0
  %1752 = vmatpush1.msra.mxu0 0.0
  %1753 = vmatprep.subr.mxu0 0.0
  %1754 = vmatpush1.msra.mxu0 0.0
  %1755 = vmatprep.subr.mxu0 0.0
  %1756 = vmatpush1.msra.mxu0 0.0
  %1757 = vmatprep.subr.mxu0 0.0
  %1758 = vmatpush1.msra.mxu0 0.0
  %1759 = vmatprep.subr.mxu0 0.0
  %1760 = vmatpush1.msra.mxu0 0.0
  %1761 = vmatprep.subr.mxu0 0.0
  %1762 = vmatpush1.msra.mxu0 0.0
  %1763 = vmatprep.subr.mxu0 0.0
  %1764 = vmatpush1.msra.mxu0 0.0
  %1765 = vmatprep.subr.mxu0 0.0
  %1766 = vmatpush1.msra.mxu0 0.0
  %1767 = vmatprep.subr.mxu0 0.0
  %1768 = vmatpush1.msra.mxu0 0.0
  %1769 = vmatprep.subr.mxu0 0.0
  %1770 = vmatpush1.msra.mxu0 0.0
  %1771 = vmatprep.subr.mxu0 0.0
  %1772 = vmatpush1.msra.mxu0 0.0
  %1773 = vmatprep.subr.mxu0 0.0
  %1774 = vmatpush1.msra.mxu0 0.0
  %1775 = vmatprep.mubr.f32.mxu0 0.0
  %1776 = vmatmul.mubr.f32.gmra.mrb[0].mxu0 %v1709
  %v1777 = vpop.f32.mrb[0].mxu0
  %v1778 = vadd.f32 %v90, %v1777
  %v1779 = vpop.f32.mrb[0].mxu0
  %1780 = vdwg.mxu0
  %1782 = vrot.lane.b32.xlu0 %v1778, 96
  %v1783 = vpop.permute.xlu0 %1782
  %v1784 = vsel %vm168, %v1778, 0
  %v1786 = vsel %vm168, %v1783, 0
  %1788 = vmatprep.subr.mxu0 0.0
  %1789 = vmatpush1.xpose.msra.mxu0 %v1786
  %1790 = vmatprep.subr.mxu0 0.0
  %1791 = vmatpush1.xpose.msra.mxu0 0.0
  %1792 = vmatprep.subr.mxu0 0.0
  %1793 = vmatpush1.xpose.msra.mxu0 0.0
  %1794 = vmatprep.subr.mxu0 0.0
  %1795 = vmatpush1.xpose.msra.mxu0 0.0
  %1796 = vmatprep.subr.mxu0 0.0
  %1797 = vmatpush1.xpose.msra.mxu0 0.0
  %1798 = vmatprep.subr.mxu0 0.0
  %1799 = vmatpush1.xpose.msra.mxu0 0.0
  %1800 = vmatprep.subr.mxu0 0.0
  %1801 = vmatpush1.xpose.msra.mxu0 0.0
  %1802 = vmatprep.subr.mxu0 0.0
  %1803 = vmatpush1.xpose.msra.mxu0 0.0
  %1804 = vmatprep.subr.mxu0 0.0
  %1805 = vmatpush1.xpose.msra.mxu0 0.0
  %1806 = vmatprep.subr.mxu0 0.0
  %1807 = vmatpush1.xpose.msra.mxu0 0.0
  %1808 = vmatprep.subr.mxu0 0.0
  %1809 = vmatpush1.xpose.msra.mxu0 0.0
  %1810 = vmatprep.subr.mxu0 0.0
  %1811 = vmatpush1.xpose.msra.mxu0 0.0
  %1812 = vmatprep.subr.mxu0 0.0
  %1813 = vmatpush1.xpose.msra.mxu0 0.0
  %1814 = vmatprep.subr.mxu0 0.0
  %1815 = vmatpush1.xpose.msra.mxu0 0.0
  %1816 = vmatprep.subr.mxu0 0.0
  %1817 = vmatpush1.xpose.msra.mxu0 0.0
  %1818 = vmatprep.subr.mxu0 0.0
  %1819 = vmatpush1.xpose.msra.mxu0 0.0
  %1820 = vmatprep.subr.mxu0 0.0
  %1821 = vmatpush1.xpose.msra.mxu0 0.0
  %1822 = vmatprep.subr.mxu0 0.0
  %1823 = vmatpush1.xpose.msra.mxu0 0.0
  %1824 = vmatprep.subr.mxu0 0.0
  %1825 = vmatpush1.xpose.msra.mxu0 0.0
  %1826 = vmatprep.subr.mxu0 0.0
  %1827 = vmatpush1.xpose.msra.mxu0 0.0
  %1828 = vmatprep.subr.mxu0 0.0
  %1829 = vmatpush1.xpose.msra.mxu0 0.0
  %1830 = vmatprep.subr.mxu0 0.0
  %1831 = vmatpush1.xpose.msra.mxu0 0.0
  %1832 = vmatprep.subr.mxu0 0.0
  %1833 = vmatpush1.xpose.msra.mxu0 0.0
  %1834 = vmatprep.subr.mxu0 0.0
  %1835 = vmatpush1.xpose.msra.mxu0 0.0
  %1836 = vmatprep.subr.mxu0 0.0
  %1837 = vmatpush1.xpose.msra.mxu0 0.0
  %1838 = vmatprep.subr.mxu0 0.0
  %1839 = vmatpush1.xpose.msra.mxu0 0.0
  %1840 = vmatprep.subr.mxu0 0.0
  %1841 = vmatpush1.xpose.msra.mxu0 0.0
  %1842 = vmatprep.subr.mxu0 0.0
  %1843 = vmatpush1.xpose.msra.mxu0 0.0
  %1844 = vmatprep.subr.mxu0 0.0
  %1845 = vmatpush1.xpose.msra.mxu0 0.0
  %1846 = vmatprep.subr.mxu0 0.0
  %1847 = vmatpush1.xpose.msra.mxu0 0.0
  %1848 = vmatprep.subr.mxu0 0.0
  %1849 = vmatpush1.xpose.msra.mxu0 0.0
  %1850 = vmatprep.subr.mxu0 0.0
  %1851 = vmatpush1.xpose.msra.mxu0 0.0
  %1852 = vmatprep.mubr.f32.mxu0 0.0
  %1853 = vmatmul.mubr.f32.gmra.mrb[0].mxu0 %v1784
  %v1854 = vpop.f32.mrb[0].mxu0
  %v1855 = vadd.f32 0.0, %v1854
  %v1856 = vpop.f32.mrb[0].mxu0
  %1857 = vdwg.mxu0
  %v1858 = vmul.f32 %v1855, 0.35355338
  %v1859 = vmul.f32 %v1858, 1.442695
  %v1860 = vpow.pop %v1859
  %v1861 = vsel %vm246, %v1860, 0.0
  %1862 = vadd.xlane.f32.xlu0 %v1861
  %v1863 = vpop.xlane.xlu0 %1862
  %v1864 = vrcp.pop %v1863
  %v1865 = vmul.f32 %v1860, %v1864
  %1866 = vrot.lane.b32.xlu0 %v1778, 64
  %v1867 = vpop.permute.xlu0 %1866
  %v1869 = vsel %vm254, %v1865, 0
  %v1871 = vsel %vm258, %v1867, 0
  %1873 = vmatprep.subr.mxu0 0.0
  %1874 = vmatpush1.msra.mxu0 %v1871
  %1875 = vmatprep.subr.mxu0 0.0
  %1876 = vmatpush1.msra.mxu0 0.0
  %1877 = vmatprep.subr.mxu0 0.0
  %1878 = vmatpush1.msra.mxu0 0.0
  %1879 = vmatprep.subr.mxu0 0.0
  %1880 = vmatpush1.msra.mxu0 0.0
  %1881 = vmatprep.subr.mxu0 0.0
  %1882 = vmatpush1.msra.mxu0 0.0
  %1883 = vmatprep.subr.mxu0 0.0
  %1884 = vmatpush1.msra.mxu0 0.0
  %1885 = vmatprep.subr.mxu0 0.0
  %1886 = vmatpush1.msra.mxu0 0.0
  %1887 = vmatprep.subr.mxu0 0.0
  %1888 = vmatpush1.msra.mxu0 0.0
  %1889 = vmatprep.subr.mxu0 0.0
  %1890 = vmatpush1.msra.mxu0 0.0
  %1891 = vmatprep.subr.mxu0 0.0
  %1892 = vmatpush1.msra.mxu0 0.0
  %1893 = vmatprep.subr.mxu0 0.0
  %1894 = vmatpush1.msra.mxu0 0.0
  %1895 = vmatprep.subr.mxu0 0.0
  %1896 = vmatpush1.msra.mxu0 0.0
  %1897 = vmatprep.subr.mxu0 0.0
  %1898 = vmatpush1.msra.mxu0 0.0
  %1899 = vmatprep.subr.mxu0 0.0
  %1900 = vmatpush1.msra.mxu0 0.0
  %1901 = vmatprep.subr.mxu0 0.0
  %1902 = vmatpush1.msra.mxu0 0.0
  %1903 = vmatprep.subr.mxu0 0.0
  %1904 = vmatpush1.msra.mxu0 0.0
  %1905 = vmatprep.subr.mxu0 0.0
  %1906 = vmatpush1.msra.mxu0 0.0
  %1907 = vmatprep.subr.mxu0 0.0
  %1908 = vmatpush1.msra.mxu0 0.0
  %1909 = vmatprep.subr.mxu0 0.0
  %1910 = vmatpush1.msra.mxu0 0.0
  %1911 = vmatprep.subr.mxu0 0.0
  %1912 = vmatpush1.msra.mxu0 0.0
  %1913 = vmatprep.subr.mxu0 0.0
  %1914 = vmatpush1.msra.mxu0 0.0
  %1915 = vmatprep.subr.mxu0 0.0
  %1916 = vmatpush1.msra.mxu0 0.0
  %1917 = vmatprep.subr.mxu0 0.0
  %1918 = vmatpush1.msra.mxu0 0.0
  %1919 = vmatprep.subr.mxu0 0.0
  %1920 = vmatpush1.msra.mxu0 0.0
  %1921 = vmatprep.subr.mxu0 0.0
  %1922 = vmatpush1.msra.mxu0 0.0
  %1923 = vmatprep.subr.mxu0 0.0
  %1924 = vmatpush1.msra.mxu0 0.0
  %1925 = vmatprep.subr.mxu0 0.0
  %1926 = vmatpush1.msra.mxu0 0.0
  %1927 = vmatprep.subr.mxu0 0.0
  %1928 = vmatpush1.msra.mxu0 0.0
  %1929 = vmatprep.subr.mxu0 0.0
  %1930 = vmatpush1.msra.mxu0 0.0
  %1931 = vmatprep.subr.mxu0 0.0
  %1932 = vmatpush1.msra.mxu0 0.0
  %1933 = vmatprep.subr.mxu0 0.0
  %1934 = vmatpush1.msra.mxu0 0.0
  %1935 = vmatprep.subr.mxu0 0.0
  %1936 = vmatpush1.msra.mxu0 0.0
  %1937 = vmatprep.mubr.f32.mxu0 0.0
  %1938 = vmatmul.mubr.f32.gmra.mrb[0].mxu0 %v1869
  %v1939 = vpop.f32.mrb[0].mxu0
  %v1940 = vadd.f32 0.0, %v1939
  %v1941 = vpop.f32.mrb[0].mxu0
  %1942 = vdwg.mxu0
  %1943 = vrot.lane.b32.xlu0 %v1778, 120
  %v1944 = vpop.permute.xlu0 %1943
  %1945 = vrot.lane.b32.xlu0 %v1778, 88
  %v1946 = vpop.permute.xlu0 %1945
  %v1947 = vsel %vm168, %v1944, 0
  %v1949 = vsel %vm168, %v1946, 0
  %1951 = vmatprep.subr.mxu0 0.0
  %1952 = vmatpush1.xpose.msra.mxu0 %v1949
  %1953 = vmatprep.subr.mxu0 0.0
  %1954 = vmatpush1.xpose.msra.mxu0 0.0
  %1955 = vmatprep.subr.mxu0 0.0
  %1956 = vmatpush1.xpose.msra.mxu0 0.0
  %1957 = vmatprep.subr.mxu0 0.0
  %1958 = vmatpush1.xpose.msra.mxu0 0.0
  %1959 = vmatprep.subr.mxu0 0.0
  %1960 = vmatpush1.xpose.msra.mxu0 0.0
  %1961 = vmatprep.subr.mxu0 0.0
  %1962 = vmatpush1.xpose.msra.mxu0 0.0
  %1963 = vmatprep.subr.mxu0 0.0
  %1964 = vmatpush1.xpose.msra.mxu0 0.0
  %1965 = vmatprep.subr.mxu0 0.0
  %1966 = vmatpush1.xpose.msra.mxu0 0.0
  %1967 = vmatprep.subr.mxu0 0.0
  %1968 = vmatpush1.xpose.msra.mxu0 0.0
  %1969 = vmatprep.subr.mxu0 0.0
  %1970 = vmatpush1.xpose.msra.mxu0 0.0
  %1971 = vmatprep.subr.mxu0 0.0
  %1972 = vmatpush1.xpose.msra.mxu0 0.0
  %1973 = vmatprep.subr.mxu0 0.0
  %1974 = vmatpush1.xpose.msra.mxu0 0.0
  %1975 = vmatprep.subr.mxu0 0.0
  %1976 = vmatpush1.xpose.msra.mxu0 0.0
  %1977 = vmatprep.subr.mxu0 0.0
  %1978 = vmatpush1.xpose.msra.mxu0 0.0
  %1979 = vmatprep.subr.mxu0 0.0
  %1980 = vmatpush1.xpose.msra.mxu0 0.0
  %1981 = vmatprep.subr.mxu0 0.0
  %1982 = vmatpush1.xpose.msra.mxu0 0.0
  %1983 = vmatprep.subr.mxu0 0.0
  %1984 = vmatpush1.xpose.msra.mxu0 0.0
  %1985 = vmatprep.subr.mxu0 0.0
  %1986 = vmatpush1.xpose.msra.mxu0 0.0
  %1987 = vmatprep.subr.mxu0 0.0
  %1988 = vmatpush1.xpose.msra.mxu0 0.0
  %1989 = vmatprep.subr.mxu0 0.0
  %1990 = vmatpush1.xpose.msra.mxu0 0.0
  %1991 = vmatprep.subr.mxu0 0.0
  %1992 = vmatpush1.xpose.msra.mxu0 0.0
  %1993 = vmatprep.subr.mxu0 0.0
  %1994 = vmatpush1.xpose.msra.mxu0 0.0
  %1995 = vmatprep.subr.mxu0 0.0
  %1996 = vmatpush1.xpose.msra.mxu0 0.0
  %1997 = vmatprep.subr.mxu0 0.0
  %1998 = vmatpush1.xpose.msra.mxu0 0.0
  %1999 = vmatprep.subr.mxu0 0.0
  %2000 = vmatpush1.xpose.msra.mxu0 0.0
  %2001 = vmatprep.subr.mxu0 0.0
  %2002 = vmatpush1.xpose.msra.mxu0 0.0
  %2003 = vmatprep.subr.mxu0 0.0
  %2004 = vmatpush1.xpose.msra.mxu0 0.0
  %2005 = vmatprep.subr.mxu0 0.0
  %2006 = vmatpush1.xpose.msra.mxu0 0.0
  %2007 = vmatprep.subr.mxu0 0.0
  %2008 = vmatpush1.xpose.msra.mxu0 0.0
  %2009 = vmatprep.subr.mxu0 0.0
  %2010 = vmatpush1.xpose.msra.mxu0 0.0
  %2011 = vmatprep.subr.mxu0 0.0
  %2012 = vmatpush1.xpose.msra.mxu0 0.0
  %2013 = vmatprep.subr.mxu0 0.0
  %2014 = vmatpush1.xpose.msra.mxu0 0.0
  %2015 = vmatprep.mubr.f32.mxu0 0.0
  %2016 = vmatmul.mubr.f32.gmra.mrb[0].mxu0 %v1947
  %v2017 = vpop.f32.mrb[0].mxu0
  %v2018 = vadd.f32 0.0, %v2017
  %v2019 = vpop.f32.mrb[0].mxu0
  %2020 = vdwg.mxu0
  %v2021 = vmul.f32 %v2018, 0.35355338
  %v2022 = vmul.f32 %v2021, 1.442695
  %v2023 = vpow.pop %v2022
  %v2024 = vsel %vm246, %v2023, 0.0
  %2025 = vadd.xlane.f32.xlu0 %v2024
  %v2026 = vpop.xlane.xlu0 %2025
  %v2027 = vrcp.pop %v2026
  %v2028 = vmul.f32 %v2023, %v2027
  %2029 = vrot.lane.b32.xlu0 %v1778, 56
  %v2030 = vpop.permute.xlu0 %2029
  %v2032 = vsel %vm254, %v2028, 0
  %v2034 = vsel %vm258, %v2030, 0
  %2036 = vmatprep.subr.mxu0 0.0
  %2037 = vmatpush1.msra.mxu0 %v2034
  %2038 = vmatprep.subr.mxu0 0.0
  %2039 = vmatpush1.msra.mxu0 0.0
  %2040 = vmatprep.subr.mxu0 0.0
  %2041 = vmatpush1.msra.mxu0 0.0
  %2042 = vmatprep.subr.mxu0 0.0
  %2043 = vmatpush1.msra.mxu0 0.0
  %2044 = vmatprep.subr.mxu0 0.0
  %2045 = vmatpush1.msra.mxu0 0.0
  %2046 = vmatprep.subr.mxu0 0.0
  %2047 = vmatpush1.msra.mxu0 0.0
  %2048 = vmatprep.subr.mxu0 0.0
  %2049 = vmatpush1.msra.mxu0 0.0
  %2050 = vmatprep.subr.mxu0 0.0
  %2051 = vmatpush1.msra.mxu0 0.0
  %2052 = vmatprep.subr.mxu0 0.0
  %2053 = vmatpush1.msra.mxu0 0.0
  %2054 = vmatprep.subr.mxu0 0.0
  %2055 = vmatpush1.msra.mxu0 0.0
  %2056 = vmatprep.subr.mxu0 0.0
  %2057 = vmatpush1.msra.mxu0 0.0
  %2058 = vmatprep.subr.mxu0 0.0
  %2059 = vmatpush1.msra.mxu0 0.0
  %2060 = vmatprep.subr.mxu0 0.0
  %2061 = vmatpush1.msra.mxu0 0.0
  %2062 = vmatprep.subr.mxu0 0.0
  %2063 = vmatpush1.msra.mxu0 0.0
  %2064 = vmatprep.subr.mxu0 0.0
  %2065 = vmatpush1.msra.mxu0 0.0
  %2066 = vmatprep.subr.mxu0 0.0
  %2067 = vmatpush1.msra.mxu0 0.0
  %2068 = vmatprep.subr.mxu0 0.0
  %2069 = vmatpush1.msra.mxu0 0.0
  %2070 = vmatprep.subr.mxu0 0.0
  %2071 = vmatpush1.msra.mxu0 0.0
  %2072 = vmatprep.subr.mxu0 0.0
  %2073 = vmatpush1.msra.mxu0 0.0
  %2074 = vmatprep.subr.mxu0 0.0
  %2075 = vmatpush1.msra.mxu0 0.0
  %2076 = vmatprep.subr.mxu0 0.0
  %2077 = vmatpush1.msra.mxu0 0.0
  %2078 = vmatprep.subr.mxu0 0.0
  %2079 = vmatpush1.msra.mxu0 0.0
  %2080 = vmatprep.subr.mxu0 0.0
  %2081 = vmatpush1.msra.mxu0 0.0
  %2082 = vmatprep.subr.mxu0 0.0
  %2083 = vmatpush1.msra.mxu0 0.0
  %2084 = vmatprep.subr.mxu0 0.0
  %2085 = vmatpush1.msra.mxu0 0.0
  %2086 = vmatprep.subr.mxu0 0.0
  %2087 = vmatpush1.msra.mxu0 0.0
  %2088 = vmatprep.subr.mxu0 0.0
  %2089 = vmatpush1.msra.mxu0 0.0
  %2090 = vmatprep.subr.mxu0 0.0
  %2091 = vmatpush1.msra.mxu0 0.0
  %2092 = vmatprep.subr.mxu0 0.0
  %2093 = vmatpush1.msra.mxu0 0.0
  %2094 = vmatprep.subr.mxu0 0.0
  %2095 = vmatpush1.msra.mxu0 0.0
  %2096 = vmatprep.subr.mxu0 0.0
  %2097 = vmatpush1.msra.mxu0 0.0
  %2098 = vmatprep.subr.mxu0 0.0
  %2099 = vmatpush1.msra.mxu0 0.0
  %2100 = vmatprep.mubr.f32.mxu0 0.0
  %2101 = vmatmul.mubr.f32.gmra.mrb[0].mxu0 %v2032
  %v2102 = vpop.f32.mrb[0].mxu0
  %v2103 = vadd.f32 0.0, %v2102
  %v2104 = vpop.f32.mrb[0].mxu0
  %2105 = vdwg.mxu0
  %v2107 = vsel %vm168, %v2103, 0
  %2109 = vmatprep.subr.mxu0 0.0
  %2110 = vmatpush1.msra.mxu0 %v25
  %2111 = vmatprep.subr.mxu0 0.0
  %2112 = vmatpush1.msra.mxu0 0.0
  %2113 = vmatprep.subr.mxu0 0.0
  %2114 = vmatpush1.msra.mxu0 0.0
  %2115 = vmatprep.subr.mxu0 0.0
  %2116 = vmatpush1.msra.mxu0 0.0
  %2117 = vmatprep.subr.mxu0 0.0
  %2118 = vmatpush1.msra.mxu0 0.0
  %2119 = vmatprep.subr.mxu0 0.0
  %2120 = vmatpush1.msra.mxu0 0.0
  %2121 = vmatprep.subr.mxu0 0.0
  %2122 = vmatpush1.msra.mxu0 0.0
  %2123 = vmatprep.subr.mxu0 0.0
  %2124 = vmatpush1.msra.mxu0 0.0
  %2125 = vmatprep.subr.mxu0 0.0
  %2126 = vmatpush1.msra.mxu0 0.0
  %2127 = vmatprep.subr.mxu0 0.0
  %2128 = vmatpush1.msra.mxu0 0.0
  %2129 = vmatprep.subr.mxu0 0.0
  %2130 = vmatpush1.msra.mxu0 0.0
  %2131 = vmatprep.subr.mxu0 0.0
  %2132 = vmatpush1.msra.mxu0 0.0
  %2133 = vmatprep.subr.mxu0 0.0
  %2134 = vmatpush1.msra.mxu0 0.0
  %2135 = vmatprep.subr.mxu0 0.0
  %2136 = vmatpush1.msra.mxu0 0.0
  %2137 = vmatprep.subr.mxu0 0.0
  %2138 = vmatpush1.msra.mxu0 0.0
  %2139 = vmatprep.subr.mxu0 0.0
  %2140 = vmatpush1.msra.mxu0 0.0
  %2141 = vmatprep.subr.mxu0 0.0
  %2142 = vmatpush1.msra.mxu0 0.0
  %2143 = vmatprep.subr.mxu0 0.0
  %2144 = vmatpush1.msra.mxu0 0.0
  %2145 = vmatprep.subr.mxu0 0.0
  %2146 = vmatpush1.msra.mxu0 0.0
  %2147 = vmatprep.subr.mxu0 0.0
  %2148 = vmatpush1.msra.mxu0 0.0
  %2149 = vmatprep.subr.mxu0 0.0
  %2150 = vmatpush1.msra.mxu0 0.0
  %2151 = vmatprep.subr.mxu0 0.0
  %2152 = vmatpush1.msra.mxu0 0.0
  %2153 = vmatprep.subr.mxu0 0.0
  %2154 = vmatpush1.msra.mxu0 0.0
  %2155 = vmatprep.subr.mxu0 0.0
  %2156 = vmatpush1.msra.mxu0 0.0
  %2157 = vmatprep.subr.mxu0 0.0
  %2158 = vmatpush1.msra.mxu0 0.0
  %2159 = vmatprep.subr.mxu0 0.0
  %2160 = vmatpush1.msra.mxu0 0.0
  %2161 = vmatprep.subr.mxu0 0.0
  %2162 = vmatpush1.msra.mxu0 0.0
  %2163 = vmatprep.subr.mxu0 0.0
  %2164 = vmatpush1.msra.mxu0 0.0
  %2165 = vmatprep.subr.mxu0 0.0
  %2166 = vmatpush1.msra.mxu0 0.0
  %2167 = vmatprep.subr.mxu0 0.0
  %2168 = vmatpush1.msra.mxu0 0.0
  %2169 = vmatprep.subr.mxu0 0.0
  %2170 = vmatpush1.msra.mxu0 0.0
  %2171 = vmatprep.subr.mxu0 0.0
  %2172 = vmatpush1.msra.mxu0 0.0
  %2173 = vmatprep.mubr.f32.mxu0 0.0
  %2174 = vmatmul.mubr.f32.gmra.mrb[0].mxu0 %v2107
  %v2175 = vpop.f32.mrb[0].mxu0
  %v2176 = vadd.f32 0.0, %v2175
  %v2177 = vpop.f32.mrb[0].mxu0
  %2178 = vdwg.mxu0
  %v2180 = vsel %vm168, %v1940, 0
  %2182 = vmatprep.subr.mxu0 0.0
  %2183 = vmatpush1.msra.mxu0 %v24
  %2184 = vmatprep.subr.mxu0 0.0
  %2185 = vmatpush1.msra.mxu0 0.0
  %2186 = vmatprep.subr.mxu0 0.0
  %2187 = vmatpush1.msra.mxu0 0.0
  %2188 = vmatprep.subr.mxu0 0.0
  %2189 = vmatpush1.msra.mxu0 0.0
  %2190 = vmatprep.subr.mxu0 0.0
  %2191 = vmatpush1.msra.mxu0 0.0
  %2192 = vmatprep.subr.mxu0 0.0
  %2193 = vmatpush1.msra.mxu0 0.0
  %2194 = vmatprep.subr.mxu0 0.0
  %2195 = vmatpush1.msra.mxu0 0.0
  %2196 = vmatprep.subr.mxu0 0.0
  %2197 = vmatpush1.msra.mxu0 0.0
  %2198 = vmatprep.subr.mxu0 0.0
  %2199 = vmatpush1.msra.mxu0 0.0
  %2200 = vmatprep.subr.mxu0 0.0
  %2201 = vmatpush1.msra.mxu0 0.0
  %2202 = vmatprep.subr.mxu0 0.0
  %2203 = vmatpush1.msra.mxu0 0.0
  %2204 = vmatprep.subr.mxu0 0.0
  %2205 = vmatpush1.msra.mxu0 0.0
  %2206 = vmatprep.subr.mxu0 0.0
  %2207 = vmatpush1.msra.mxu0 0.0
  %2208 = vmatprep.subr.mxu0 0.0
  %2209 = vmatpush1.msra.mxu0 0.0
  %2210 = vmatprep.subr.mxu0 0.0
  %2211 = vmatpush1.msra.mxu0 0.0
  %2212 = vmatprep.subr.mxu0 0.0
  %2213 = vmatpush1.msra.mxu0 0.0
  %2214 = vmatprep.subr.mxu0 0.0
  %2215 = vmatpush1.msra.mxu0 0.0
  %2216 = vmatprep.subr.mxu0 0.0
  %2217 = vmatpush1.msra.mxu0 0.0
  %2218 = vmatprep.subr.mxu0 0.0
  %2219 = vmatpush1.msra.mxu0 0.0
  %2220 = vmatprep.subr.mxu0 0.0
  %2221 = vmatpush1.msra.mxu0 0.0
  %2222 = vmatprep.subr.mxu0 0.0
  %2223 = vmatpush1.msra.mxu0 0.0
  %2224 = vmatprep.subr.mxu0 0.0
  %2225 = vmatpush1.msra.mxu0 0.0
  %2226 = vmatprep.subr.mxu0 0.0
  %2227 = vmatpush1.msra.mxu0 0.0
  %2228 = vmatprep.subr.mxu0 0.0
  %2229 = vmatpush1.msra.mxu0 0.0
  %2230 = vmatprep.subr.mxu0 0.0
  %2231 = vmatpush1.msra.mxu0 0.0
  %2232 = vmatprep.subr.mxu0 0.0
  %2233 = vmatpush1.msra.mxu0 0.0
  %2234 = vmatprep.subr.mxu0 0.0
  %2235 = vmatpush1.msra.mxu0 0.0
  %2236 = vmatprep.subr.mxu0 0.0
  %2237 = vmatpush1.msra.mxu0 0.0
  %2238 = vmatprep.subr.mxu0 0.0
  %2239 = vmatpush1.msra.mxu0 0.0
  %2240 = vmatprep.subr.mxu0 0.0
  %2241 = vmatpush1.msra.mxu0 0.0
  %2242 = vmatprep.subr.mxu0 0.0
  %2243 = vmatpush1.msra.mxu0 0.0
  %2244 = vmatprep.subr.mxu0 0.0
  %2245 = vmatpush1.msra.mxu0 0.0
  %2246 = vmatprep.mubr.f32.mxu0 0.0
  %2247 = vmatmul.mubr.f32.gmra.mrb[0].mxu0 %v2180
  %v2248 = vpop.f32.mrb[0].mxu0
  %v2249 = vadd.f32 %v2176, %v2248
  %v2250 = vpop.f32.mrb[0].mxu0
  %2251 = vdwg.mxu0
  %2252 = vrot.lane.b32.xlu0 %v1778, 112
  %v2253 = vpop.permute.xlu0 %2252
  %2254 = vrot.lane.b32.xlu0 %v1778, 80
  %v2255 = vpop.permute.xlu0 %2254
  %v2256 = vsel %vm168, %v2253, 0
  %v2258 = vsel %vm168, %v2255, 0
  %2260 = vmatprep.subr.mxu0 0.0
  %2261 = vmatpush1.xpose.msra.mxu0 %v2258
  %2262 = vmatprep.subr.mxu0 0.0
  %2263 = vmatpush1.xpose.msra.mxu0 0.0
  %2264 = vmatprep.subr.mxu0 0.0
  %2265 = vmatpush1.xpose.msra.mxu0 0.0
  %2266 = vmatprep.subr.mxu0 0.0
  %2267 = vmatpush1.xpose.msra.mxu0 0.0
  %2268 = vmatprep.subr.mxu0 0.0
  %2269 = vmatpush1.xpose.msra.mxu0 0.0
  %2270 = vmatprep.subr.mxu0 0.0
  %2271 = vmatpush1.xpose.msra.mxu0 0.0
  %2272 = vmatprep.subr.mxu0 0.0
  %2273 = vmatpush1.xpose.msra.mxu0 0.0
  %2274 = vmatprep.subr.mxu0 0.0
  %2275 = vmatpush1.xpose.msra.mxu0 0.0
  %2276 = vmatprep.subr.mxu0 0.0
  %2277 = vmatpush1.xpose.msra.mxu0 0.0
  %2278 = vmatprep.subr.mxu0 0.0
  %2279 = vmatpush1.xpose.msra.mxu0 0.0
  %2280 = vmatprep.subr.mxu0 0.0
  %2281 = vmatpush1.xpose.msra.mxu0 0.0
  %2282 = vmatprep.subr.mxu0 0.0
  %2283 = vmatpush1.xpose.msra.mxu0 0.0
  %2284 = vmatprep.subr.mxu0 0.0
  %2285 = vmatpush1.xpose.msra.mxu0 0.0
  %2286 = vmatprep.subr.mxu0 0.0
  %2287 = vmatpush1.xpose.msra.mxu0 0.0
  %2288 = vmatprep.subr.mxu0 0.0
  %2289 = vmatpush1.xpose.msra.mxu0 0.0
  %2290 = vmatprep.subr.mxu0 0.0
  %2291 = vmatpush1.xpose.msra.mxu0 0.0
  %2292 = vmatprep.subr.mxu0 0.0
  %2293 = vmatpush1.xpose.msra.mxu0 0.0
  %2294 = vmatprep.subr.mxu0 0.0
  %2295 = vmatpush1.xpose.msra.mxu0 0.0
  %2296 = vmatprep.subr.mxu0 0.0
  %2297 = vmatpush1.xpose.msra.mxu0 0.0
  %2298 = vmatprep.subr.mxu0 0.0
  %2299 = vmatpush1.xpose.msra.mxu0 0.0
  %2300 = vmatprep.subr.mxu0 0.0
  %2301 = vmatpush1.xpose.msra.mxu0 0.0
  %2302 = vmatprep.subr.mxu0 0.0
  %2303 = vmatpush1.xpose.msra.mxu0 0.0
  %2304 = vmatprep.subr.mxu0 0.0
  %2305 = vmatpush1.xpose.msra.mxu0 0.0
  %2306 = vmatprep.subr.mxu0 0.0
  %2307 = vmatpush1.xpose.msra.mxu0 0.0
  %2308 = vmatprep.subr.mxu0 0.0
  %2309 = vmatpush1.xpose.msra.mxu0 0.0
  %2310 = vmatprep.subr.mxu0 0.0
  %2311 = vmatpush1.xpose.msra.mxu0 0.0
  %2312 = vmatprep.subr.mxu0 0.0
  %2313 = vmatpush1.xpose.msra.mxu0 0.0
  %2314 = vmatprep.subr.mxu0 0.0
  %2315 = vmatpush1.xpose.msra.mxu0 0.0
  %2316 = vmatprep.subr.mxu0 0.0
  %2317 = vmatpush1.xpose.msra.mxu0 0.0
  %2318 = vmatprep.subr.mxu0 0.0
  %2319 = vmatpush1.xpose.msra.mxu0 0.0
  %2320 = vmatprep.subr.mxu0 0.0
  %2321 = vmatpush1.xpose.msra.mxu0 0.0
  %2322 = vmatprep.subr.mxu0 0.0
  %2323 = vmatpush1.xpose.msra.mxu0 0.0
  %2324 = vmatprep.mubr.f32.mxu0 0.0
  %2325 = vmatmul.mubr.f32.gmra.mrb[0].mxu0 %v2256
  %v2326 = vpop.f32.mrb[0].mxu0
  %v2327 = vadd.f32 0.0, %v2326
  %v2328 = vpop.f32.mrb[0].mxu0
  %2329 = vdwg.mxu0
  %v2330 = vmul.f32 %v2327, 0.35355338
  %v2331 = vmul.f32 %v2330, 1.442695
  %v2332 = vpow.pop %v2331
  %v2333 = vsel %vm246, %v2332, 0.0
  %2334 = vadd.xlane.f32.xlu0 %v2333
  %v2335 = vpop.xlane.xlu0 %2334
  %v2336 = vrcp.pop %v2335
  %v2337 = vmul.f32 %v2332, %v2336
  %2338 = vrot.lane.b32.xlu0 %v1778, 48
  %v2339 = vpop.permute.xlu0 %2338
  %v2341 = vsel %vm254, %v2337, 0
  %v2343 = vsel %vm258, %v2339, 0
  %2345 = vmatprep.subr.mxu0 0.0
  %2346 = vmatpush1.msra.mxu0 %v2343
  %2347 = vmatprep.subr.mxu0 0.0
  %2348 = vmatpush1.msra.mxu0 0.0
  %2349 = vmatprep.subr.mxu0 0.0
  %2350 = vmatpush1.msra.mxu0 0.0
  %2351 = vmatprep.subr.mxu0 0.0
  %2352 = vmatpush1.msra.mxu0 0.0
  %2353 = vmatprep.subr.mxu0 0.0
  %2354 = vmatpush1.msra.mxu0 0.0
  %2355 = vmatprep.subr.mxu0 0.0
  %2356 = vmatpush1.msra.mxu0 0.0
  %2357 = vmatprep.subr.mxu0 0.0
  %2358 = vmatpush1.msra.mxu0 0.0
  %2359 = vmatprep.subr.mxu0 0.0
  %2360 = vmatpush1.msra.mxu0 0.0
  %2361 = vmatprep.subr.mxu0 0.0
  %2362 = vmatpush1.msra.mxu0 0.0
  %2363 = vmatprep.subr.mxu0 0.0
  %2364 = vmatpush1.msra.mxu0 0.0
  %2365 = vmatprep.subr.mxu0 0.0
  %2366 = vmatpush1.msra.mxu0 0.0
  %2367 = vmatprep.subr.mxu0 0.0
  %2368 = vmatpush1.msra.mxu0 0.0
  %2369 = vmatprep.subr.mxu0 0.0
  %2370 = vmatpush1.msra.mxu0 0.0
  %2371 = vmatprep.subr.mxu0 0.0
  %2372 = vmatpush1.msra.mxu0 0.0
  %2373 = vmatprep.subr.mxu0 0.0
  %2374 = vmatpush1.msra.mxu0 0.0
  %2375 = vmatprep.subr.mxu0 0.0
  %2376 = vmatpush1.msra.mxu0 0.0
  %2377 = vmatprep.subr.mxu0 0.0
  %2378 = vmatpush1.msra.mxu0 0.0
  %2379 = vmatprep.subr.mxu0 0.0
  %2380 = vmatpush1.msra.mxu0 0.0
  %2381 = vmatprep.subr.mxu0 0.0
  %2382 = vmatpush1.msra.mxu0 0.0
  %2383 = vmatprep.subr.mxu0 0.0
  %2384 = vmatpush1.msra.mxu0 0.0
  %2385 = vmatprep.subr.mxu0 0.0
  %2386 = vmatpush1.msra.mxu0 0.0
  %2387 = vmatprep.subr.mxu0 0.0
  %2388 = vmatpush1.msra.mxu0 0.0
  %2389 = vmatprep.subr.mxu0 0.0
  %2390 = vmatpush1.msra.mxu0 0.0
  %2391 = vmatprep.subr.mxu0 0.0
  %2392 = vmatpush1.msra.mxu0 0.0
  %2393 = vmatprep.subr.mxu0 0.0
  %2394 = vmatpush1.msra.mxu0 0.0
  %2395 = vmatprep.subr.mxu0 0.0
  %2396 = vmatpush1.msra.mxu0 0.0
  %2397 = vmatprep.subr.mxu0 0.0
  %2398 = vmatpush1.msra.mxu0 0.0
  %2399 = vmatprep.subr.mxu0 0.0
  %2400 = vmatpush1.msra.mxu0 0.0
  %2401 = vmatprep.subr.mxu0 0.0
  %2402 = vmatpush1.msra.mxu0 0.0
  %2403 = vmatprep.subr.mxu0 0.0
  %2404 = vmatpush1.msra.mxu0 0.0
  %2405 = vmatprep.subr.mxu0 0.0
  %2406 = vmatpush1.msra.mxu0 0.0
  %2407 = vmatprep.subr.mxu0 0.0
  %2408 = vmatpush1.msra.mxu0 0.0
  %2409 = vmatprep.mubr.f32.mxu0 0.0
  %2410 = vmatmul.mubr.f32.gmra.mrb[0].mxu0 %v2341
  %v2411 = vpop.f32.mrb[0].mxu0
  %v2412 = vadd.f32 0.0, %v2411
  %v2413 = vpop.f32.mrb[0].mxu0
  %2414 = vdwg.mxu0
  %v2416 = vsel %vm168, %v2412, 0
  %2418 = vmatprep.subr.mxu0 0.0
  %2419 = vmatpush1.msra.mxu0 %v26
  %2420 = vmatprep.subr.mxu0 0.0
  %2421 = vmatpush1.msra.mxu0 0.0
  %2422 = vmatprep.subr.mxu0 0.0
  %2423 = vmatpush1.msra.mxu0 0.0
  %2424 = vmatprep.subr.mxu0 0.0
  %2425 = vmatpush1.msra.mxu0 0.0
  %2426 = vmatprep.subr.mxu0 0.0
  %2427 = vmatpush1.msra.mxu0 0.0
  %2428 = vmatprep.subr.mxu0 0.0
  %2429 = vmatpush1.msra.mxu0 0.0
  %2430 = vmatprep.subr.mxu0 0.0
  %2431 = vmatpush1.msra.mxu0 0.0
  %2432 = vmatprep.subr.mxu0 0.0
  %2433 = vmatpush1.msra.mxu0 0.0
  %2434 = vmatprep.subr.mxu0 0.0
  %2435 = vmatpush1.msra.mxu0 0.0
  %2436 = vmatprep.subr.mxu0 0.0
  %2437 = vmatpush1.msra.mxu0 0.0
  %2438 = vmatprep.subr.mxu0 0.0
  %2439 = vmatpush1.msra.mxu0 0.0
  %2440 = vmatprep.subr.mxu0 0.0
  %2441 = vmatpush1.msra.mxu0 0.0
  %2442 = vmatprep.subr.mxu0 0.0
  %2443 = vmatpush1.msra.mxu0 0.0
  %2444 = vmatprep.subr.mxu0 0.0
  %2445 = vmatpush1.msra.mxu0 0.0
  %2446 = vmatprep.subr.mxu0 0.0
  %2447 = vmatpush1.msra.mxu0 0.0
  %2448 = vmatprep.subr.mxu0 0.0
  %2449 = vmatpush1.msra.mxu0 0.0
  %2450 = vmatprep.subr.mxu0 0.0
  %2451 = vmatpush1.msra.mxu0 0.0
  %2452 = vmatprep.subr.mxu0 0.0
  %2453 = vmatpush1.msra.mxu0 0.0
  %2454 = vmatprep.subr.mxu0 0.0
  %2455 = vmatpush1.msra.mxu0 0.0
  %2456 = vmatprep.subr.mxu0 0.0
  %2457 = vmatpush1.msra.mxu0 0.0
  %2458 = vmatprep.subr.mxu0 0.0
  %2459 = vmatpush1.msra.mxu0 0.0
  %2460 = vmatprep.subr.mxu0 0.0
  %2461 = vmatpush1.msra.mxu0 0.0
  %2462 = vmatprep.subr.mxu0 0.0
  %2463 = vmatpush1.msra.mxu0 0.0
  %2464 = vmatprep.subr.mxu0 0.0
  %2465 = vmatpush1.msra.mxu0 0.0
  %2466 = vmatprep.subr.mxu0 0.0
  %2467 = vmatpush1.msra.mxu0 0.0
  %2468 = vmatprep.subr.mxu0 0.0
  %2469 = vmatpush1.msra.mxu0 0.0
  %2470 = vmatprep.subr.mxu0 0.0
  %2471 = vmatpush1.msra.mxu0 0.0
  %2472 = vmatprep.subr.mxu0 0.0
  %2473 = vmatpush1.msra.mxu0 0.0
  %2474 = vmatprep.subr.mxu0 0.0
  %2475 = vmatpush1.msra.mxu0 0.0
  %2476 = vmatprep.subr.mxu0 0.0
  %2477 = vmatpush1.msra.mxu0 0.0
  %2478 = vmatprep.subr.mxu0 0.0
  %2479 = vmatpush1.msra.mxu0 0.0
  %2480 = vmatprep.subr.mxu0 0.0
  %2481 = vmatpush1.msra.mxu0 0.0
  %2482 = vmatprep.mubr.f32.mxu0 0.0
  %2483 = vmatmul.mubr.f32.gmra.mrb[0].mxu0 %v2416
  %v2484 = vpop.f32.mrb[0].mxu0
  %v2485 = vadd.f32 0.0, %v2484
  %v2486 = vpop.f32.mrb[0].mxu0
  %2487 = vdwg.mxu0
  %v2488 = vadd.f32 %v2249, %v2485
  %2489 = vrot.lane.b32.xlu0 %v1778, 104
  %v2490 = vpop.permute.xlu0 %2489
  %2491 = vrot.lane.b32.xlu0 %v1778, 72
  %v2492 = vpop.permute.xlu0 %2491
  %v2493 = vsel %vm168, %v2490, 0
  %v2495 = vsel %vm168, %v2492, 0
  %2497 = vmatprep.subr.mxu0 0.0
  %2498 = vmatpush1.xpose.msra.mxu0 %v2495
  %2499 = vmatprep.subr.mxu0 0.0
  %2500 = vmatpush1.xpose.msra.mxu0 0.0
  %2501 = vmatprep.subr.mxu0 0.0
  %2502 = vmatpush1.xpose.msra.mxu0 0.0
  %2503 = vmatprep.subr.mxu0 0.0
  %2504 = vmatpush1.xpose.msra.mxu0 0.0
  %2505 = vmatprep.subr.mxu0 0.0
  %2506 = vmatpush1.xpose.msra.mxu0 0.0
  %2507 = vmatprep.subr.mxu0 0.0
  %2508 = vmatpush1.xpose.msra.mxu0 0.0
  %2509 = vmatprep.subr.mxu0 0.0
  %2510 = vmatpush1.xpose.msra.mxu0 0.0
  %2511 = vmatprep.subr.mxu0 0.0
  %2512 = vmatpush1.xpose.msra.mxu0 0.0
  %2513 = vmatprep.subr.mxu0 0.0
  %2514 = vmatpush1.xpose.msra.mxu0 0.0
  %2515 = vmatprep.subr.mxu0 0.0
  %2516 = vmatpush1.xpose.msra.mxu0 0.0
  %2517 = vmatprep.subr.mxu0 0.0
  %2518 = vmatpush1.xpose.msra.mxu0 0.0
  %2519 = vmatprep.subr.mxu0 0.0
  %2520 = vmatpush1.xpose.msra.mxu0 0.0
  %2521 = vmatprep.subr.mxu0 0.0
  %2522 = vmatpush1.xpose.msra.mxu0 0.0
  %2523 = vmatprep.subr.mxu0 0.0
  %2524 = vmatpush1.xpose.msra.mxu0 0.0
  %2525 = vmatprep.subr.mxu0 0.0
  %2526 = vmatpush1.xpose.msra.mxu0 0.0
  %2527 = vmatprep.subr.mxu0 0.0
  %2528 = vmatpush1.xpose.msra.mxu0 0.0
  %2529 = vmatprep.subr.mxu0 0.0
  %2530 = vmatpush1.xpose.msra.mxu0 0.0
  %2531 = vmatprep.subr.mxu0 0.0
  %2532 = vmatpush1.xpose.msra.mxu0 0.0
  %2533 = vmatprep.subr.mxu0 0.0
  %2534 = vmatpush1.xpose.msra.mxu0 0.0
  %2535 = vmatprep.subr.mxu0 0.0
  %2536 = vmatpush1.xpose.msra.mxu0 0.0
  %2537 = vmatprep.subr.mxu0 0.0
  %2538 = vmatpush1.xpose.msra.mxu0 0.0
  %2539 = vmatprep.subr.mxu0 0.0
  %2540 = vmatpush1.xpose.msra.mxu0 0.0
  %2541 = vmatprep.subr.mxu0 0.0
  %2542 = vmatpush1.xpose.msra.mxu0 0.0
  %2543 = vmatprep.subr.mxu0 0.0
  %2544 = vmatpush1.xpose.msra.mxu0 0.0
  %2545 = vmatprep.subr.mxu0 0.0
  %2546 = vmatpush1.xpose.msra.mxu0 0.0
  %2547 = vmatprep.subr.mxu0 0.0
  %2548 = vmatpush1.xpose.msra.mxu0 0.0
  %2549 = vmatprep.subr.mxu0 0.0
  %2550 = vmatpush1.xpose.msra.mxu0 0.0
  %2551 = vmatprep.subr.mxu0 0.0
  %2552 = vmatpush1.xpose.msra.mxu0 0.0
  %2553 = vmatprep.subr.mxu0 0.0
  %2554 = vmatpush1.xpose.msra.mxu0 0.0
  %2555 = vmatprep.subr.mxu0 0.0
  %2556 = vmatpush1.xpose.msra.mxu0 0.0
  %2557 = vmatprep.subr.mxu0 0.0
  %2558 = vmatpush1.xpose.msra.mxu0 0.0
  %2559 = vmatprep.subr.mxu0 0.0
  %2560 = vmatpush1.xpose.msra.mxu0 0.0
  %2561 = vmatprep.mubr.f32.mxu0 0.0
  %2562 = vmatmul.mubr.f32.gmra.mrb[0].mxu0 %v2493
  %v2563 = vpop.f32.mrb[0].mxu0
  %v2564 = vadd.f32 0.0, %v2563
  %v2565 = vpop.f32.mrb[0].mxu0
  %2566 = vdwg.mxu0
  %v2567 = vmul.f32 %v2564, 0.35355338
  %v2568 = vmul.f32 %v2567, 1.442695
  %v2569 = vpow.pop %v2568
  %v2570 = vsel %vm246, %v2569, 0.0
  %2571 = vadd.xlane.f32.xlu0 %v2570
  %v2572 = vpop.xlane.xlu0 %2571
  %v2573 = vrcp.pop %v2572
  %v2574 = vmul.f32 %v2569, %v2573
  %2575 = vrot.lane.b32.xlu0 %v1778, 40
  %v2576 = vpop.permute.xlu0 %2575
  %v2578 = vsel %vm254, %v2574, 0
  %v2580 = vsel %vm258, %v2576, 0
  %2582 = vmatprep.subr.mxu0 0.0
  %2583 = vmatpush1.msra.mxu0 %v2580
  %2584 = vmatprep.subr.mxu0 0.0
  %2585 = vmatpush1.msra.mxu0 0.0
  %2586 = vmatprep.subr.mxu0 0.0
  %2587 = vmatpush1.msra.mxu0 0.0
  %2588 = vmatprep.subr.mxu0 0.0
  %2589 = vmatpush1.msra.mxu0 0.0
  %2590 = vmatprep.subr.mxu0 0.0
  %2591 = vmatpush1.msra.mxu0 0.0
  %2592 = vmatprep.subr.mxu0 0.0
  %2593 = vmatpush1.msra.mxu0 0.0
  %2594 = vmatprep.subr.mxu0 0.0
  %2595 = vmatpush1.msra.mxu0 0.0
  %2596 = vmatprep.subr.mxu0 0.0
  %2597 = vmatpush1.msra.mxu0 0.0
  %2598 = vmatprep.subr.mxu0 0.0
  %2599 = vmatpush1.msra.mxu0 0.0
  %2600 = vmatprep.subr.mxu0 0.0
  %2601 = vmatpush1.msra.mxu0 0.0
  %2602 = vmatprep.subr.mxu0 0.0
  %2603 = vmatpush1.msra.mxu0 0.0
  %2604 = vmatprep.subr.mxu0 0.0
  %2605 = vmatpush1.msra.mxu0 0.0
  %2606 = vmatprep.subr.mxu0 0.0
  %2607 = vmatpush1.msra.mxu0 0.0
  %2608 = vmatprep.subr.mxu0 0.0
  %2609 = vmatpush1.msra.mxu0 0.0
  %2610 = vmatprep.subr.mxu0 0.0
  %2611 = vmatpush1.msra.mxu0 0.0
  %2612 = vmatprep.subr.mxu0 0.0
  %2613 = vmatpush1.msra.mxu0 0.0
  %2614 = vmatprep.subr.mxu0 0.0
  %2615 = vmatpush1.msra.mxu0 0.0
  %2616 = vmatprep.subr.mxu0 0.0
  %2617 = vmatpush1.msra.mxu0 0.0
  %2618 = vmatprep.subr.mxu0 0.0
  %2619 = vmatpush1.msra.mxu0 0.0
  %2620 = vmatprep.subr.mxu0 0.0
  %2621 = vmatpush1.msra.mxu0 0.0
  %2622 = vmatprep.subr.mxu0 0.0
  %2623 = vmatpush1.msra.mxu0 0.0
  %2624 = vmatprep.subr.mxu0 0.0
  %2625 = vmatpush1.msra.mxu0 0.0
  %2626 = vmatprep.subr.mxu0 0.0
  %2627 = vmatpush1.msra.mxu0 0.0
  %2628 = vmatprep.subr.mxu0 0.0
  %2629 = vmatpush1.msra.mxu0 0.0
  %2630 = vmatprep.subr.mxu0 0.0
  %2631 = vmatpush1.msra.mxu0 0.0
  %2632 = vmatprep.subr.mxu0 0.0
  %2633 = vmatpush1.msra.mxu0 0.0
  %2634 = vmatprep.subr.mxu0 0.0
  %2635 = vmatpush1.msra.mxu0 0.0
  %2636 = vmatprep.subr.mxu0 0.0
  %2637 = vmatpush1.msra.mxu0 0.0
  %2638 = vmatprep.subr.mxu0 0.0
  %2639 = vmatpush1.msra.mxu0 0.0
  %2640 = vmatprep.subr.mxu0 0.0
  %2641 = vmatpush1.msra.mxu0 0.0
  %2642 = vmatprep.subr.mxu0 0.0
  %2643 = vmatpush1.msra.mxu0 0.0
  %2644 = vmatprep.subr.mxu0 0.0
  %2645 = vmatpush1.msra.mxu0 0.0
  %2646 = vmatprep.mubr.f32.mxu0 0.0
  %2647 = vmatmul.mubr.f32.gmra.mrb[0].mxu0 %v2578
  %v2648 = vpop.f32.mrb[0].mxu0
  %v2649 = vadd.f32 0.0, %v2648
  %v2650 = vpop.f32.mrb[0].mxu0
  %2651 = vdwg.mxu0
  %v2653 = vsel %vm168, %v2649, 0
  %2655 = vmatprep.subr.mxu0 0.0
  %2656 = vmatpush1.msra.mxu0 %v27
  %2657 = vmatprep.subr.mxu0 0.0
  %2658 = vmatpush1.msra.mxu0 0.0
  %2659 = vmatprep.subr.mxu0 0.0
  %2660 = vmatpush1.msra.mxu0 0.0
  %2661 = vmatprep.subr.mxu0 0.0
  %2662 = vmatpush1.msra.mxu0 0.0
  %2663 = vmatprep.subr.mxu0 0.0
  %2664 = vmatpush1.msra.mxu0 0.0
  %2665 = vmatprep.subr.mxu0 0.0
  %2666 = vmatpush1.msra.mxu0 0.0
  %2667 = vmatprep.subr.mxu0 0.0
  %2668 = vmatpush1.msra.mxu0 0.0
  %2669 = vmatprep.subr.mxu0 0.0
  %2670 = vmatpush1.msra.mxu0 0.0
  %2671 = vmatprep.subr.mxu0 0.0
  %2672 = vmatpush1.msra.mxu0 0.0
  %2673 = vmatprep.subr.mxu0 0.0
  %2674 = vmatpush1.msra.mxu0 0.0
  %2675 = vmatprep.subr.mxu0 0.0
  %2676 = vmatpush1.msra.mxu0 0.0
  %2677 = vmatprep.subr.mxu0 0.0
  %2678 = vmatpush1.msra.mxu0 0.0
  %2679 = vmatprep.subr.mxu0 0.0
  %2680 = vmatpush1.msra.mxu0 0.0
  %2681 = vmatprep.subr.mxu0 0.0
  %2682 = vmatpush1.msra.mxu0 0.0
  %2683 = vmatprep.subr.mxu0 0.0
  %2684 = vmatpush1.msra.mxu0 0.0
  %2685 = vmatprep.subr.mxu0 0.0
  %2686 = vmatpush1.msra.mxu0 0.0
  %2687 = vmatprep.subr.mxu0 0.0
  %2688 = vmatpush1.msra.mxu0 0.0
  %2689 = vmatprep.subr.mxu0 0.0
  %2690 = vmatpush1.msra.mxu0 0.0
  %2691 = vmatprep.subr.mxu0 0.0
  %2692 = vmatpush1.msra.mxu0 0.0
  %2693 = vmatprep.subr.mxu0 0.0
  %2694 = vmatpush1.msra.mxu0 0.0
  %2695 = vmatprep.subr.mxu0 0.0
  %2696 = vmatpush1.msra.mxu0 0.0
  %2697 = vmatprep.subr.mxu0 0.0
  %2698 = vmatpush1.msra.mxu0 0.0
  %2699 = vmatprep.subr.mxu0 0.0
  %2700 = vmatpush1.msra.mxu0 0.0
  %2701 = vmatprep.subr.mxu0 0.0
  %2702 = vmatpush1.msra.mxu0 0.0
  %2703 = vmatprep.subr.mxu0 0.0
  %2704 = vmatpush1.msra.mxu0 0.0
  %2705 = vmatprep.subr.mxu0 0.0
  %2706 = vmatpush1.msra.mxu0 0.0
  %2707 = vmatprep.subr.mxu0 0.0
  %2708 = vmatpush1.msra.mxu0 0.0
  %2709 = vmatprep.subr.mxu0 0.0
  %2710 = vmatpush1.msra.mxu0 0.0
  %2711 = vmatprep.subr.mxu0 0.0
  %2712 = vmatpush1.msra.mxu0 0.0
  %2713 = vmatprep.subr.mxu0 0.0
  %2714 = vmatpush1.msra.mxu0 0.0
  %2715 = vmatprep.subr.mxu0 0.0
  %2716 = vmatpush1.msra.mxu0 0.0
  %2717 = vmatprep.subr.mxu0 0.0
  %2718 = vmatpush1.msra.mxu0 0.0
  %2719 = vmatprep.mubr.f32.mxu0 0.0
  %2720 = vmatmul.mubr.f32.gmra.mrb[0].mxu0 %v2653
  %v2721 = vpop.f32.mrb[0].mxu0
  %v2722 = vadd.f32 0.0, %v2721
  %v2723 = vpop.f32.mrb[0].mxu0
  %2724 = vdwg.mxu0
  %v2725 = vadd.f32 %v2488, %v2722
  %v2726 = vadd.f32 %v2725, %v1117
  %v2727 = vtanh.pop %v2726
  %v2728 = vsel %vm69, %v2727, 0.0
  %2729 = vadd.xlane.f32.xlu0 %v2728
  %v2730 = vpop.xlane.xlu0 %2729
  %v2731 = vmul.f32 %v2730, %v73
  %v2732 = vsub.f32 %v2727, %v2731
  %v2733 = vmul.f32 %v2732, %v2732
  %v2734 = vsel %vm69, %v2733, 0.0
  %2735 = vadd.xlane.f32.xlu0 %v2734
  %v2736 = vpop.xlane.xlu0 %2735
  %v2737 = vmul.f32 %v2736, %v73
  %v2738 = vadd.f32 %v2737, 1e-05
  %v2739 = vrsqrt.pop %v2738
  %v2740 = vmul.f32 %v2732, %v2739
  %v2741 = vmul.f32 %v2740, %v1136
  %v2742 = vadd.f32 %v2741, %v1141
  %v2743 = vadd.f32 %v2742, %v1706
  %v2744 = vsel %vm69, %v2743, 0.0
  %v2745 = vrot.slane %v2744, 4
  %v2746 = vadd.f32 %v2744, %v2745
  %v2747 = vrot.slane %v2746, 2
  %v2748 = vadd.f32 %v2746, %v2747
  %v2749 = vrot.slane %v2748, 1
  %v2750 = vadd.f32 %v2748, %v2749
  %v2751 = vmul.f32 %v2750, %v1151
  %v2753 = vsel %vm168, %v1707, 0
  %2755 = vmatprep.subr.mxu0 0.0
  %2756 = vmatpush1.msra.mxu0 %v32
  %2757 = vmatprep.subr.mxu0 0.0
  %2758 = vmatpush1.msra.mxu0 0.0
  %2759 = vmatprep.subr.mxu0 0.0
  %2760 = vmatpush1.msra.mxu0 0.0
  %2761 = vmatprep.subr.mxu0 0.0
  %2762 = vmatpush1.msra.mxu0 0.0
  %2763 = vmatprep.subr.mxu0 0.0
  %2764 = vmatpush1.msra.mxu0 0.0
  %2765 = vmatprep.subr.mxu0 0.0
  %2766 = vmatpush1.msra.mxu0 0.0
  %2767 = vmatprep.subr.mxu0 0.0
  %2768 = vmatpush1.msra.mxu0 0.0
  %2769 = vmatprep.subr.mxu0 0.0
  %2770 = vmatpush1.msra.mxu0 0.0
  %2771 = vmatprep.subr.mxu0 0.0
  %2772 = vmatpush1.msra.mxu0 0.0
  %2773 = vmatprep.subr.mxu0 0.0
  %2774 = vmatpush1.msra.mxu0 0.0
  %2775 = vmatprep.subr.mxu0 0.0
  %2776 = vmatpush1.msra.mxu0 0.0
  %2777 = vmatprep.subr.mxu0 0.0
  %2778 = vmatpush1.msra.mxu0 0.0
  %2779 = vmatprep.subr.mxu0 0.0
  %2780 = vmatpush1.msra.mxu0 0.0
  %2781 = vmatprep.subr.mxu0 0.0
  %2782 = vmatpush1.msra.mxu0 0.0
  %2783 = vmatprep.subr.mxu0 0.0
  %2784 = vmatpush1.msra.mxu0 0.0
  %2785 = vmatprep.subr.mxu0 0.0
  %2786 = vmatpush1.msra.mxu0 0.0
  %2787 = vmatprep.subr.mxu0 0.0
  %2788 = vmatpush1.msra.mxu0 0.0
  %2789 = vmatprep.subr.mxu0 0.0
  %2790 = vmatpush1.msra.mxu0 0.0
  %2791 = vmatprep.subr.mxu0 0.0
  %2792 = vmatpush1.msra.mxu0 0.0
  %2793 = vmatprep.subr.mxu0 0.0
  %2794 = vmatpush1.msra.mxu0 0.0
  %2795 = vmatprep.subr.mxu0 0.0
  %2796 = vmatpush1.msra.mxu0 0.0
  %2797 = vmatprep.subr.mxu0 0.0
  %2798 = vmatpush1.msra.mxu0 0.0
  %2799 = vmatprep.subr.mxu0 0.0
  %2800 = vmatpush1.msra.mxu0 0.0
  %2801 = vmatprep.subr.mxu0 0.0
  %2802 = vmatpush1.msra.mxu0 0.0
  %2803 = vmatprep.subr.mxu0 0.0
  %2804 = vmatpush1.msra.mxu0 0.0
  %2805 = vmatprep.subr.mxu0 0.0
  %2806 = vmatpush1.msra.mxu0 0.0
  %2807 = vmatprep.subr.mxu0 0.0
  %2808 = vmatpush1.msra.mxu0 0.0
  %2809 = vmatprep.subr.mxu0 0.0
  %2810 = vmatpush1.msra.mxu0 0.0
  %2811 = vmatprep.subr.mxu0 0.0
  %2812 = vmatpush1.msra.mxu0 0.0
  %2813 = vmatprep.subr.mxu0 0.0
  %2814 = vmatpush1.msra.mxu0 0.0
  %2815 = vmatprep.subr.mxu0 0.0
  %2816 = vmatpush1.msra.mxu0 0.0
  %2817 = vmatprep.subr.mxu0 0.0
  %2818 = vmatpush1.msra.mxu0 0.0
  %2819 = vmatprep.mubr.f32.mxu0 0.0
  %2820 = vmatmul.mubr.f32.gmra.mrb[0].mxu0 %v2753
  %v2821 = vpop.f32.mrb[0].mxu0
  %v2822 = vadd.f32 0.0, %v2821
  %v2823 = vpop.f32.mrb[0].mxu0
  %2824 = vdwg.mxu0
  %v2826 = vsel %vm91, %v2751, 0
  %2828 = vmatprep.subr.mxu0 0.0
  %2829 = vmatpush1.msra.mxu0 %v28
  %2830 = vmatprep.subr.mxu0 0.0
  %2831 = vmatpush1.msra.mxu0 %v29
  %2832 = vmatprep.subr.mxu0 0.0
  %2833 = vmatpush1.msra.mxu0 %v30
  %2834 = vmatprep.subr.mxu0 0.0
  %2835 = vmatpush1.msra.mxu0 %v31
  %2836 = vmatprep.subr.mxu0 0.0
  %2837 = vmatpush1.msra.mxu0 0.0
  %2838 = vmatprep.subr.mxu0 0.0
  %2839 = vmatpush1.msra.mxu0 0.0
  %2840 = vmatprep.subr.mxu0 0.0
  %2841 = vmatpush1.msra.mxu0 0.0
  %2842 = vmatprep.subr.mxu0 0.0
  %2843 = vmatpush1.msra.mxu0 0.0
  %2844 = vmatprep.subr.mxu0 0.0
  %2845 = vmatpush1.msra.mxu0 0.0
  %2846 = vmatprep.subr.mxu0 0.0
  %2847 = vmatpush1.msra.mxu0 0.0
  %2848 = vmatprep.subr.mxu0 0.0
  %2849 = vmatpush1.msra.mxu0 0.0
  %2850 = vmatprep.subr.mxu0 0.0
  %2851 = vmatpush1.msra.mxu0 0.0
  %2852 = vmatprep.subr.mxu0 0.0
  %2853 = vmatpush1.msra.mxu0 0.0
  %2854 = vmatprep.subr.mxu0 0.0
  %2855 = vmatpush1.msra.mxu0 0.0
  %2856 = vmatprep.subr.mxu0 0.0
  %2857 = vmatpush1.msra.mxu0 0.0
  %2858 = vmatprep.subr.mxu0 0.0
  %2859 = vmatpush1.msra.mxu0 0.0
  %2860 = vmatprep.subr.mxu0 0.0
  %2861 = vmatpush1.msra.mxu0 0.0
  %2862 = vmatprep.subr.mxu0 0.0
  %2863 = vmatpush1.msra.mxu0 0.0
  %2864 = vmatprep.subr.mxu0 0.0
  %2865 = vmatpush1.msra.mxu0 0.0
  %2866 = vmatprep.subr.mxu0 0.0
  %2867 = vmatpush1.msra.mxu0 0.0
  %2868 = vmatprep.subr.mxu0 0.0
  %2869 = vmatpush1.msra.mxu0 0.0
  %2870 = vmatprep.subr.mxu0 0.0
  %2871 = vmatpush1.msra.mxu0 0.0
  %2872 = vmatprep.subr.mxu0 0.0
  %2873 = vmatpush1.msra.mxu0 0.0
  %2874 = vmatprep.subr.mxu0 0.0
  %2875 = vmatpush1.msra.mxu0 0.0
  %2876 = vmatprep.subr.mxu0 0.0
  %2877 = vmatpush1.msra.mxu0 0.0
  %2878 = vmatprep.subr.mxu0 0.0
  %2879 = vmatpush1.msra.mxu0 0.0
  %2880 = vmatprep.subr.mxu0 0.0
  %2881 = vmatpush1.msra.mxu0 0.0
  %2882 = vmatprep.subr.mxu0 0.0
  %2883 = vmatpush1.msra.mxu0 0.0
  %2884 = vmatprep.subr.mxu0 0.0
  %2885 = vmatpush1.msra.mxu0 0.0
  %2886 = vmatprep.subr.mxu0 0.0
  %2887 = vmatpush1.msra.mxu0 0.0
  %2888 = vmatprep.subr.mxu0 0.0
  %2889 = vmatpush1.msra.mxu0 0.0
  %2890 = vmatprep.subr.mxu0 0.0
  %2891 = vmatpush1.msra.mxu0 0.0
  %2892 = vmatprep.mubr.f32.mxu0 0.0
  %2893 = vmatmul.mubr.f32.gmra.mrb[0].mxu0 %v2826
  %v2894 = vpop.f32.mrb[0].mxu0
  %v2895 = vadd.f32 %v2822, %v2894
  %v2896 = vpop.f32.mrb[0].mxu0
  %2897 = vdwg.mxu0
  %v2898 = vadd.f32 %v2895, %v53
  %v2899 = vtanh.pop %v2898
  %v2900 = vsel %vm1301, %v2899, 0.0
  %2901 = vadd.xlane.f32.xlu0 %v2900
  %v2902 = vpop.xlane.xlu0 %2901
  %v2903 = vmul.f32 %v2902, %v73
  %v2904 = vsub.f32 %v2899, %v2903
  %v2905 = vmul.f32 %v2904, %v2904
  %v2906 = vsel %vm1301, %v2905, 0.0
  %2907 = vadd.xlane.f32.xlu0 %v2906
  %v2908 = vpop.xlane.xlu0 %2907
  %v2909 = vmul.f32 %v2908, %v73
  %v2910 = vadd.f32 %v2909, 1e-05
  %v2911 = vrsqrt.pop %v2910
  %v2912 = vmul.f32 %v2904, %v2911
  %v2913 = vmul.f32 %v2912, %v54
  %v2914 = vadd.f32 %v2913, %v55
  %v2916 = vsel %vm91, %v2914, 0
  %2918 = vmatprep.subr.mxu0 0.0
  %2919 = vmatpush1.msra.mxu0 %v33
  %2920 = vmatprep.subr.mxu0 0.0
  %2921 = vmatpush1.msra.mxu0 %v34
  %2922 = vmatprep.subr.mxu0 0.0
  %2923 = vmatpush1.msra.mxu0 %v35
  %2924 = vmatprep.subr.mxu0 0.0
  %2925 = vmatpush1.msra.mxu0 %v36
  %2926 = vmatprep.subr.mxu0 0.0
  %2927 = vmatpush1.msra.mxu0 0.0
  %2928 = vmatprep.subr.mxu0 0.0
  %2929 = vmatpush1.msra.mxu0 0.0
  %2930 = vmatprep.subr.mxu0 0.0
  %2931 = vmatpush1.msra.mxu0 0.0
  %2932 = vmatprep.subr.mxu0 0.0
  %2933 = vmatpush1.msra.mxu0 0.0
  %2934 = vmatprep.subr.mxu0 0.0
  %2935 = vmatpush1.msra.mxu0 0.0
  %2936 = vmatprep.subr.mxu0 0.0
  %2937 = vmatpush1.msra.mxu0 0.0
  %2938 = vmatprep.subr.mxu0 0.0
  %2939 = vmatpush1.msra.mxu0 0.0
  %2940 = vmatprep.subr.mxu0 0.0
  %2941 = vmatpush1.msra.mxu0 0.0
  %2942 = vmatprep.subr.mxu0 0.0
  %2943 = vmatpush1.msra.mxu0 0.0
  %2944 = vmatprep.subr.mxu0 0.0
  %2945 = vmatpush1.msra.mxu0 0.0
  %2946 = vmatprep.subr.mxu0 0.0
  %2947 = vmatpush1.msra.mxu0 0.0
  %2948 = vmatprep.subr.mxu0 0.0
  %2949 = vmatpush1.msra.mxu0 0.0
  %2950 = vmatprep.subr.mxu0 0.0
  %2951 = vmatpush1.msra.mxu0 0.0
  %2952 = vmatprep.subr.mxu0 0.0
  %2953 = vmatpush1.msra.mxu0 0.0
  %2954 = vmatprep.subr.mxu0 0.0
  %2955 = vmatpush1.msra.mxu0 0.0
  %2956 = vmatprep.subr.mxu0 0.0
  %2957 = vmatpush1.msra.mxu0 0.0
  %2958 = vmatprep.subr.mxu0 0.0
  %2959 = vmatpush1.msra.mxu0 0.0
  %2960 = vmatprep.subr.mxu0 0.0
  %2961 = vmatpush1.msra.mxu0 0.0
  %2962 = vmatprep.subr.mxu0 0.0
  %2963 = vmatpush1.msra.mxu0 0.0
  %2964 = vmatprep.subr.mxu0 0.0
  %2965 = vmatpush1.msra.mxu0 0.0
  %2966 = vmatprep.subr.mxu0 0.0
  %2967 = vmatpush1.msra.mxu0 0.0
  %2968 = vmatprep.subr.mxu0 0.0
  %2969 = vmatpush1.msra.mxu0 0.0
  %2970 = vmatprep.subr.mxu0 0.0
  %2971 = vmatpush1.msra.mxu0 0.0
  %2972 = vmatprep.subr.mxu0 0.0
  %2973 = vmatpush1.msra.mxu0 0.0
  %2974 = vmatprep.subr.mxu0 0.0
  %2975 = vmatpush1.msra.mxu0 0.0
  %2976 = vmatprep.subr.mxu0 0.0
  %2977 = vmatpush1.msra.mxu0 0.0
  %2978 = vmatprep.subr.mxu0 0.0
  %2979 = vmatpush1.msra.mxu0 0.0
  %2980 = vmatprep.subr.mxu0 0.0
  %2981 = vmatpush1.msra.mxu0 0.0
  %2982 = vmatprep.mubr.f32.mxu0 0.0
  %2983 = vmatmul.mubr.f32.gmra.mrb[0].mxu0 %v2916
  %v2984 = vpop.f32.mrb[0].mxu0
  %v2985 = vadd.f32 %v56, %v2984
  %v2986 = vpop.f32.mrb[0].mxu0
  %2987 = vdwg.mxu0
  %v2988 = vtanh.pop %v2985
  %v2989 = vsel %vm1301, %v2988, 0.0
  %2990 = vadd.xlane.f32.xlu0 %v2989
  %v2991 = vpop.xlane.xlu0 %2990
  %v2992 = vmul.f32 %v2991, %v73
  %v2993 = vsub.f32 %v2988, %v2992
  %v2994 = vmul.f32 %v2993, %v2993
  %v2995 = vsel %vm1301, %v2994, 0.0
  %2996 = vadd.xlane.f32.xlu0 %v2995
  %v2997 = vpop.xlane.xlu0 %2996
  %v2998 = vmul.f32 %v2997, %v73
  %v2999 = vadd.f32 %v2998, 1e-05
  %v3000 = vrsqrt.pop %v2999
  %v3001 = vmul.f32 %v2993, %v3000
  %v3002 = vmul.f32 %v3001, %v57
  %v3003 = vadd.f32 %v3002, %v58
  %3005 = vrot.lane.b32.xlu0 %v2988, 96
  %v3006 = vpop.permute.xlu0 %3005
  %v3008 = vsel %vm1301, %v3006, 0.0
  %3009 = vadd.xlane.f32.xlu0 %v3008
  %v3010 = vpop.xlane.xlu0 %3009
  %v3011 = vmul.f32 %v3010, %v73
  %v3012 = vsub.f32 %v2988, %v3011
  %v3013 = vmul.f32 %v3012, %v3012
  %3015 = vrot.lane.b32.xlu0 %v3013, 96
  %v3016 = vpop.permute.xlu0 %3015
  %v3018 = vsel %vm1301, %v3016, 0.0
  %3019 = vadd.xlane.f32.xlu0 %v3018
  %v3020 = vpop.xlane.xlu0 %3019
  %v3021 = vmul.f32 %v3020, %v73
  %v3022 = vadd.f32 %v3021, 1e-05
  %v3023 = vrsqrt.pop %v3022
  %v3024 = vmul.f32 %v3012, %v3023
  %v3025 = vmul.f32 %v3024, %v57
  %v3026 = vadd.f32 %v3025, %v58
  %v3028 = vsel %vm91, %v3003, 0
  %3030 = vmatprep.subr.mxu0 0.0
  %3031 = vmatpush1.msra.mxu0 %v37
  %3032 = vmatprep.subr.mxu0 0.0
  %3033 = vmatpush1.msra.mxu0 %v38
  %3034 = vmatprep.subr.mxu0 0.0
  %3035 = vmatpush1.msra.mxu0 %v39
  %3036 = vmatprep.subr.mxu0 0.0
  %3037 = vmatpush1.msra.mxu0 %v40
  %3038 = vmatprep.subr.mxu0 0.0
  %3039 = vmatpush1.msra.mxu0 0.0
  %3040 = vmatprep.subr.mxu0 0.0
  %3041 = vmatpush1.msra.mxu0 0.0
  %3042 = vmatprep.subr.mxu0 0.0
  %3043 = vmatpush1.msra.mxu0 0.0
  %3044 = vmatprep.subr.mxu0 0.0
  %3045 = vmatpush1.msra.mxu0 0.0
  %3046 = vmatprep.subr.mxu0 0.0
  %3047 = vmatpush1.msra.mxu0 0.0
  %3048 = vmatprep.subr.mxu0 0.0
  %3049 = vmatpush1.msra.mxu0 0.0
  %3050 = vmatprep.subr.mxu0 0.0
  %3051 = vmatpush1.msra.mxu0 0.0
  %3052 = vmatprep.subr.mxu0 0.0
  %3053 = vmatpush1.msra.mxu0 0.0
  %3054 = vmatprep.subr.mxu0 0.0
  %3055 = vmatpush1.msra.mxu0 0.0
  %3056 = vmatprep.subr.mxu0 0.0
  %3057 = vmatpush1.msra.mxu0 0.0
  %3058 = vmatprep.subr.mxu0 0.0
  %3059 = vmatpush1.msra.mxu0 0.0
  %3060 = vmatprep.subr.mxu0 0.0
  %3061 = vmatpush1.msra.mxu0 0.0
  %3062 = vmatprep.subr.mxu0 0.0
  %3063 = vmatpush1.msra.mxu0 0.0
  %3064 = vmatprep.subr.mxu0 0.0
  %3065 = vmatpush1.msra.mxu0 0.0
  %3066 = vmatprep.subr.mxu0 0.0
  %3067 = vmatpush1.msra.mxu0 0.0
  %3068 = vmatprep.subr.mxu0 0.0
  %3069 = vmatpush1.msra.mxu0 0.0
  %3070 = vmatprep.subr.mxu0 0.0
  %3071 = vmatpush1.msra.mxu0 0.0
  %3072 = vmatprep.subr.mxu0 0.0
  %3073 = vmatpush1.msra.mxu0 0.0
  %3074 = vmatprep.subr.mxu0 0.0
  %3075 = vmatpush1.msra.mxu0 0.0
  %3076 = vmatprep.subr.mxu0 0.0
  %3077 = vmatpush1.msra.mxu0 0.0
  %3078 = vmatprep.subr.mxu0 0.0
  %3079 = vmatpush1.msra.mxu0 0.0
  %3080 = vmatprep.subr.mxu0 0.0
  %3081 = vmatpush1.msra.mxu0 0.0
  %3082 = vmatprep.subr.mxu0 0.0
  %3083 = vmatpush1.msra.mxu0 0.0
  %3084 = vmatprep.subr.mxu0 0.0
  %3085 = vmatpush1.msra.mxu0 0.0
  %3086 = vmatprep.subr.mxu0 0.0
  %3087 = vmatpush1.msra.mxu0 0.0
  %3088 = vmatprep.subr.mxu0 0.0
  %3089 = vmatpush1.msra.mxu0 0.0
  %3090 = vmatprep.subr.mxu0 0.0
  %3091 = vmatpush1.msra.mxu0 0.0
  %3092 = vmatprep.subr.mxu0 0.0
  %3093 = vmatpush1.msra.mxu0 0.0
  %3094 = vmatprep.mubr.f32.mxu0 0.0
  %3095 = vmatmul.mubr.f32.gmra.mrb[0].mxu0 %v3028
  %v3096 = vpop.f32.mrb[0].mxu0
  %v3097 = vadd.f32 %v59, %v3096
  %v3098 = vpop.f32.mrb[0].mxu0
  %3099 = vdwg.mxu0
  %v3100 = vtanh.pop %v3097
  %v3101 = vsel %vm1301, %v3100, 0.0
  %3102 = vadd.xlane.f32.xlu0 %v3101
  %v3103 = vpop.xlane.xlu0 %3102
  %v3104 = vmul.f32 %v3103, %v73
  %v3105 = vsub.f32 %v3100, %v3104
  %v3106 = vmul.f32 %v3105, %v3105
  %v3107 = vsel %vm1301, %v3106, 0.0
  %3108 = vadd.xlane.f32.xlu0 %v3107
  %v3109 = vpop.xlane.xlu0 %3108
  %v3110 = vmul.f32 %v3109, %v73
  %v3111 = vadd.f32 %v3110, 1e-05
  %v3112 = vrsqrt.pop %v3111
  %v3113 = vmul.f32 %v3105, %v3112
  %v3114 = vmul.f32 %v3113, %v60
  %v3115 = vadd.f32 %v3114, %v61
  %3117 = vrot.lane.b32.xlu0 %v3026, 96
  %v3118 = vpop.permute.xlu0 %3117
  %v3119 = vsel %vm91, %v3118, 0
  %3121 = vmatprep.subr.mxu0 0.0
  %3122 = vmatpush1.msra.mxu0 %v41
  %3123 = vmatprep.subr.mxu0 0.0
  %3124 = vmatpush1.msra.mxu0 %v42
  %3125 = vmatprep.subr.mxu0 0.0
  %3126 = vmatpush1.msra.mxu0 %v43
  %3127 = vmatprep.subr.mxu0 0.0
  %3128 = vmatpush1.msra.mxu0 %v44
  %3129 = vmatprep.subr.mxu0 0.0
  %3130 = vmatpush1.msra.mxu0 0.0
  %3131 = vmatprep.subr.mxu0 0.0
  %3132 = vmatpush1.msra.mxu0 0.0
  %3133 = vmatprep.subr.mxu0 0.0
  %3134 = vmatpush1.msra.mxu0 0.0
  %3135 = vmatprep.subr.mxu0 0.0
  %3136 = vmatpush1.msra.mxu0 0.0
  %3137 = vmatprep.subr.mxu0 0.0
  %3138 = vmatpush1.msra.mxu0 0.0
  %3139 = vmatprep.subr.mxu0 0.0
  %3140 = vmatpush1.msra.mxu0 0.0
  %3141 = vmatprep.subr.mxu0 0.0
  %3142 = vmatpush1.msra.mxu0 0.0
  %3143 = vmatprep.subr.mxu0 0.0
  %3144 = vmatpush1.msra.mxu0 0.0
  %3145 = vmatprep.subr.mxu0 0.0
  %3146 = vmatpush1.msra.mxu0 0.0
  %3147 = vmatprep.subr.mxu0 0.0
  %3148 = vmatpush1.msra.mxu0 0.0
  %3149 = vmatprep.subr.mxu0 0.0
  %3150 = vmatpush1.msra.mxu0 0.0
  %3151 = vmatprep.subr.mxu0 0.0
  %3152 = vmatpush1.msra.mxu0 0.0
  %3153 = vmatprep.subr.mxu0 0.0
  %3154 = vmatpush1.msra.mxu0 0.0
  %3155 = vmatprep.subr.mxu0 0.0
  %3156 = vmatpush1.msra.mxu0 0.0
  %3157 = vmatprep.subr.mxu0 0.0
  %3158 = vmatpush1.msra.mxu0 0.0
  %3159 = vmatprep.subr.mxu0 0.0
  %3160 = vmatpush1.msra.mxu0 0.0
  %3161 = vmatprep.subr.mxu0 0.0
  %3162 = vmatpush1.msra.mxu0 0.0
  %3163 = vmatprep.subr.mxu0 0.0
  %3164 = vmatpush1.msra.mxu0 0.0
  %3165 = vmatprep.subr.mxu0 0.0
  %3166 = vmatpush1.msra.mxu0 0.0
  %3167 = vmatprep.subr.mxu0 0.0
  %3168 = vmatpush1.msra.mxu0 0.0
  %3169 = vmatprep.subr.mxu0 0.0
  %3170 = vmatpush1.msra.mxu0 0.0
  %3171 = vmatprep.subr.mxu0 0.0
  %3172 = vmatpush1.msra.mxu0 0.0
  %3173 = vmatprep.subr.mxu0 0.0
  %3174 = vmatpush1.msra.mxu0 0.0
  %3175 = vmatprep.subr.mxu0 0.0
  %3176 = vmatpush1.msra.mxu0 0.0
  %3177 = vmatprep.subr.mxu0 0.0
  %3178 = vmatpush1.msra.mxu0 0.0
  %3179 = vmatprep.subr.mxu0 0.0
  %3180 = vmatpush1.msra.mxu0 0.0
  %3181 = vmatprep.subr.mxu0 0.0
  %3182 = vmatpush1.msra.mxu0 0.0
  %3183 = vmatprep.subr.mxu0 0.0
  %3184 = vmatpush1.msra.mxu0 0.0
  %3185 = vmatprep.mubr.f32.mxu0 0.0
  %3186 = vmatmul.mubr.f32.gmra.mrb[0].mxu0 %v3119
  %v3187 = vpop.f32.mrb[0].mxu0
  %v3188 = vadd.f32 %v62, %v3187
  %v3189 = vpop.f32.mrb[0].mxu0
  %3190 = vdwg.mxu0
  %v3191 = vtanh.pop %v3188
  %v3192 = vsel %vm1301, %v3191, 0.0
  %3193 = vadd.xlane.f32.xlu0 %v3192
  %v3194 = vpop.xlane.xlu0 %3193
  %v3195 = vmul.f32 %v3194, %v73
  %v3196 = vsub.f32 %v3191, %v3195
  %v3197 = vmul.f32 %v3196, %v3196
  %v3198 = vsel %vm1301, %v3197, 0.0
  %3199 = vadd.xlane.f32.xlu0 %v3198
  %v3200 = vpop.xlane.xlu0 %3199
  %v3201 = vmul.f32 %v3200, %v73
  %v3202 = vadd.f32 %v3201, 1e-05
  %v3203 = vrsqrt.pop %v3202
  %v3204 = vmul.f32 %v3196, %v3203
  %v3205 = vmul.f32 %v3204, %v63
  %v3206 = vadd.f32 %v3205, %v64
  %v3208 = vsel %vm91, %v3115, 0
  %3210 = vmatprep.subr.mxu0 0.0
  %3211 = vmatpush1.msra.mxu0 %v45
  %3212 = vmatprep.subr.mxu0 0.0
  %3213 = vmatpush1.msra.mxu0 %v46
  %3214 = vmatprep.subr.mxu0 0.0
  %3215 = vmatpush1.msra.mxu0 %v47
  %3216 = vmatprep.subr.mxu0 0.0
  %3217 = vmatpush1.msra.mxu0 %v48
  %3218 = vmatprep.subr.mxu0 0.0
  %3219 = vmatpush1.msra.mxu0 0.0
  %3220 = vmatprep.subr.mxu0 0.0
  %3221 = vmatpush1.msra.mxu0 0.0
  %3222 = vmatprep.subr.mxu0 0.0
  %3223 = vmatpush1.msra.mxu0 0.0
  %3224 = vmatprep.subr.mxu0 0.0
  %3225 = vmatpush1.msra.mxu0 0.0
  %3226 = vmatprep.subr.mxu0 0.0
  %3227 = vmatpush1.msra.mxu0 0.0
  %3228 = vmatprep.subr.mxu0 0.0
  %3229 = vmatpush1.msra.mxu0 0.0
  %3230 = vmatprep.subr.mxu0 0.0
  %3231 = vmatpush1.msra.mxu0 0.0
  %3232 = vmatprep.subr.mxu0 0.0
  %3233 = vmatpush1.msra.mxu0 0.0
  %3234 = vmatprep.subr.mxu0 0.0
  %3235 = vmatpush1.msra.mxu0 0.0
  %3236 = vmatprep.subr.mxu0 0.0
  %3237 = vmatpush1.msra.mxu0 0.0
  %3238 = vmatprep.subr.mxu0 0.0
  %3239 = vmatpush1.msra.mxu0 0.0
  %3240 = vmatprep.subr.mxu0 0.0
  %3241 = vmatpush1.msra.mxu0 0.0
  %3242 = vmatprep.subr.mxu0 0.0
  %3243 = vmatpush1.msra.mxu0 0.0
  %3244 = vmatprep.subr.mxu0 0.0
  %3245 = vmatpush1.msra.mxu0 0.0
  %3246 = vmatprep.subr.mxu0 0.0
  %3247 = vmatpush1.msra.mxu0 0.0
  %3248 = vmatprep.subr.mxu0 0.0
  %3249 = vmatpush1.msra.mxu0 0.0
  %3250 = vmatprep.subr.mxu0 0.0
  %3251 = vmatpush1.msra.mxu0 0.0
  %3252 = vmatprep.subr.mxu0 0.0
  %3253 = vmatpush1.msra.mxu0 0.0
  %3254 = vmatprep.subr.mxu0 0.0
  %3255 = vmatpush1.msra.mxu0 0.0
  %3256 = vmatprep.subr.mxu0 0.0
  %3257 = vmatpush1.msra.mxu0 0.0
  %3258 = vmatprep.subr.mxu0 0.0
  %3259 = vmatpush1.msra.mxu0 0.0
  %3260 = vmatprep.subr.mxu0 0.0
  %3261 = vmatpush1.msra.mxu0 0.0
  %3262 = vmatprep.subr.mxu0 0.0
  %3263 = vmatpush1.msra.mxu0 0.0
  %3264 = vmatprep.subr.mxu0 0.0
  %3265 = vmatpush1.msra.mxu0 0.0
  %3266 = vmatprep.subr.mxu0 0.0
  %3267 = vmatpush1.msra.mxu0 0.0
  %3268 = vmatprep.subr.mxu0 0.0
  %3269 = vmatpush1.msra.mxu0 0.0
  %3270 = vmatprep.subr.mxu0 0.0
  %3271 = vmatpush1.msra.mxu0 0.0
  %3272 = vmatprep.subr.mxu0 0.0
  %3273 = vmatpush1.msra.mxu0 0.0
  %3274 = vmatprep.mubr.f32.mxu0 0.0
  %3275 = vmatmul.mubr.f32.gmra.mrb[0].mxu0 %v3208
  %v3276 = vpop.f32.mrb[0].mxu0
  %v3277 = vadd.f32 %v65, %v3276
  %v3278 = vpop.f32.mrb[0].mxu0
  %3279 = vdwg.mxu0
  %3280 = vst.msk [vmem:[%s4 + $0x1] sm:$0x1] %vm1301, %v3206
  %3282 = vrot.lane.b32.xlu0 %v3277, 32
  %v3283 = vpop.permute.xlu0 %3282
  %3285 = vst.msk [vmem:[%s4 + $0x1] sm:$0x1] %vm1687, %v3283
  // Predicated region
  $region18: #{forward.1} parent=0 // pred_check
    _
  $region19: #{forward.1} parent=0 // pred_check_branch
    %3287 = sbr.rel (0) target = $region21
  $region20: #{forward.1} parent=0 // pred_region
    _
  $region21: #{forward.1} parent=0 // pred_fallthru
    _
  // Predicated region
  $region22: #{forward.1} parent=0 // pred_check
    _
  $region23: #{forward.1} parent=0 // pred_check_branch
    %3289 = sbr.rel (0) target = $region25
  $region24: #{forward.1} parent=0 // pred_region
    _
  $region25: #{forward.1} parent=0 // pred_fallthru
    _

</llo_original>
